<compile_context>
chip_gen: v6e
topology: v6e:2x2x1
jax: 0.10.0
libtpu: 0.0.40
codegen_flags: <defaults>
</compile_context>

<pallas_src>
import jax
import jax.numpy as jnp
from jax import lax
from jax.experimental import pallas as pl
from jax.experimental.pallas import tpu as pltpu

EPS = 1e-5


def _round_up(a, b):
    return (a + b - 1) // b * b


def fold_bn(params):
    """Fold conv biases + eval-mode BatchNorm into per-channel scale/shift."""
    s2 = params['bn2_gamma'] / jnp.sqrt(params['bn2_var'] + EPS)
    t2 = (params['conv2_b'] - params['bn2_mean']) * s2 + params['bn2_beta']
    s1 = params['bn1_gamma'] / jnp.sqrt(params['bn1_var'] + EPS)
    t1 = (params['conv1_b'] - params['bn1_mean']) * s1 + params['bn1_beta']
    return s2, t2, s1, t1


def interp_matrix(out_size, in_size):
    """1-D linear interpolation matrix, align_corners=True."""
    if in_size == 1 or out_size == 1:
        return jnp.zeros((out_size, in_size), jnp.float32).at[:, 0].set(1.0)
    src = jnp.arange(out_size, dtype=jnp.float32) * (in_size - 1) / (out_size - 1)
    lo = jnp.floor(src).astype(jnp.int32)
    hi = jnp.minimum(lo + 1, in_size - 1)
    frac = src - lo.astype(jnp.float32)
    rows = jnp.arange(out_size)
    A = jnp.zeros((out_size, in_size), jnp.float32)
    A = A.at[rows, lo].add(1.0 - frac)
    A = A.at[rows, hi].add(frac)
    return A


def upsample_trilinear_cl(y_cl, D, H, W):
    """Separable trilinear upsample (align_corners=True), channel-last."""
    _, d2, h2, w2s, _ = y_cl.shape
    Ad, Ah, Aw = interp_matrix(D, d2), interp_matrix(H, h2), interp_matrix(W, w2s)
    return jnp.einsum('Dd,Hh,Ww,ndhwc->nDHWc', Ad, Ah, Aw, y_cl)


def _pick_depth_block(D):
    for c in (8, 4, 2, 1):
        if D % c == 0:
            return min(c, D)
    return 1


def gau_block(x, y, params, depth_block=None):
    """x: (N, Cin, D, H, W) low-level;  y: (N, Cout, d2, h2, w2) high-level."""
    N, Cin, D, H, W = x.shape
    _, Cout, d2, h2, w2s = y.shape

    DB = _pick_depth_block(D) if depth_block is None else depth_block
    assert D % DB == 0
    nD = D // DB

    Hp = H + 2                                # H plus conv halo (row dim keeps it)
    L = W * Cout                              # real lanes: flattened (w, cout)
    Lp = _round_up(L, 128)                    # lane-dense (128 on v5e; see header re 256)
    K = (W + 2) * Cin                         # contraction: flattened (w_in, cin)
    M_OUT = DB * Hp                           # output rows per tile (incl. 2 halo rows / slice)
    M_IN = _round_up((DB + 2) * Hp + 2, 8)    # input rows per tile (depth halo + shift slack)

    s2, t2, s1, t1 = fold_bn(params)

    # ---- banded conv2 weight (BN scale folded): (9 taps, K, Lp) ------------
    # band[kd*3+kh, w_in*Cin+ci, w_out*Cout+co] = w[co,ci,kd,kh,w_in-w_out]
    wt = jnp.transpose(params['conv2_w'] * s2[:, None, None, None, None],
                       (2, 3, 4, 1, 0))                               # (3,3,3,Cin,Cout)
    band = jnp.zeros((3, 3, K, Lp), jnp.float32)
    for kw in range(3):
        for wo in range(W):
            wi = wo + kw
            band = band.at[:, :, wi * Cin:(wi + 1) * Cin,
                           wo * Cout:(wo + 1) * Cout].set(wt[:, :, kw])
    w_band = band.reshape(9, K, Lp).astype(jnp.bfloat16)

    # ---- folded bias, and hoisted gate branch, in the (w, cout) lane layout -
    t2_lane = jnp.pad(jnp.tile(t2, W), (0, Lp - L))[None, :]          # (1, Lp) f32
    pooled = y.mean(axis=(2, 3, 4))                                   # (N, Cout)
    w1_eff = params['conv1_w'][:, :, 0, 0, 0].T * s1[None, :]         # (Cout, Cout)
    gate = jax.nn.sigmoid(pooled @ w1_eff + t1[None, :])              # (N, Cout)
    gate_lane = jnp.pad(jnp.tile(gate, (1, W)),
                        ((0, 0), (0, Lp - L)))[:, None, :]            # (N, 1, Lp) f32

    # ---- separable trilinear upsample, laid out as the kernel's output tiles
    y_cl = jnp.transpose(y, (0, 2, 3, 4, 1))                          # (N,d2,h2,w2,Cout)
    y_up = upsample_trilinear_cl(y_cl, D, H, W)                       # (N,D,H,W,Cout) f32
    y_up = jnp.pad(y_up, ((0, 0), (0, 0), (0, 2), (0, 0), (0, 0)))    # 2 halo rows per slice
    y_up = y_up.reshape(N, D, Hp, L)
    y_up = jnp.pad(y_up, ((0, 0), (0, 0), (0, 0), (0, Lp - L)))
    y_up = y_up.reshape(N, nD, M_OUT, Lp).astype(jnp.bfloat16)

    # ---- halo-padded channel-last x (bf16), rows = flattened padded (d,h) ---
    x_cl = jnp.transpose(x, (0, 2, 3, 4, 1))                          # (N,D,H,W,Cin)
    x_p = jnp.pad(x_cl, ((0, 0), (1, 1), (1, 1), (1, 1), (0, 0)))     # (N,D+2,H+2,W+2,Cin)
    x_p = x_p.reshape(N, (D + 2) * Hp, K)
    need_rows = (nD - 1) * DB * Hp + M_IN
    x_p = jnp.pad(x_p, ((0, 0), (0, max(0, need_rows - (D + 2) * Hp)), (0, 0)))
    x_p = x_p.astype(jnp.bfloat16)
    # pre-sliced overlapping depth windows: (DB+2)/DB halo duplication only
    x_blocks = jnp.stack([x_p[:, b * DB * Hp: b * DB * Hp + M_IN, :]
                          for b in range(nD)], axis=1)                # (N,nD,M_IN,K)

    def kernel(x_ref, w_ref, t2_ref, gate_ref, yup_ref, out_ref, acc_ref):
        # init accumulator with the folded conv-bias / BN shift
        acc_ref[...] = jnp.broadcast_to(t2_ref[...], (M_OUT, Lp))
        # 3x3x3 conv = 9 row-shifted fat matmuls: kw & Cin folded into the
        # K=(W+2)*Cin contraction by the banded weight; (kd, kh) are static
        # row shifts into the halo-padded slab.
        # (The non-8-aligned static slices could be replaced by pltpu.roll on a
        #  resident slab to use the XLU; kept as slices for simplicity.)
        for kd in range(3):
            for kh in range(3):
                shift = kd * Hp + kh
                lhs = x_ref[shift:shift + M_OUT, :]                   # (M_OUT, K) bf16
                acc_ref[...] += jnp.dot(lhs, w_ref[kd * 3 + kh],
                                        preferred_element_type=jnp.float32)
        xbr = jnp.maximum(acc_ref[...], 0.0)                          # ConvBnRelu branch
        z = xbr * gate_ref[...]                                       # global-attention gate
        out_ref[...] = (yup_ref[...].astype(jnp.float32) + z).astype(out_ref.dtype)

    flops = int(2 * N * nD * 9 * M_OUT * K * Lp)
    bytes_accessed = int(x_blocks.size * 2 + w_band.size * 2 + t2_lane.size * 4
                         + gate_lane.size * 4 + y_up.size * 2
                         + N * nD * M_OUT * Lp * 4)

    out = pl.pallas_call(
        kernel,
        out_shape=jax.ShapeDtypeStruct((N, nD, M_OUT, Lp), x.dtype),
        grid=(N, nD),
        in_specs=[
            pl.BlockSpec((None, None, M_IN, K), lambda n, d: (n, d, 0, 0)),   # x slab (bf16)
            pl.BlockSpec((9, K, Lp), lambda n, d: (0, 0, 0)),                 # banded conv weight
            pl.BlockSpec((1, Lp), lambda n, d: (0, 0)),                       # folded bias
            pl.BlockSpec((None, 1, Lp), lambda n, d: (n, 0, 0)),              # sigmoid gate (per batch)
            pl.BlockSpec((None, None, M_OUT, Lp), lambda n, d: (n, d, 0, 0)), # upsampled y tile
        ],
        out_specs=pl.BlockSpec((None, None, M_OUT, Lp), lambda n, d: (n, d, 0, 0)),
        scratch_shapes=[pltpu.VMEM((M_OUT, Lp), jnp.float32)],
        compiler_params=pltpu.CompilerParams(
            dimension_semantics=("parallel", "parallel")),
        cost_estimate=pl.CostEstimate(flops=flops, transcendentals=0,
                                      bytes_accessed=bytes_accessed),
    )(x_blocks, w_band, t2_lane, gate_lane, y_up)

    # drop the 2 halo rows per depth slice and the trailing lane padding
    out = out.reshape(N, D, Hp, Lp)[:, :, :H, :L].reshape(N, D, H, W, Cout)
    return jnp.transpose(out, (0, 4, 1, 2, 3))


def ref_gau(x, y, params):
    """Pure-JAX reference with the kernel's numerics: bf16-rounded conv/upsample
    operands, f32 accumulation and epilogue, eval-mode BatchNorm."""
    bf = lambda a: a.astype(jnp.bfloat16).astype(jnp.float32)
    N, Cin, D, H, W = x.shape
    s2, t2, s1, t1 = fold_bn(params)
    w2_eff = params['conv2_w'] * s2[:, None, None, None, None]
    conv = lax.conv_general_dilated(
        bf(x), bf(w2_eff), (1, 1, 1), ((1, 1), (1, 1), (1, 1)),
        dimension_numbers=('NCDHW', 'OIDHW', 'NCDHW'))
    xbr = jnp.maximum(conv + t2[None, :, None, None, None], 0.0)
    pooled = y.mean(axis=(2, 3, 4))
    w1_eff = params['conv1_w'][:, :, 0, 0, 0].T * s1[None, :]
    gate = jax.nn.sigmoid(pooled @ w1_eff + t1[None, :])
    y_cl = jnp.transpose(y, (0, 2, 3, 4, 1))
    y_up = bf(upsample_trilinear_cl(y_cl, D, H, W))              # (N,D,H,W,Cout)
    y_up = jnp.transpose(y_up, (0, 4, 1, 2, 3))
    return y_up + xbr * gate[:, :, None, None, None]


def init_params(key, in_channels, out_channels):
    ks = jax.random.split(key, 12)
    f32 = jnp.float32
    return {
        'conv1_w': 0.2 * jax.random.normal(ks[0], (out_channels, out_channels, 1, 1, 1), f32),
        'conv1_b': 0.1 * jax.random.normal(ks[1], (out_channels,), f32),
        'conv2_w': 0.2 * jax.random.normal(ks[2], (out_channels, in_channels, 3, 3, 3), f32),
        'conv2_b': 0.1 * jax.random.normal(ks[3], (out_channels,), f32),
        'bn1_gamma': 1.0 + 0.1 * jax.random.normal(ks[4], (out_channels,), f32),
        'bn1_beta': 0.1 * jax.random.normal(ks[5], (out_channels,), f32),
        'bn1_mean': 0.05 * jax.random.normal(ks[6], (out_channels,), f32),
        'bn1_var': jnp.abs(1.0 + 0.1 * jax.random.normal(ks[7], (out_channels,), f32)),
        'bn2_gamma': 1.0 + 0.1 * jax.random.normal(ks[8], (out_channels,), f32),
        'bn2_beta': 0.1 * jax.random.normal(ks[9], (out_channels,), f32),
        'bn2_mean': 0.05 * jax.random.normal(ks[10], (out_channels,), f32),
        'bn2_var': jnp.abs(1.0 + 0.1 * jax.random.normal(ks[11], (out_channels,), f32)),
    }


if __name__ == "__main__":
    key = jax.random.PRNGKey(0)
    kx, ky, kp = jax.random.split(key, 3)

    in_channels, out_channels = 4, 8
    N, D, H, W = 2, 16, 16, 16        # low-level feature (x) spatial size
    d2, h2, w2s = 8, 8, 8             # high-level feature (y) spatial size

    x = jax.random.normal(kx, (N, in_channels, D, H, W), jnp.float32)
    y = jax.random.normal(ky, (N, out_channels, d2, h2, w2s), jnp.float32)
    params = init_params(kp, in_channels, out_channels)

    out = jax.block_until_ready(gau_block(x, y, params))
    ref = ref_gau(x, y, params)

    assert out.shape == (N, out_channels, D, H, W), out.shape
    err = float(jnp.max(jnp.abs(out - ref)))
    assert jnp.allclose(out, ref, atol=5e-3, rtol=5e-3), err
    print("KERNEL_OK")
</pallas_src>

<mosaic_0001>
module attributes {stable_mosaic.version = 11 : i64} {
  func.func @kernel(%arg0: i32, %arg1: i32, %arg2: memref<1x1x184x72xbf16, #tpu.memory_space<vmem>>, %arg3: memref<9x72x128xbf16, #tpu.memory_space<vmem>>, %arg4: memref<1x128xf32, #tpu.memory_space<vmem>>, %arg5: memref<1x1x128xf32, #tpu.memory_space<vmem>>, %arg6: memref<1x1x144x128xbf16, #tpu.memory_space<vmem>>, %arg7: memref<1x1x144x128xf32, #tpu.memory_space<vmem>>, %arg8: memref<144x128xf32, #tpu.memory_space<vmem>>) attributes {dimension_semantics = [#tpu.dimension_semantics<parallel>, #tpu.dimension_semantics<parallel>], iteration_bounds = array<i64: 2, 2>, scalar_prefetch = 0 : i64, scratch_operands = 1 : i64, tpu.core_type = #tpu.core_type<tc>, window_params = [{transform_indices = @transform_0, window_bounds = array<i64: 1, 1, 184, 72>}, {pipeline_mode = #tpu.pipeline_mode<synchronous>, transform_indices = @transform_1, window_bounds = array<i64: 9, 72, 128>}, {pipeline_mode = #tpu.pipeline_mode<synchronous>, transform_indices = @transform_2, window_bounds = array<i64: 1, 128>}, {transform_indices = @transform_3, window_bounds = array<i64: 1, 1, 128>}, {transform_indices = @transform_4, window_bounds = array<i64: 1, 1, 144, 128>}, {transform_indices = @transform_5, window_bounds = array<i64: 1, 1, 144, 128>}]} {
    %c0 = arith.constant 0 : index
    %c0_0 = arith.constant 0 : index
    %0 = vector.load %arg4[%c0, %c0_0] : memref<1x128xf32, #tpu.memory_space<vmem>>, vector<1x128xf32>
    %1 = vector.shape_cast %0 : vector<1x128xf32> to vector<1x128xf32>
    %2 = vector.broadcast %1 : vector<1x128xf32> to vector<144x128xf32>
    %c0_1 = arith.constant 0 : index
    %c0_2 = arith.constant 0 : index
    %3 = vector.load %arg8[%c0_1, %c0_2] : memref<144x128xf32, #tpu.memory_space<vmem>>, vector<144x128xf32>
    tpu.vector_store %arg8[%c0_1, %c0_2], %2 {strides = array<i32>} : memref<144x128xf32, #tpu.memory_space<vmem>>, vector<144x128xf32>,
    %c0_3 = arith.constant 0 : index
    %c0_4 = arith.constant 0 : index
    %c0_5 = arith.constant 0 : index
    %c0_6 = arith.constant 0 : index
    %4 = vector.load %arg2[%c0_3, %c0_4, %c0_5, %c0_6] : memref<1x1x184x72xbf16, #tpu.memory_space<vmem>>, vector<1x1x144x72xbf16>
    %5 = vector.shape_cast %4 : vector<1x1x144x72xbf16> to vector<144x72xbf16>
    %c0_7 = arith.constant 0 : index
    %c0_8 = arith.constant 0 : index
    %6 = vector.load %arg8[%c0_7, %c0_8] : memref<144x128xf32, #tpu.memory_space<vmem>>, vector<144x128xf32>
    %c0_9 = arith.constant 0 : index
    %c0_10 = arith.constant 0 : index
    %c0_11 = arith.constant 0 : index
    %7 = vector.load %arg3[%c0_9, %c0_10, %c0_11] : memref<9x72x128xbf16, #tpu.memory_space<vmem>>, vector<1x72x128xbf16>
    %8 = vector.shape_cast %7 : vector<1x72x128xbf16> to vector<72x128xbf16>
    %cst = arith.constant dense<0.000000e+00> : vector<144x128xf32>
    %9 = tpu.matmul %5, %8, %cst {dimension_numbers = #tpu.dot_dimension_numbers<[1], [0], [0], [1], [0, 0, 1, 1], [], []>} : vector<144x72xbf16>, vector<72x128xbf16>, vector<144x128xf32> -> vector<144x128xf32>
    %10 = arith.addf %6, %9 : vector<144x128xf32>
    %c0_12 = arith.constant 0 : index
    %c0_13 = arith.constant 0 : index
    %11 = vector.load %arg8[%c0_12, %c0_13] : memref<144x128xf32, #tpu.memory_space<vmem>>, vector<144x128xf32>
    tpu.vector_store %arg8[%c0_12, %c0_13], %10 {strides = array<i32>} : memref<144x128xf32, #tpu.memory_space<vmem>>, vector<144x128xf32>,
    %c0_14 = arith.constant 0 : index
    %c0_15 = arith.constant 0 : index
    %c1 = arith.constant 1 : index
    %c0_16 = arith.constant 0 : index
    %12 = vector.load %arg2[%c0_14, %c0_15, %c1, %c0_16] : memref<1x1x184x72xbf16, #tpu.memory_space<vmem>>, vector<1x1x144x72xbf16>
    %13 = vector.shape_cast %12 : vector<1x1x144x72xbf16> to vector<144x72xbf16>
    %c0_17 = arith.constant 0 : index
    %c0_18 = arith.constant 0 : index
    %14 = vector.load %arg8[%c0_17, %c0_18] : memref<144x128xf32, #tpu.memory_space<vmem>>, vector<144x128xf32>
    %c1_19 = arith.constant 1 : index
    %c0_20 = arith.constant 0 : index
    %c0_21 = arith.constant 0 : index
    %15 = vector.load %arg3[%c1_19, %c0_20, %c0_21] : memref<9x72x128xbf16, #tpu.memory_space<vmem>>, vector<1x72x128xbf16>
    %16 = vector.shape_cast %15 : vector<1x72x128xbf16> to vector<72x128xbf16>
    %cst_22 = arith.constant dense<0.000000e+00> : vector<144x128xf32>
    %17 = tpu.matmul %13, %16, %cst_22 {dimension_numbers = #tpu.dot_dimension_numbers<[1], [0], [0], [1], [0, 0, 1, 1], [], []>} : vector<144x72xbf16>, vector<72x128xbf16>, vector<144x128xf32> -> vector<144x128xf32>
    %18 = arith.addf %14, %17 : vector<144x128xf32>
    %c0_23 = arith.constant 0 : index
    %c0_24 = arith.constant 0 : index
    %19 = vector.load %arg8[%c0_23, %c0_24] : memref<144x128xf32, #tpu.memory_space<vmem>>, vector<144x128xf32>
    tpu.vector_store %arg8[%c0_23, %c0_24], %18 {strides = array<i32>} : memref<144x128xf32, #tpu.memory_space<vmem>>, vector<144x128xf32>,
    %c0_25 = arith.constant 0 : index
    %c0_26 = arith.constant 0 : index
    %c2 = arith.constant 2 : index
    %c0_27 = arith.constant 0 : index
    %20 = vector.load %arg2[%c0_25, %c0_26, %c2, %c0_27] : memref<1x1x184x72xbf16, #tpu.memory_space<vmem>>, vector<1x1x144x72xbf16>
    %21 = vector.shape_cast %20 : vector<1x1x144x72xbf16> to vector<144x72xbf16>
    %c0_28 = arith.constant 0 : index
    %c0_29 = arith.constant 0 : index
    %22 = vector.load %arg8[%c0_28, %c0_29] : memref<144x128xf32, #tpu.memory_space<vmem>>, vector<144x128xf32>
    %c2_30 = arith.constant 2 : index
    %c0_31 = arith.constant 0 : index
    %c0_32 = arith.constant 0 : index
    %23 = vector.load %arg3[%c2_30, %c0_31, %c0_32] : memref<9x72x128xbf16, #tpu.memory_space<vmem>>, vector<1x72x128xbf16>
    %24 = vector.shape_cast %23 : vector<1x72x128xbf16> to vector<72x128xbf16>
    %cst_33 = arith.constant dense<0.000000e+00> : vector<144x128xf32>
    %25 = tpu.matmul %21, %24, %cst_33 {dimension_numbers = #tpu.dot_dimension_numbers<[1], [0], [0], [1], [0, 0, 1, 1], [], []>} : vector<144x72xbf16>, vector<72x128xbf16>, vector<144x128xf32> -> vector<144x128xf32>
    %26 = arith.addf %22, %25 : vector<144x128xf32>
    %c0_34 = arith.constant 0 : index
    %c0_35 = arith.constant 0 : index
    %27 = vector.load %arg8[%c0_34, %c0_35] : memref<144x128xf32, #tpu.memory_space<vmem>>, vector<144x128xf32>
    tpu.vector_store %arg8[%c0_34, %c0_35], %26 {strides = array<i32>} : memref<144x128xf32, #tpu.memory_space<vmem>>, vector<144x128xf32>,
    %c0_36 = arith.constant 0 : index
    %c0_37 = arith.constant 0 : index
    %c18 = arith.constant 18 : index
    %c0_38 = arith.constant 0 : index
    %28 = vector.load %arg2[%c0_36, %c0_37, %c18, %c0_38] : memref<1x1x184x72xbf16, #tpu.memory_space<vmem>>, vector<1x1x144x72xbf16>
    %29 = vector.shape_cast %28 : vector<1x1x144x72xbf16> to vector<144x72xbf16>
    %c0_39 = arith.constant 0 : index
    %c0_40 = arith.constant 0 : index
    %30 = vector.load %arg8[%c0_39, %c0_40] : memref<144x128xf32, #tpu.memory_space<vmem>>, vector<144x128xf32>
    %c3 = arith.constant 3 : index
    %c0_41 = arith.constant 0 : index
    %c0_42 = arith.constant 0 : index
    %31 = vector.load %arg3[%c3, %c0_41, %c0_42] : memref<9x72x128xbf16, #tpu.memory_space<vmem>>, vector<1x72x128xbf16>
    %32 = vector.shape_cast %31 : vector<1x72x128xbf16> to vector<72x128xbf16>
    %cst_43 = arith.constant dense<0.000000e+00> : vector<144x128xf32>
    %33 = tpu.matmul %29, %32, %cst_43 {dimension_numbers = #tpu.dot_dimension_numbers<[1], [0], [0], [1], [0, 0, 1, 1], [], []>} : vector<144x72xbf16>, vector<72x128xbf16>, vector<144x128xf32> -> vector<144x128xf32>
    %34 = arith.addf %30, %33 : vector<144x128xf32>
    %c0_44 = arith.constant 0 : index
    %c0_45 = arith.constant 0 : index
    %35 = vector.load %arg8[%c0_44, %c0_45] : memref<144x128xf32, #tpu.memory_space<vmem>>, vector<144x128xf32>
    tpu.vector_store %arg8[%c0_44, %c0_45], %34 {strides = array<i32>} : memref<144x128xf32, #tpu.memory_space<vmem>>, vector<144x128xf32>,
    %c0_46 = arith.constant 0 : index
    %c0_47 = arith.constant 0 : index
    %c19 = arith.constant 19 : index
    %c0_48 = arith.constant 0 : index
    %36 = vector.load %arg2[%c0_46, %c0_47, %c19, %c0_48] : memref<1x1x184x72xbf16, #tpu.memory_space<vmem>>, vector<1x1x144x72xbf16>
    %37 = vector.shape_cast %36 : vector<1x1x144x72xbf16> to vector<144x72xbf16>
    %c0_49 = arith.constant 0 : index
    %c0_50 = arith.constant 0 : index
    %38 = vector.load %arg8[%c0_49, %c0_50] : memref<144x128xf32, #tpu.memory_space<vmem>>, vector<144x128xf32>
    %c4 = arith.constant 4 : index
    %c0_51 = arith.constant 0 : index
    %c0_52 = arith.constant 0 : index
    %39 = vector.load %arg3[%c4, %c0_51, %c0_52] : memref<9x72x128xbf16, #tpu.memory_space<vmem>>, vector<1x72x128xbf16>
    %40 = vector.shape_cast %39 : vector<1x72x128xbf16> to vector<72x128xbf16>
    %cst_53 = arith.constant dense<0.000000e+00> : vector<144x128xf32>
    %41 = tpu.matmul %37, %40, %cst_53 {dimension_numbers = #tpu.dot_dimension_numbers<[1], [0], [0], [1], [0, 0, 1, 1], [], []>} : vector<144x72xbf16>, vector<72x128xbf16>, vector<144x128xf32> -> vector<144x128xf32>
    %42 = arith.addf %38, %41 : vector<144x128xf32>
    %c0_54 = arith.constant 0 : index
    %c0_55 = arith.constant 0 : index
    %43 = vector.load %arg8[%c0_54, %c0_55] : memref<144x128xf32, #tpu.memory_space<vmem>>, vector<144x128xf32>
    tpu.vector_store %arg8[%c0_54, %c0_55], %42 {strides = array<i32>} : memref<144x128xf32, #tpu.memory_space<vmem>>, vector<144x128xf32>,
    %c0_56 = arith.constant 0 : index
    %c0_57 = arith.constant 0 : index
    %c20 = arith.constant 20 : index
    %c0_58 = arith.constant 0 : index
    %44 = vector.load %arg2[%c0_56, %c0_57, %c20, %c0_58] : memref<1x1x184x72xbf16, #tpu.memory_space<vmem>>, vector<1x1x144x72xbf16>
    %45 = vector.shape_cast %44 : vector<1x1x144x72xbf16> to vector<144x72xbf16>
    %c0_59 = arith.constant 0 : index
    %c0_60 = arith.constant 0 : index
    %46 = vector.load %arg8[%c0_59, %c0_60] : memref<144x128xf32, #tpu.memory_space<vmem>>, vector<144x128xf32>
    %c5 = arith.constant 5 : index
    %c0_61 = arith.constant 0 : index
    %c0_62 = arith.constant 0 : index
    %47 = vector.load %arg3[%c5, %c0_61, %c0_62] : memref<9x72x128xbf16, #tpu.memory_space<vmem>>, vector<1x72x128xbf16>
    %48 = vector.shape_cast %47 : vector<1x72x128xbf16> to vector<72x128xbf16>
    %cst_63 = arith.constant dense<0.000000e+00> : vector<144x128xf32>
    %49 = tpu.matmul %45, %48, %cst_63 {dimension_numbers = #tpu.dot_dimension_numbers<[1], [0], [0], [1], [0, 0, 1, 1], [], []>} : vector<144x72xbf16>, vector<72x128xbf16>, vector<144x128xf32> -> vector<144x128xf32>
    %50 = arith.addf %46, %49 : vector<144x128xf32>
    %c0_64 = arith.constant 0 : index
    %c0_65 = arith.constant 0 : index
    %51 = vector.load %arg8[%c0_64, %c0_65] : memref<144x128xf32, #tpu.memory_space<vmem>>, vector<144x128xf32>
    tpu.vector_store %arg8[%c0_64, %c0_65], %50 {strides = array<i32>} : memref<144x128xf32, #tpu.memory_space<vmem>>, vector<144x128xf32>,
    %c0_66 = arith.constant 0 : index
    %c0_67 = arith.constant 0 : index
    %c36 = arith.constant 36 : index
    %c0_68 = arith.constant 0 : index
    %52 = vector.load %arg2[%c0_66, %c0_67, %c36, %c0_68] : memref<1x1x184x72xbf16, #tpu.memory_space<vmem>>, vector<1x1x144x72xbf16>
    %53 = vector.shape_cast %52 : vector<1x1x144x72xbf16> to vector<144x72xbf16>
    %c0_69 = arith.constant 0 : index
    %c0_70 = arith.constant 0 : index
    %54 = vector.load %arg8[%c0_69, %c0_70] : memref<144x128xf32, #tpu.memory_space<vmem>>, vector<144x128xf32>
    %c6 = arith.constant 6 : index
    %c0_71 = arith.constant 0 : index
    %c0_72 = arith.constant 0 : index
    %55 = vector.load %arg3[%c6, %c0_71, %c0_72] : memref<9x72x128xbf16, #tpu.memory_space<vmem>>, vector<1x72x128xbf16>
    %56 = vector.shape_cast %55 : vector<1x72x128xbf16> to vector<72x128xbf16>
    %cst_73 = arith.constant dense<0.000000e+00> : vector<144x128xf32>
    %57 = tpu.matmul %53, %56, %cst_73 {dimension_numbers = #tpu.dot_dimension_numbers<[1], [0], [0], [1], [0, 0, 1, 1], [], []>} : vector<144x72xbf16>, vector<72x128xbf16>, vector<144x128xf32> -> vector<144x128xf32>
    %58 = arith.addf %54, %57 : vector<144x128xf32>
    %c0_74 = arith.constant 0 : index
    %c0_75 = arith.constant 0 : index
    %59 = vector.load %arg8[%c0_74, %c0_75] : memref<144x128xf32, #tpu.memory_space<vmem>>, vector<144x128xf32>
    tpu.vector_store %arg8[%c0_74, %c0_75], %58 {strides = array<i32>} : memref<144x128xf32, #tpu.memory_space<vmem>>, vector<144x128xf32>,
    %c0_76 = arith.constant 0 : index
    %c0_77 = arith.constant 0 : index
    %c37 = arith.constant 37 : index
    %c0_78 = arith.constant 0 : index
    %60 = vector.load %arg2[%c0_76, %c0_77, %c37, %c0_78] : memref<1x1x184x72xbf16, #tpu.memory_space<vmem>>, vector<1x1x144x72xbf16>
    %61 = vector.shape_cast %60 : vector<1x1x144x72xbf16> to vector<144x72xbf16>
    %c0_79 = arith.constant 0 : index
    %c0_80 = arith.constant 0 : index
    %62 = vector.load %arg8[%c0_79, %c0_80] : memref<144x128xf32, #tpu.memory_space<vmem>>, vector<144x128xf32>
    %c7 = arith.constant 7 : index
    %c0_81 = arith.constant 0 : index
    %c0_82 = arith.constant 0 : index
    %63 = vector.load %arg3[%c7, %c0_81, %c0_82] : memref<9x72x128xbf16, #tpu.memory_space<vmem>>, vector<1x72x128xbf16>
    %64 = vector.shape_cast %63 : vector<1x72x128xbf16> to vector<72x128xbf16>
    %cst_83 = arith.constant dense<0.000000e+00> : vector<144x128xf32>
    %65 = tpu.matmul %61, %64, %cst_83 {dimension_numbers = #tpu.dot_dimension_numbers<[1], [0], [0], [1], [0, 0, 1, 1], [], []>} : vector<144x72xbf16>, vector<72x128xbf16>, vector<144x128xf32> -> vector<144x128xf32>
    %66 = arith.addf %62, %65 : vector<144x128xf32>
    %c0_84 = arith.constant 0 : index
    %c0_85 = arith.constant 0 : index
    %67 = vector.load %arg8[%c0_84, %c0_85] : memref<144x128xf32, #tpu.memory_space<vmem>>, vector<144x128xf32>
    tpu.vector_store %arg8[%c0_84, %c0_85], %66 {strides = array<i32>} : memref<144x128xf32, #tpu.memory_space<vmem>>, vector<144x128xf32>,
    %c0_86 = arith.constant 0 : index
    %c0_87 = arith.constant 0 : index
    %c38 = arith.constant 38 : index
    %c0_88 = arith.constant 0 : index
    %68 = vector.load %arg2[%c0_86, %c0_87, %c38, %c0_88] : memref<1x1x184x72xbf16, #tpu.memory_space<vmem>>, vector<1x1x144x72xbf16>
    %69 = vector.shape_cast %68 : vector<1x1x144x72xbf16> to vector<144x72xbf16>
    %c0_89 = arith.constant 0 : index
    %c0_90 = arith.constant 0 : index
    %70 = vector.load %arg8[%c0_89, %c0_90] : memref<144x128xf32, #tpu.memory_space<vmem>>, vector<144x128xf32>
    %c8 = arith.constant 8 : index
    %c0_91 = arith.constant 0 : index
    %c0_92 = arith.constant 0 : index
    %71 = vector.load %arg3[%c8, %c0_91, %c0_92] : memref<9x72x128xbf16, #tpu.memory_space<vmem>>, vector<1x72x128xbf16>
    %72 = vector.shape_cast %71 : vector<1x72x128xbf16> to vector<72x128xbf16>
    %cst_93 = arith.constant dense<0.000000e+00> : vector<144x128xf32>
    %73 = tpu.matmul %69, %72, %cst_93 {dimension_numbers = #tpu.dot_dimension_numbers<[1], [0], [0], [1], [0, 0, 1, 1], [], []>} : vector<144x72xbf16>, vector<72x128xbf16>, vector<144x128xf32> -> vector<144x128xf32>
    %74 = arith.addf %70, %73 : vector<144x128xf32>
    %c0_94 = arith.constant 0 : index
    %c0_95 = arith.constant 0 : index
    %75 = vector.load %arg8[%c0_94, %c0_95] : memref<144x128xf32, #tpu.memory_space<vmem>>, vector<144x128xf32>
    tpu.vector_store %arg8[%c0_94, %c0_95], %74 {strides = array<i32>} : memref<144x128xf32, #tpu.memory_space<vmem>>, vector<144x128xf32>,
    %c0_96 = arith.constant 0 : index
    %c0_97 = arith.constant 0 : index
    %76 = vector.load %arg8[%c0_96, %c0_97] : memref<144x128xf32, #tpu.memory_space<vmem>>, vector<144x128xf32>
    %cst_98 = arith.constant 0.000000e+00 : f32
    %77 = vector.broadcast %cst_98 : f32 to vector<144x128xf32>
    %78 = arith.maximumf %76, %77 : vector<144x128xf32>
    %c0_99 = arith.constant 0 : index
    %c0_100 = arith.constant 0 : index
    %c0_101 = arith.constant 0 : index
    %79 = vector.load %arg5[%c0_99, %c0_100, %c0_101] : memref<1x1x128xf32, #tpu.memory_space<vmem>>, vector<1x1x128xf32>
    %80 = vector.shape_cast %79 : vector<1x1x128xf32> to vector<1x128xf32>
    %81 = vector.broadcast %80 : vector<1x128xf32> to vector<144x128xf32>
    %82 = arith.mulf %78, %81 : vector<144x128xf32>
    %c0_102 = arith.constant 0 : index
    %c0_103 = arith.constant 0 : index
    %c0_104 = arith.constant 0 : index
    %c0_105 = arith.constant 0 : index
    %83 = vector.load %arg6[%c0_102, %c0_103, %c0_104, %c0_105] : memref<1x1x144x128xbf16, #tpu.memory_space<vmem>>, vector<1x1x144x128xbf16>
    %84 = vector.shape_cast %83 : vector<1x1x144x128xbf16> to vector<144x128xbf16>
    %85 = arith.extf %84 : vector<144x128xbf16> to vector<144x128xf32>
    %86 = arith.addf %85, %82 : vector<144x128xf32>
    %c0_106 = arith.constant 0 : index
    %c0_107 = arith.constant 0 : index
    %c0_108 = arith.constant 0 : index
    %c0_109 = arith.constant 0 : index
    %87 = vector.load %arg7[%c0_106, %c0_107, %c0_108, %c0_109] : memref<1x1x144x128xf32, #tpu.memory_space<vmem>>, vector<1x1x144x128xf32>
    %88 = vector.shape_cast %87 : vector<1x1x144x128xf32> to vector<144x128xf32>
    %89 = vector.shape_cast %86 : vector<144x128xf32> to vector<1x1x144x128xf32>
    tpu.vector_store %arg7[%c0_106, %c0_107, %c0_108, %c0_109], %89 {strides = array<i32>} : memref<1x1x144x128xf32, #tpu.memory_space<vmem>>, vector<1x1x144x128xf32>,
    return
  }
  func.func @transform_0(%arg0: i32, %arg1: i32) -> (i32, i32, i32, i32) {
    %c0_i32 = arith.constant 0 : i32
    %c0_i32_0 = arith.constant 0 : i32
    %c0_i32_1 = arith.constant 0 : i32
    return %arg0, %arg1, %c0_i32, %c0_i32_0 : i32, i32, i32, i32
  }
  func.func @transform_1(%arg0: i32, %arg1: i32) -> (i32, i32, i32) {
    %c0_i32 = arith.constant 0 : i32
    %c0_i32_0 = arith.constant 0 : i32
    %c0_i32_1 = arith.constant 0 : i32
    %c0_i32_2 = arith.constant 0 : i32
    return %c0_i32, %c0_i32_0, %c0_i32_1 : i32, i32, i32
  }
  func.func @transform_2(%arg0: i32, %arg1: i32) -> (i32, i32) {
    %c0_i32 = arith.constant 0 : i32
    %c0_i32_0 = arith.constant 0 : i32
    %c0_i32_1 = arith.constant 0 : i32
    return %c0_i32, %c0_i32_0 : i32, i32
  }
  func.func @transform_3(%arg0: i32, %arg1: i32) -> (i32, i32, i32) {
    %c0_i32 = arith.constant 0 : i32
    %c0_i32_0 = arith.constant 0 : i32
    %c0_i32_1 = arith.constant 0 : i32
    return %arg0, %c0_i32, %c0_i32_0 : i32, i32, i32
  }
  func.func @transform_4(%arg0: i32, %arg1: i32) -> (i32, i32, i32, i32) {
    %c0_i32 = arith.constant 0 : i32
    %c0_i32_0 = arith.constant 0 : i32
    %c0_i32_1 = arith.constant 0 : i32
    return %arg0, %arg1, %c0_i32, %c0_i32_0 : i32, i32, i32, i32
  }
  func.func @transform_5(%arg0: i32, %arg1: i32) -> (i32, i32, i32, i32) {
    %c0_i32 = arith.constant 0 : i32
    %c0_i32_0 = arith.constant 0 : i32
    %c0_i32_1 = arith.constant 0 : i32
    return %arg0, %arg1, %c0_i32, %c0_i32_0 : i32, i32, i32, i32
  }
}

</mosaic_0001>

<llo_original>
// kernel: tpu_custom_call.1
$region0: #{tpu_custom_call.1}
  #allocation0 [shape = 'u32[]', space=smem, size = 0x4, offset = 0x4, fixed_abs, tag = 'smem constant byte address 0x4 - core index']
  #allocation1 [shape = 'u32[144,128]{1,0:T(1,128)}', space=vmem, size = 0x12000, scoped, tag = 'internal scratch']
  #allocation2 [shape = 'f32[144,128]{1,0:T(8,128)}', space=vmem, size = 0x12000, scoped, tag = 'scratch operand']
  %s0 = inlined_call_operand.vmem [shape: bf16[2,2,184,72], index: 0, kind: input, shape index: {}]
  %s1 = inlined_call_operand.vmem [shape: bf16[9,72,128], index: 1, kind: input, shape index: {}]
  %s2 = inlined_call_operand.vmem [shape: f32[1,128], index: 2, kind: input, shape index: {}]
  %s3 = inlined_call_operand.vmem [shape: f32[2,1,128], index: 3, kind: input, shape index: {}]
  %s4 = inlined_call_operand.vmem [shape: bf16[2,2,144,128], index: 4, kind: input, shape index: {}]
  %s5 = inlined_call_operand.hbm [shape: f32[2,2,144,128], index: 5, kind: output, shape index: {}]
  %s6 = sld [smem:[#allocation0]]
  $region53: #{tpu_custom_call.1} parent=0
    _
  %s8 = ssub.s32 1, %s6
  %s9 = scalar_select 0, %s8, %s6
  $region1: #{tpu_custom_call.1} parent=0
    #allocation3 [shape = 'u8[147456]{0}', space=vmem, size = 0x24000, scoped, tag = 'output window, operand 0']
    #allocation4 [shape = 's32[2]{0}', space=sflag, size = 0x8, scoped, tag = 'scoped memory for tpu_custom_call.1']
    %10 = vsyncpa [#allocation4], 0
    %s11 = scalar_lea.sflag [#allocation4], 1
    %12 = vsyncpa %s11, 0
    loop: start=0, step=1, limit=6
    $region2: #{tpu_custom_call.1} parent=1 // loop_pre_header
      _
    $region3: #{tpu_custom_call.1} parent=1 // loop_header
      %s14 = sphi 0, %s18
      %p15 = scmp.ge.s32.totalorder %s14, 6
      %s21 = sphi 0, %s33
      %s22 = sphi 0, %s29
      %s23 = sphi 0, %s21
      %s24 = sphi 0, %s22
      %s25 = sphi 0, %s23
      %s26 = sphi 0, %s24
      %s38 = sphi 0, %s40
      %s41 = sphi 0, %s38
      %s42 = sphi 0, %s41
      %s58 = sphi 0, %s42
      %s62 = sphi 0, %s62
      %s64 = sphi 0, %s62
      %s65 = sphi 0, %s64
      %s79 = sphi 0, %s65
      %s83 = sphi 0, %s83
      %s85 = sphi 0, %s83
      %s86 = sphi 0, %s85
      %s100 = sphi 0, %s86
      %s106 = sphi 0, %s108
      %s109 = sphi 0, %s106
      %s110 = sphi 0, %s109
      %s126 = sphi 0, %s110
      %s134 = sphi 0, %s136
      %s137 = sphi 0, %s134
      %s138 = sphi 0, %s137
      %s154 = sphi 0, %s138
      %s162 = sphi 0, %s164
      %s165 = sphi 0, %s162
      %s166 = sphi 0, %s165
      %s182 = sphi 0, %s166
    $region4: #{tpu_custom_call.1} parent=1 // loop_header_branch
      %17 = sbr.rel (%p15) target = $region8
    $region5: #{tpu_custom_call.1} parent=1 // loop_body
      %s19 = ssub.s32 %s14, 1
      %s20 = ssub.s32 %s14, 2
      %s27 = sadd.s32 1, %s22
      %p28 = scmp.ge.s32.totalorder %s27, 2
      %s29 = scalar_select %p28, 0, %s27
      %s30 = sadd.s32 1, %s21
      %s31 = scalar_select %p28, %s30, %s21
      %p32 = scmp.ge.s32.totalorder %s31, 2
      %s33 = scalar_select %p32, 0, %s31
      %s34 = ssub.s32 %s21, %s33
      %s35 = ssub.s32 %s22, %s29
      %s36 = sor.u32 %s34, %s35
      %p37 = scmp.eq.s32.totalorder %s36, 0
      %s39 = sadd.s32 %s38, 1
      %s40 = scalar_select %p37, %s38, %s39
      %p43 = pneg %p37
      %p44 = scmp.eq.s32.totalorder %s14, 3
      %p45 = por %p43, %p44
      %p46 = scmp.ne.s32.totalorder %s38, %s41
      %p47 = scmp.eq.s32.totalorder %s14, 0
      %p48 = por %p46, %p47
      %p49 = scmp.ne.s32.totalorder %s38, %s41
      %p50 = scmp.eq.s32.totalorder %s19, 3
      %p51 = por %p49, %p50
      %p52 = scmp.ne.s32.totalorder %s41, %s42
      %p53 = scmp.eq.s32.totalorder %s19, 0
      %p54 = por %p52, %p53
      %p55 = scmp.ne.s32.totalorder %s41, %s42
      %p56 = scmp.eq.s32.totalorder %s20, 3
      %p57 = por %p55, %p56
      %p59 = scmp.ne.s32.totalorder %s42, %s58
      %p60 = scmp.eq.s32.totalorder %s20, 0
      %p61 = por %p59, %p60
      %s63 = sadd.s32 %s62, 1
      %p66 = scmp.eq.s32.totalorder %s14, 3
      %p67 = scmp.ne.s32.totalorder %s62, %s64
      %p68 = scmp.eq.s32.totalorder %s14, 0
      %p69 = por %p67, %p68
      %p70 = scmp.ne.s32.totalorder %s62, %s64
      %p71 = scmp.eq.s32.totalorder %s19, 3
      %p72 = por %p70, %p71
      %p73 = scmp.ne.s32.totalorder %s64, %s65
      %p74 = scmp.eq.s32.totalorder %s19, 0
      %p75 = por %p73, %p74
      %p76 = scmp.ne.s32.totalorder %s64, %s65
      %p77 = scmp.eq.s32.totalorder %s20, 3
      %p78 = por %p76, %p77
      %p80 = scmp.ne.s32.totalorder %s65, %s79
      %p81 = scmp.eq.s32.totalorder %s20, 0
      %p82 = por %p80, %p81
      %s84 = sadd.s32 %s83, 1
      %p87 = scmp.eq.s32.totalorder %s14, 3
      %p88 = scmp.ne.s32.totalorder %s83, %s85
      %p89 = scmp.eq.s32.totalorder %s14, 0
      %p90 = por %p88, %p89
      %p91 = scmp.ne.s32.totalorder %s83, %s85
      %p92 = scmp.eq.s32.totalorder %s19, 3
      %p93 = por %p91, %p92
      %p94 = scmp.ne.s32.totalorder %s85, %s86
      %p95 = scmp.eq.s32.totalorder %s19, 0
      %p96 = por %p94, %p95
      %p97 = scmp.ne.s32.totalorder %s85, %s86
      %p98 = scmp.eq.s32.totalorder %s20, 3
      %p99 = por %p97, %p98
      %p101 = scmp.ne.s32.totalorder %s86, %s100
      %p102 = scmp.eq.s32.totalorder %s20, 0
      %p103 = por %p101, %p102
      %s104 = ssub.s32 %s21, %s33
      %p105 = scmp.eq.s32.totalorder %s104, 0
      %s107 = sadd.s32 %s106, 1
      %s108 = scalar_select %p105, %s106, %s107
      %p111 = pneg %p105
      %p112 = scmp.eq.s32.totalorder %s14, 3
      %p113 = por %p111, %p112
      %p114 = scmp.ne.s32.totalorder %s106, %s109
      %p115 = scmp.eq.s32.totalorder %s14, 0
      %p116 = por %p114, %p115
      %p117 = scmp.ne.s32.totalorder %s106, %s109
      %p118 = scmp.eq.s32.totalorder %s19, 3
      %p119 = por %p117, %p118
      %p120 = scmp.ne.s32.totalorder %s109, %s110
      %p121 = scmp.eq.s32.totalorder %s19, 0
      %p122 = por %p120, %p121
      %p123 = scmp.ne.s32.totalorder %s109, %s110
      %p124 = scmp.eq.s32.totalorder %s20, 3
      %p125 = por %p123, %p124
      %p127 = scmp.ne.s32.totalorder %s110, %s126
      %p128 = scmp.eq.s32.totalorder %s20, 0
      %p129 = por %p127, %p128
      %s130 = ssub.s32 %s21, %s33
      %s131 = ssub.s32 %s22, %s29
      %s132 = sor.u32 %s130, %s131
      %p133 = scmp.eq.s32.totalorder %s132, 0
      %s135 = sadd.s32 %s134, 1
      %s136 = scalar_select %p133, %s134, %s135
      %p139 = pneg %p133
      %p140 = scmp.eq.s32.totalorder %s14, 3
      %p141 = por %p139, %p140
      %p142 = scmp.ne.s32.totalorder %s134, %s137
      %p143 = scmp.eq.s32.totalorder %s14, 0
      %p144 = por %p142, %p143
      %p145 = scmp.ne.s32.totalorder %s134, %s137
      %p146 = scmp.eq.s32.totalorder %s19, 3
      %p147 = por %p145, %p146
      %p148 = scmp.ne.s32.totalorder %s137, %s138
      %p149 = scmp.eq.s32.totalorder %s19, 0
      %p150 = por %p148, %p149
      %p151 = scmp.ne.s32.totalorder %s137, %s138
      %p152 = scmp.eq.s32.totalorder %s20, 3
      %p153 = por %p151, %p152
      %p155 = scmp.ne.s32.totalorder %s138, %s154
      %p156 = scmp.eq.s32.totalorder %s20, 0
      %p157 = por %p155, %p156
      %s158 = ssub.s32 %s21, %s33
      %s159 = ssub.s32 %s22, %s29
      %s160 = sor.u32 %s158, %s159
      %p161 = scmp.eq.s32.totalorder %s160, 0
      %s163 = sadd.s32 %s162, 1
      %s164 = scalar_select %p161, %s162, %s163
      %p167 = pneg %p161
      %p168 = scmp.eq.s32.totalorder %s14, 3
      %p169 = por %p167, %p168
      %p170 = scmp.ne.s32.totalorder %s162, %s165
      %p171 = scmp.eq.s32.totalorder %s14, 0
      %p172 = por %p170, %p171
      %p173 = scmp.ne.s32.totalorder %s162, %s165
      %p174 = scmp.eq.s32.totalorder %s19, 3
      %p175 = por %p173, %p174
      %p176 = scmp.ne.s32.totalorder %s165, %s166
      %p177 = scmp.eq.s32.totalorder %s19, 0
      %p178 = por %p176, %p177
      %p179 = scmp.ne.s32.totalorder %s165, %s166
      %p180 = scmp.eq.s32.totalorder %s20, 3
      %p181 = por %p179, %p180
      %p183 = scmp.ne.s32.totalorder %s166, %s182
      %p184 = scmp.eq.s32.totalorder %s20, 0
      %p185 = por %p183, %p184
      %p186 = scmp.le.s32.totalorder 1, %s14
      %p187 = scmp.lt.s32.totalorder %s14, 5
      %p188 = pnand %p186, %p187
      %p189 = pneg %p188
      // Predicated region
      $region9: #{tpu_custom_call.1} parent=5 // pred_check
        _
      $region10: #{tpu_custom_call.1} parent=5 // pred_check_branch
        %191 = sbr.rel (%p188) target = $region12
      $region11: #{tpu_custom_call.1} parent=5 // pred_region
        %s192 = ssub.s32 %s14, 1
        // Predicated region
        $region13: #{tpu_custom_call.1} parent=11 // pred_check
          %p193 = pneg %p75
        $region14: #{tpu_custom_call.1} parent=11 // pred_check_branch
          %195 = sbr.rel (%p193) target = $region16
        $region15: #{tpu_custom_call.1} parent=11 // pred_region
          _
        $region16: #{tpu_custom_call.1} parent=11 // pred_fallthru
          _
        // Predicated region
        $region17: #{tpu_custom_call.1} parent=11 // pred_check
          %p196 = pneg %p96
        $region18: #{tpu_custom_call.1} parent=11 // pred_check_branch
          %198 = sbr.rel (%p196) target = $region20
        $region19: #{tpu_custom_call.1} parent=11 // pred_region
          _
        $region20: #{tpu_custom_call.1} parent=11 // pred_fallthru
          _
      $region12: #{tpu_custom_call.1} parent=5 // pred_fallthru
        _
      %p199 = scmp.lt.s32.totalorder %s14, 4
      // Predicated region
      $region21: #{tpu_custom_call.1} parent=5 // pred_check
        %p200 = pneg %p199
      $region22: #{tpu_custom_call.1} parent=5 // pred_check_branch
        %202 = sbr.rel (%p200) target = $region24
      $region23: #{tpu_custom_call.1} parent=5 // pred_region
        // Predicated region
        $region25: #{tpu_custom_call.1} parent=23 // pred_check
          %p203 = pneg %p48
        $region26: #{tpu_custom_call.1} parent=23 // pred_check_branch
          %205 = sbr.rel (%p203) target = $region28
        $region27: #{tpu_custom_call.1} parent=23 // pred_region
          %p206 = scmp.lt.s32.totalorder %s21, 1
          %s207 = scalar_select %p206, %s21, 1
          %p208 = scmp.lt.s32.totalorder %s22, 1
          %s209 = scalar_select %p208, %s22, 1
          %s210 = smul.addr %s209, 23
          %s211 = smul.addr %s207, 46
          %s212 = sadd.s32 %s210, %s211
          %s213 = smul.addr %s212, 4
          %s214 = scalar_lea.vmem %s0, %s213
        $region28: #{tpu_custom_call.1} parent=23 // pred_fallthru
          _
        // Predicated region
        $region29: #{tpu_custom_call.1} parent=23 // pred_check
          %p215 = pneg %p116
        $region30: #{tpu_custom_call.1} parent=23 // pred_check_branch
          %217 = sbr.rel (%p215) target = $region32
        $region31: #{tpu_custom_call.1} parent=23 // pred_region
          %p218 = scmp.lt.s32.totalorder %s21, 1
          %s219 = scalar_select %p218, %s21, 1
          %s220 = scalar_lea.vmem %s3, %s219
        $region32: #{tpu_custom_call.1} parent=23 // pred_fallthru
          _
        // Predicated region
        $region33: #{tpu_custom_call.1} parent=23 // pred_check
          %p221 = pneg %p144
        $region34: #{tpu_custom_call.1} parent=23 // pred_check_branch
          %223 = sbr.rel (%p221) target = $region36
        $region35: #{tpu_custom_call.1} parent=23 // pred_region
          %p224 = scmp.lt.s32.totalorder %s21, 1
          %s225 = scalar_select %p224, %s21, 1
          %p226 = scmp.lt.s32.totalorder %s22, 1
          %s227 = scalar_select %p226, %s22, 1
          %s228 = smul.addr %s227, 18
          %s229 = smul.addr %s225, 36
          %s230 = sadd.s32 %s228, %s229
          %s231 = smul.addr %s230, 4
          %s232 = scalar_lea.vmem %s4, %s231
        $region36: #{tpu_custom_call.1} parent=23 // pred_fallthru
          _
      $region24: #{tpu_custom_call.1} parent=5 // pred_fallthru
        _
      %p233 = scmp.le.s32.totalorder 1, %s14
      %p234 = scmp.lt.s32.totalorder %s14, 5
      %p235 = pnand %p233, %p234
      %p236 = pneg %p235
      // Predicated region
      $region37: #{tpu_custom_call.1} parent=5 // pred_check
        _
      $region38: #{tpu_custom_call.1} parent=5 // pred_check_branch
        %238 = sbr.rel (%p235) target = $region40
      $region39: #{tpu_custom_call.1} parent=5 // pred_region
        %s239 = ssub.s32 %s14, 1
        %p240 = scmp.lt.s32.totalorder %s23, 1
        %s241 = scalar_select %p240, %s23, 1
        %p242 = scmp.lt.s32.totalorder %s24, 1
        %s243 = scalar_select %p242, %s24, 1
        %s244 = smul.addr %s243, 23
        %s245 = smul.addr %s241, 46
        %s246 = sadd.s32 %s244, %s245
        %s247 = smul.addr %s246, 4
        %s248 = scalar_lea.vmem %s0, %s247
        %p249 = pneg %p54
        %p250 = pneg %p51
        %p251 = pneg %p75
        %p252 = pneg %p72
        %p253 = pneg %p96
        %p254 = pneg %p93
        %p255 = scmp.lt.s32.totalorder %s23, 1
        %s256 = scalar_select %p255, %s23, 1
        %s257 = scalar_lea.vmem %s3, %s256
        %p258 = pneg %p122
        %p259 = pneg %p119
        %p260 = scmp.lt.s32.totalorder %s23, 1
        %s261 = scalar_select %p260, %s23, 1
        %p262 = scmp.lt.s32.totalorder %s24, 1
        %s263 = scalar_select %p262, %s24, 1
        %s264 = smul.addr %s263, 18
        %s265 = smul.addr %s261, 36
        %s266 = sadd.s32 %s264, %s265
        %s267 = smul.addr %s266, 4
        %s268 = scalar_lea.vmem %s4, %s267
        %p269 = pneg %p150
        %p270 = pneg %p147
        %p271 = pneg %p178
        %p272 = pneg %p175
        %s273 = sand.u32 %s165, 1
        %s274 = scalar_lea.sflag [#allocation4], %s273
        %s275 = sand.u32 %s165, 1
        %s276 = smul.addr %s275, 144
        %s277 = scalar_lea.vmem [#allocation3], %s276
        %p278 = scmp.lt.s32.totalorder %s23, 1
        %s279 = scalar_select %p278, %s23, 1
        %p280 = scmp.lt.s32.totalorder %s24, 1
        %s281 = scalar_select %p280, %s24, 1
        %s282 = smul.addr %s281, 23
        %s283 = smul.addr %s279, 46
        %s284 = sadd.s32 %s282, %s283
        %s285 = smul.addr %s284, 4
        %s286 = scalar_lea.vmem %s0, %s285
        %p287 = scmp.lt.s32.totalorder %s23, 1
        %s288 = scalar_select %p287, %s23, 1
        %s289 = scalar_lea.vmem %s3, %s288
        %p290 = scmp.lt.s32.totalorder %s23, 1
        %s291 = scalar_select %p290, %s23, 1
        %p292 = scmp.lt.s32.totalorder %s24, 1
        %s293 = scalar_select %p292, %s24, 1
        %s294 = smul.addr %s293, 18
        %s295 = smul.addr %s291, 36
        %s296 = sadd.s32 %s294, %s295
        %s297 = smul.addr %s296, 4
        %s298 = scalar_lea.vmem %s4, %s297
        %v300 = vld [vmem:[%s2] sm:$0x1]
        %v302 = vlaneseq
        %v303 = vshrl.u32 %v302, 7
        %v304 = vsub.s32 0, %v303
        %v305 = vrot.slane %v300, %v304
        %307 = vst [vmem:[#allocation2] sm:$0xff] %v305
        %308 = vst [vmem:[#allocation2 + $0x8] sm:$0xff] %v305
        %309 = vst [vmem:[#allocation2 + $0x10] sm:$0xff] %v305
        %310 = vst [vmem:[#allocation2 + $0x18] sm:$0xff] %v305
        %311 = vst [vmem:[#allocation2 + $0x20] sm:$0xff] %v305
        %312 = vst [vmem:[#allocation2 + $0x28] sm:$0xff] %v305
        %313 = vst [vmem:[#allocation2 + $0x30] sm:$0xff] %v305
        %314 = vst [vmem:[#allocation2 + $0x38] sm:$0xff] %v305
        %315 = vst [vmem:[#allocation2 + $0x40] sm:$0xff] %v305
        %316 = vst [vmem:[#allocation2 + $0x48] sm:$0xff] %v305
        %317 = vst [vmem:[#allocation2 + $0x50] sm:$0xff] %v305
        %318 = vst [vmem:[#allocation2 + $0x58] sm:$0xff] %v305
        %319 = vst [vmem:[#allocation2 + $0x60] sm:$0xff] %v305
        %320 = vst [vmem:[#allocation2 + $0x68] sm:$0xff] %v305
        %321 = vst [vmem:[#allocation2 + $0x70] sm:$0xff] %v305
        %322 = vst [vmem:[#allocation2 + $0x78] sm:$0xff] %v305
        %323 = vst [vmem:[#allocation2 + $0x80] sm:$0xff] %v305
        %324 = vst [vmem:[#allocation2 + $0x88] sm:$0xff] %v305
        %v325 = vld [vmem:[%s286] sm:$0xf]
        %v326 = vld [vmem:[%s286 + $0x4] sm:$0xf]
        %v327 = vld [vmem:[%s286 + $0x8] sm:$0xf]
        %v328 = vld [vmem:[%s286 + $0xc] sm:$0xf]
        %v329 = vld [vmem:[%s286 + $0x10] sm:$0xf]
        %v330 = vld [vmem:[%s286 + $0x14] sm:$0xf]
        %v331 = vld [vmem:[%s286 + $0x18] sm:$0xf]
        %v332 = vld [vmem:[%s286 + $0x1c] sm:$0xf]
        %v333 = vld [vmem:[%s286 + $0x20] sm:$0xf]
        %v334 = vld [vmem:[%s286 + $0x24] sm:$0xf]
        %v335 = vld [vmem:[%s286 + $0x28] sm:$0xf]
        %v336 = vld [vmem:[%s286 + $0x2c] sm:$0xf]
        %v337 = vld [vmem:[%s286 + $0x30] sm:$0xf]
        %v338 = vld [vmem:[%s286 + $0x34] sm:$0xf]
        %v339 = vld [vmem:[%s286 + $0x38] sm:$0xf]
        %v340 = vld [vmem:[%s286 + $0x3c] sm:$0xf]
        %v341 = vld [vmem:[%s286 + $0x40] sm:$0xf]
        %v342 = vld [vmem:[%s286 + $0x44] sm:$0xf]
        %v343 = vld [vmem:[#allocation2] sm:$0xff]
        %v344 = vld [vmem:[#allocation2 + $0x8] sm:$0xff]
        %v345 = vld [vmem:[#allocation2 + $0x10] sm:$0xff]
        %v346 = vld [vmem:[#allocation2 + $0x18] sm:$0xff]
        %v347 = vld [vmem:[#allocation2 + $0x20] sm:$0xff]
        %v348 = vld [vmem:[#allocation2 + $0x28] sm:$0xff]
        %v349 = vld [vmem:[#allocation2 + $0x30] sm:$0xff]
        %v350 = vld [vmem:[#allocation2 + $0x38] sm:$0xff]
        %v351 = vld [vmem:[#allocation2 + $0x40] sm:$0xff]
        %v352 = vld [vmem:[#allocation2 + $0x48] sm:$0xff]
        %v353 = vld [vmem:[#allocation2 + $0x50] sm:$0xff]
        %v354 = vld [vmem:[#allocation2 + $0x58] sm:$0xff]
        %v355 = vld [vmem:[#allocation2 + $0x60] sm:$0xff]
        %v356 = vld [vmem:[#allocation2 + $0x68] sm:$0xff]
        %v357 = vld [vmem:[#allocation2 + $0x70] sm:$0xff]
        %v358 = vld [vmem:[#allocation2 + $0x78] sm:$0xff]
        %v359 = vld [vmem:[#allocation2 + $0x80] sm:$0xff]
        %v360 = vld [vmem:[#allocation2 + $0x88] sm:$0xff]
        %v361 = vld [vmem:[%s1] sm:$0xf]
        %v362 = vld [vmem:[%s1 + $0x4] sm:$0xf]
        %v363 = vld [vmem:[%s1 + $0x8] sm:$0xf]
        %v364 = vld [vmem:[%s1 + $0xc] sm:$0xf]
        %v365 = vld [vmem:[%s1 + $0x10] sm:$0xf]
        %v366 = vld [vmem:[%s1 + $0x14] sm:$0xf]
        %v367 = vld [vmem:[%s1 + $0x18] sm:$0xf]
        %v368 = vld [vmem:[%s1 + $0x1c] sm:$0xf]
        %v369 = vld [vmem:[%s1 + $0x20] sm:$0xf]
        %v388 = vunpack.c.l.b16 %v325
        %v389 = vunpack.c.l.b16 %v326
        %v390 = vunpack.c.l.b16 %v327
        %v391 = vunpack.c.l.b16 %v328
        %v392 = vunpack.c.l.b16 %v329
        %v393 = vunpack.c.l.b16 %v330
        %v394 = vunpack.c.l.b16 %v331
        %v395 = vunpack.c.l.b16 %v332
        %v396 = vunpack.c.l.b16 %v333
        %v397 = vunpack.c.l.b16 %v334
        %v398 = vunpack.c.l.b16 %v335
        %v399 = vunpack.c.l.b16 %v336
        %v400 = vunpack.c.l.b16 %v337
        %v401 = vunpack.c.l.b16 %v338
        %v402 = vunpack.c.l.b16 %v339
        %v403 = vunpack.c.l.b16 %v340
        %v404 = vunpack.c.l.b16 %v341
        %v405 = vunpack.c.l.b16 %v342
        %v406 = vpack.c.b16 %v389, %v388
        %v407 = vpack.c.b16 %v391, %v390
        %v408 = vpack.c.b16 %v393, %v392
        %v409 = vpack.c.b16 %v395, %v394
        %v410 = vpack.c.b16 %v397, %v396
        %v411 = vpack.c.b16 %v399, %v398
        %v412 = vpack.c.b16 %v401, %v400
        %v413 = vpack.c.b16 %v403, %v402
        %v414 = vpack.c.b16 %v405, %v404
        %v424 = vunpack.c.l.b16 %v361
        %v425 = vunpack.c.l.b16 %v362
        %v426 = vunpack.c.l.b16 %v363
        %v427 = vunpack.c.l.b16 %v364
        %v428 = vunpack.c.l.b16 %v365
        %v429 = vunpack.c.l.b16 %v366
        %v430 = vunpack.c.l.b16 %v367
        %v431 = vunpack.c.l.b16 %v368
        %v432 = vunpack.c.l.b16 %v369
        %v433 = vpack.c.b16 %v425, %v424
        %v434 = vpack.c.b16 %v427, %v426
        %v435 = vpack.c.b16 %v429, %v428
        %v436 = vpack.c.b16 %v431, %v430
        %v437 = vpack.c.b16 %v432, %v432
        %vm442 = vcmask 588800
        %v444 = vsel %vm442, %v406, 0
        %v447 = vsel %vm442, %v407, 0
        %v450 = vsel %vm442, %v408, 0
        %v453 = vsel %vm442, %v409, 0
        %v456 = vsel %vm442, %v410, 0
        %v459 = vsel %vm442, %v411, 0
        %v462 = vsel %vm442, %v412, 0
        %v465 = vsel %vm442, %v413, 0
        %v468 = vsel %vm442, %v414, 0
        %vm470 = vcmask 1043456
        %v472 = vsel %vm470, %v437, 0
        %474 = vmatprep.subr.bf16.mxu0 0
        %475 = vmatpush1.bf16.msra.mxu0 0
        %476 = vmatprep.subr.bf16.mxu0 0
        %477 = vmatpush1.bf16.msra.mxu0 0
        %478 = vmatprep.subr.bf16.mxu0 0
        %479 = vmatpush1.bf16.msra.mxu0 0
        %480 = vmatprep.subr.bf16.mxu0 0
        %481 = vmatpush1.bf16.msra.mxu0 %v472
        %482 = vmatprep.subr.bf16.mxu0 0
        %483 = vmatpush1.bf16.msra.mxu0 %v436
        %484 = vmatprep.subr.bf16.mxu0 0
        %485 = vmatpush1.bf16.msra.mxu0 %v435
        %486 = vmatprep.subr.bf16.mxu0 0
        %487 = vmatpush1.bf16.msra.mxu0 %v434
        %488 = vmatprep.subr.bf16.mxu0 0
        %489 = vmatpush1.bf16.msra.mxu0 %v433
        %490 = vmatprep.subr.bf16.mxu0 0
        %491 = vmatpush2.bf16.msra.mxu0 0
        %492 = vmatprep.subr.bf16.mxu0 0
        %493 = vmatpush2.bf16.msra.mxu0 0
        %494 = vmatprep.subr.bf16.mxu0 0
        %495 = vmatpush2.bf16.msra.mxu0 0
        %496 = vmatprep.subr.bf16.mxu0 0
        %497 = vmatpush2.bf16.msra.mxu0 0
        %498 = vmatprep.subr.bf16.mxu0 0
        %499 = vmatpush2.bf16.msra.mxu0 0
        %500 = vmatprep.subr.bf16.mxu0 0
        %501 = vmatpush2.bf16.msra.mxu0 0
        %502 = vmatprep.subr.bf16.mxu0 0
        %503 = vmatpush2.bf16.msra.mxu0 0
        %504 = vmatprep.subr.bf16.mxu0 0
        %505 = vmatpush2.bf16.msra.mxu0 0
        %506 = vmatprep.mubr.bf16.mxu0 0
        %507 = vmatmul.mubr.bf16.gmra.mxu0 %v444
        %v508 = vpop.f32.mrf.mxu0
        %v509 = vadd.f32 0.0, %v508
        %v510 = vpop.f32.mrf.mxu0
        %v511 = vpop.f32.mrf.mxu0
        %v512 = vadd.f32 0.0, %v511
        %v513 = vpop.f32.mrf.mxu0
        %514 = vmatprep.mubr.bf16.mxu0 0
        %515 = vmatmul.mubr.bf16.gmra.mxu0 %v447
        %v516 = vpop.f32.mrf.mxu0
        %v517 = vadd.f32 0.0, %v516
        %v518 = vpop.f32.mrf.mxu0
        %v519 = vpop.f32.mrf.mxu0
        %v520 = vadd.f32 0.0, %v519
        %v521 = vpop.f32.mrf.mxu0
        %522 = vmatprep.mubr.bf16.mxu0 0
        %523 = vmatmul.mubr.bf16.gmra.mxu0 %v450
        %v524 = vpop.f32.mrf.mxu0
        %v525 = vadd.f32 0.0, %v524
        %v526 = vpop.f32.mrf.mxu0
        %v527 = vpop.f32.mrf.mxu0
        %v528 = vadd.f32 0.0, %v527
        %v529 = vpop.f32.mrf.mxu0
        %530 = vmatprep.mubr.bf16.mxu0 0
        %531 = vmatmul.mubr.bf16.gmra.mxu0 %v453
        %v532 = vpop.f32.mrf.mxu0
        %v533 = vadd.f32 0.0, %v532
        %v534 = vpop.f32.mrf.mxu0
        %v535 = vpop.f32.mrf.mxu0
        %v536 = vadd.f32 0.0, %v535
        %v537 = vpop.f32.mrf.mxu0
        %538 = vmatprep.mubr.bf16.mxu0 0
        %539 = vmatmul.mubr.bf16.gmra.mxu0 %v456
        %v540 = vpop.f32.mrf.mxu0
        %v541 = vadd.f32 0.0, %v540
        %v542 = vpop.f32.mrf.mxu0
        %v543 = vpop.f32.mrf.mxu0
        %v544 = vadd.f32 0.0, %v543
        %v545 = vpop.f32.mrf.mxu0
        %546 = vmatprep.mubr.bf16.mxu0 0
        %547 = vmatmul.mubr.bf16.gmra.mxu0 %v459
        %v548 = vpop.f32.mrf.mxu0
        %v549 = vadd.f32 0.0, %v548
        %v550 = vpop.f32.mrf.mxu0
        %v551 = vpop.f32.mrf.mxu0
        %v552 = vadd.f32 0.0, %v551
        %v553 = vpop.f32.mrf.mxu0
        %554 = vmatprep.mubr.bf16.mxu0 0
        %555 = vmatmul.mubr.bf16.gmra.mxu0 %v462
        %v556 = vpop.f32.mrf.mxu0
        %v557 = vadd.f32 0.0, %v556
        %v558 = vpop.f32.mrf.mxu0
        %v559 = vpop.f32.mrf.mxu0
        %v560 = vadd.f32 0.0, %v559
        %v561 = vpop.f32.mrf.mxu0
        %562 = vmatprep.mubr.bf16.mxu0 0
        %563 = vmatmul.mubr.bf16.gmra.mxu0 %v465
        %v564 = vpop.f32.mrf.mxu0
        %v565 = vadd.f32 0.0, %v564
        %v566 = vpop.f32.mrf.mxu0
        %v567 = vpop.f32.mrf.mxu0
        %v568 = vadd.f32 0.0, %v567
        %v569 = vpop.f32.mrf.mxu0
        %570 = vmatprep.mubr.bf16.mxu0 0
        %571 = vmatmul.mubr.bf16.gmra.mxu0 %v468
        %v572 = vpop.f32.mrf.mxu0
        %v573 = vadd.f32 0.0, %v572
        %v574 = vpop.f32.mrf.mxu0
        %v575 = vpop.f32.mrf.mxu0
        %v576 = vadd.f32 0.0, %v575
        %v577 = vpop.f32.mrf.mxu0
        %578 = vdwg.mxu0
        %v579 = vadd.f32 %v343, %v509
        %v580 = vadd.f32 %v344, %v512
        %v581 = vadd.f32 %v345, %v517
        %v582 = vadd.f32 %v346, %v520
        %v583 = vadd.f32 %v347, %v525
        %v584 = vadd.f32 %v348, %v528
        %v585 = vadd.f32 %v349, %v533
        %v586 = vadd.f32 %v350, %v536
        %v587 = vadd.f32 %v351, %v541
        %v588 = vadd.f32 %v352, %v544
        %v589 = vadd.f32 %v353, %v549
        %v590 = vadd.f32 %v354, %v552
        %v591 = vadd.f32 %v355, %v557
        %v592 = vadd.f32 %v356, %v560
        %v593 = vadd.f32 %v357, %v565
        %v594 = vadd.f32 %v358, %v568
        %v595 = vadd.f32 %v359, %v573
        %v596 = vadd.f32 %v360, %v576
        %597 = vst [vmem:[#allocation2] sm:$0xff] %v579
        %598 = vst [vmem:[#allocation2 + $0x8] sm:$0xff] %v580
        %599 = vst [vmem:[#allocation2 + $0x10] sm:$0xff] %v581
        %600 = vst [vmem:[#allocation2 + $0x18] sm:$0xff] %v582
        %601 = vst [vmem:[#allocation2 + $0x20] sm:$0xff] %v583
        %602 = vst [vmem:[#allocation2 + $0x28] sm:$0xff] %v584
        %603 = vst [vmem:[#allocation2 + $0x30] sm:$0xff] %v585
        %604 = vst [vmem:[#allocation2 + $0x38] sm:$0xff] %v586
        %605 = vst [vmem:[#allocation2 + $0x40] sm:$0xff] %v587
        %606 = vst [vmem:[#allocation2 + $0x48] sm:$0xff] %v588
        %607 = vst [vmem:[#allocation2 + $0x50] sm:$0xff] %v589
        %608 = vst [vmem:[#allocation2 + $0x58] sm:$0xff] %v590
        %609 = vst [vmem:[#allocation2 + $0x60] sm:$0xff] %v591
        %610 = vst [vmem:[#allocation2 + $0x68] sm:$0xff] %v592
        %611 = vst [vmem:[#allocation2 + $0x70] sm:$0xff] %v593
        %612 = vst [vmem:[#allocation2 + $0x78] sm:$0xff] %v594
        %613 = vst [vmem:[#allocation2 + $0x80] sm:$0xff] %v595
        %614 = vst [vmem:[#allocation2 + $0x88] sm:$0xff] %v596
        %v615 = vld [vmem:[%s286] sm:$0xf]
        %v616 = vld [vmem:[%s286 + $0x4] sm:$0xf]
        %v617 = vld [vmem:[%s286 + $0x8] sm:$0xf]
        %v618 = vld [vmem:[%s286 + $0xc] sm:$0xf]
        %v619 = vld [vmem:[%s286 + $0x10] sm:$0xf]
        %v620 = vld [vmem:[%s286 + $0x14] sm:$0xf]
        %v621 = vld [vmem:[%s286 + $0x18] sm:$0xf]
        %v622 = vld [vmem:[%s286 + $0x1c] sm:$0xf]
        %v623 = vld [vmem:[%s286 + $0x20] sm:$0xf]
        %v624 = vld [vmem:[%s286 + $0x24] sm:$0xf]
        %v625 = vld [vmem:[%s286 + $0x28] sm:$0xf]
        %v626 = vld [vmem:[%s286 + $0x2c] sm:$0xf]
        %v627 = vld [vmem:[%s286 + $0x30] sm:$0xf]
        %v628 = vld [vmem:[%s286 + $0x34] sm:$0xf]
        %v629 = vld [vmem:[%s286 + $0x38] sm:$0xf]
        %v630 = vld [vmem:[%s286 + $0x3c] sm:$0xf]
        %v631 = vld [vmem:[%s286 + $0x40] sm:$0xf]
        %v632 = vld [vmem:[%s286 + $0x44] sm:$0xf]
        %v633 = vld [vmem:[%s286 + $0x48] sm:$0x1]
        %v634 = vld [vmem:[#allocation2] sm:$0xff]
        %v635 = vld [vmem:[#allocation2 + $0x8] sm:$0xff]
        %v636 = vld [vmem:[#allocation2 + $0x10] sm:$0xff]
        %v637 = vld [vmem:[#allocation2 + $0x18] sm:$0xff]
        %v638 = vld [vmem:[#allocation2 + $0x20] sm:$0xff]
        %v639 = vld [vmem:[#allocation2 + $0x28] sm:$0xff]
        %v640 = vld [vmem:[#allocation2 + $0x30] sm:$0xff]
        %v641 = vld [vmem:[#allocation2 + $0x38] sm:$0xff]
        %v642 = vld [vmem:[#allocation2 + $0x40] sm:$0xff]
        %v643 = vld [vmem:[#allocation2 + $0x48] sm:$0xff]
        %v644 = vld [vmem:[#allocation2 + $0x50] sm:$0xff]
        %v645 = vld [vmem:[#allocation2 + $0x58] sm:$0xff]
        %v646 = vld [vmem:[#allocation2 + $0x60] sm:$0xff]
        %v647 = vld [vmem:[#allocation2 + $0x68] sm:$0xff]
        %v648 = vld [vmem:[#allocation2 + $0x70] sm:$0xff]
        %v649 = vld [vmem:[#allocation2 + $0x78] sm:$0xff]
        %v650 = vld [vmem:[#allocation2 + $0x80] sm:$0xff]
        %v651 = vld [vmem:[#allocation2 + $0x88] sm:$0xff]
        %s652 = scalar_lea.vmem %s1, 36
        %v653 = vld [vmem:[%s652] sm:$0xf]
        %v654 = vld [vmem:[%s652 + $0x4] sm:$0xf]
        %v655 = vld [vmem:[%s652 + $0x8] sm:$0xf]
        %v656 = vld [vmem:[%s652 + $0xc] sm:$0xf]
        %v657 = vld [vmem:[%s652 + $0x10] sm:$0xf]
        %v658 = vld [vmem:[%s652 + $0x14] sm:$0xf]
        %v659 = vld [vmem:[%s652 + $0x18] sm:$0xf]
        %v660 = vld [vmem:[%s652 + $0x1c] sm:$0xf]
        %v661 = vld [vmem:[%s652 + $0x20] sm:$0xf]
        %v681 = vunpack.c.l.b16 %v615
        %v682 = vunpack.c.l.b16 %v616
        %v683 = vunpack.c.l.b16 %v617
        %v684 = vunpack.c.l.b16 %v618
        %v685 = vunpack.c.l.b16 %v619
        %v686 = vunpack.c.l.b16 %v620
        %v687 = vunpack.c.l.b16 %v621
        %v688 = vunpack.c.l.b16 %v622
        %v689 = vunpack.c.l.b16 %v623
        %v690 = vunpack.c.l.b16 %v624
        %v691 = vunpack.c.l.b16 %v625
        %v692 = vunpack.c.l.b16 %v626
        %v693 = vunpack.c.l.b16 %v627
        %v694 = vunpack.c.l.b16 %v628
        %v695 = vunpack.c.l.b16 %v629
        %v696 = vunpack.c.l.b16 %v630
        %v697 = vunpack.c.l.b16 %v631
        %v698 = vunpack.c.l.b16 %v632
        %v699 = vunpack.c.l.b16 %v633
        %v700 = vpack.c.b16 %v682, %v681
        %v701 = vpack.c.b16 %v684, %v683
        %v702 = vpack.c.b16 %v686, %v685
        %v703 = vpack.c.b16 %v688, %v687
        %v704 = vpack.c.b16 %v690, %v689
        %v705 = vpack.c.b16 %v692, %v691
        %v706 = vpack.c.b16 %v694, %v693
        %v707 = vpack.c.b16 %v696, %v695
        %v708 = vpack.c.b16 %v698, %v697
        %v709 = vpack.c.b16 %v699, %v699
        %vm710 = vsmask.f32 7424
        %v712 = vshrl.u32 %v700, 16
        %v714 = vshll.u32 %v700, 16
        %v716 = vrot.slane %v714, 1
        %v717 = vor.u32 %v712, %v716
        %v719 = vshll.u32 %v701, 16
        %v721 = vrot.slane %v719, 1
        %v722 = vsel %vm710, %v717, %v721
        %v723 = vshrl.u32 %v701, 16
        %v725 = vor.u32 %v723, %v721
        %v727 = vshll.u32 %v702, 16
        %v729 = vrot.slane %v727, 1
        %v730 = vsel %vm710, %v725, %v729
        %v731 = vshrl.u32 %v702, 16
        %v733 = vor.u32 %v731, %v729
        %v735 = vshll.u32 %v703, 16
        %v737 = vrot.slane %v735, 1
        %v738 = vsel %vm710, %v733, %v737
        %v739 = vshrl.u32 %v703, 16
        %v741 = vor.u32 %v739, %v737
        %v743 = vshll.u32 %v704, 16
        %v745 = vrot.slane %v743, 1
        %v746 = vsel %vm710, %v741, %v745
        %v747 = vshrl.u32 %v704, 16
        %v749 = vor.u32 %v747, %v745
        %v751 = vshll.u32 %v705, 16
        %v753 = vrot.slane %v751, 1
        %v754 = vsel %vm710, %v749, %v753
        %v755 = vshrl.u32 %v705, 16
        %v757 = vor.u32 %v755, %v753
        %v759 = vshll.u32 %v706, 16
        %v761 = vrot.slane %v759, 1
        %v762 = vsel %vm710, %v757, %v761
        %v763 = vshrl.u32 %v706, 16
        %v765 = vor.u32 %v763, %v761
        %v767 = vshll.u32 %v707, 16
        %v769 = vrot.slane %v767, 1
        %v770 = vsel %vm710, %v765, %v769
        %v771 = vshrl.u32 %v707, 16
        %v773 = vor.u32 %v771, %v769
        %v775 = vshll.u32 %v708, 16
        %v777 = vrot.slane %v775, 1
        %v778 = vsel %vm710, %v773, %v777
        %v779 = vshrl.u32 %v708, 16
        %v781 = vor.u32 %v779, %v777
        %v783 = vshll.u32 %v709, 16
        %v785 = vrot.slane %v783, 1
        %v786 = vsel %vm710, %v781, %v785
        %v796 = vunpack.c.l.b16 %v653
        %v797 = vunpack.c.l.b16 %v654
        %v798 = vunpack.c.l.b16 %v655
        %v799 = vunpack.c.l.b16 %v656
        %v800 = vunpack.c.l.b16 %v657
        %v801 = vunpack.c.l.b16 %v658
        %v802 = vunpack.c.l.b16 %v659
        %v803 = vunpack.c.l.b16 %v660
        %v804 = vunpack.c.l.b16 %v661
        %v805 = vpack.c.b16 %v797, %v796
        %v806 = vpack.c.b16 %v799, %v798
        %v807 = vpack.c.b16 %v801, %v800
        %v808 = vpack.c.b16 %v803, %v802
        %v809 = vpack.c.b16 %v804, %v804
        %v815 = vsel %vm442, %v722, 0
        %v818 = vsel %vm442, %v730, 0
        %v821 = vsel %vm442, %v738, 0
        %v824 = vsel %vm442, %v746, 0
        %v827 = vsel %vm442, %v754, 0
        %v830 = vsel %vm442, %v762, 0
        %v833 = vsel %vm442, %v770, 0
        %v836 = vsel %vm442, %v778, 0
        %v839 = vsel %vm442, %v786, 0
        %v842 = vsel %vm470, %v809, 0
        %844 = vmatprep.subr.bf16.mxu0 0
        %845 = vmatpush1.bf16.msra.mxu0 0
        %846 = vmatprep.subr.bf16.mxu0 0
        %847 = vmatpush1.bf16.msra.mxu0 0
        %848 = vmatprep.subr.bf16.mxu0 0
        %849 = vmatpush1.bf16.msra.mxu0 0
        %850 = vmatprep.subr.bf16.mxu0 0
        %851 = vmatpush1.bf16.msra.mxu0 %v842
        %852 = vmatprep.subr.bf16.mxu0 0
        %853 = vmatpush1.bf16.msra.mxu0 %v808
        %854 = vmatprep.subr.bf16.mxu0 0
        %855 = vmatpush1.bf16.msra.mxu0 %v807
        %856 = vmatprep.subr.bf16.mxu0 0
        %857 = vmatpush1.bf16.msra.mxu0 %v806
        %858 = vmatprep.subr.bf16.mxu0 0
        %859 = vmatpush1.bf16.msra.mxu0 %v805
        %860 = vmatprep.subr.bf16.mxu0 0
        %861 = vmatpush2.bf16.msra.mxu0 0
        %862 = vmatprep.subr.bf16.mxu0 0
        %863 = vmatpush2.bf16.msra.mxu0 0
        %864 = vmatprep.subr.bf16.mxu0 0
        %865 = vmatpush2.bf16.msra.mxu0 0
        %866 = vmatprep.subr.bf16.mxu0 0
        %867 = vmatpush2.bf16.msra.mxu0 0
        %868 = vmatprep.subr.bf16.mxu0 0
        %869 = vmatpush2.bf16.msra.mxu0 0
        %870 = vmatprep.subr.bf16.mxu0 0
        %871 = vmatpush2.bf16.msra.mxu0 0
        %872 = vmatprep.subr.bf16.mxu0 0
        %873 = vmatpush2.bf16.msra.mxu0 0
        %874 = vmatprep.subr.bf16.mxu0 0
        %875 = vmatpush2.bf16.msra.mxu0 0
        %876 = vmatprep.mubr.bf16.mxu0 0
        %877 = vmatmul.mubr.bf16.gmra.mxu0 %v815
        %v878 = vpop.f32.mrf.mxu0
        %v879 = vadd.f32 0.0, %v878
        %v880 = vpop.f32.mrf.mxu0
        %v881 = vpop.f32.mrf.mxu0
        %v882 = vadd.f32 0.0, %v881
        %v883 = vpop.f32.mrf.mxu0
        %884 = vmatprep.mubr.bf16.mxu0 0
        %885 = vmatmul.mubr.bf16.gmra.mxu0 %v818
        %v886 = vpop.f32.mrf.mxu0
        %v887 = vadd.f32 0.0, %v886
        %v888 = vpop.f32.mrf.mxu0
        %v889 = vpop.f32.mrf.mxu0
        %v890 = vadd.f32 0.0, %v889
        %v891 = vpop.f32.mrf.mxu0
        %892 = vmatprep.mubr.bf16.mxu0 0
        %893 = vmatmul.mubr.bf16.gmra.mxu0 %v821
        %v894 = vpop.f32.mrf.mxu0
        %v895 = vadd.f32 0.0, %v894
        %v896 = vpop.f32.mrf.mxu0
        %v897 = vpop.f32.mrf.mxu0
        %v898 = vadd.f32 0.0, %v897
        %v899 = vpop.f32.mrf.mxu0
        %900 = vmatprep.mubr.bf16.mxu0 0
        %901 = vmatmul.mubr.bf16.gmra.mxu0 %v824
        %v902 = vpop.f32.mrf.mxu0
        %v903 = vadd.f32 0.0, %v902
        %v904 = vpop.f32.mrf.mxu0
        %v905 = vpop.f32.mrf.mxu0
        %v906 = vadd.f32 0.0, %v905
        %v907 = vpop.f32.mrf.mxu0
        %908 = vmatprep.mubr.bf16.mxu0 0
        %909 = vmatmul.mubr.bf16.gmra.mxu0 %v827
        %v910 = vpop.f32.mrf.mxu0
        %v911 = vadd.f32 0.0, %v910
        %v912 = vpop.f32.mrf.mxu0
        %v913 = vpop.f32.mrf.mxu0
        %v914 = vadd.f32 0.0, %v913
        %v915 = vpop.f32.mrf.mxu0
        %916 = vmatprep.mubr.bf16.mxu0 0
        %917 = vmatmul.mubr.bf16.gmra.mxu0 %v830
        %v918 = vpop.f32.mrf.mxu0
        %v919 = vadd.f32 0.0, %v918
        %v920 = vpop.f32.mrf.mxu0
        %v921 = vpop.f32.mrf.mxu0
        %v922 = vadd.f32 0.0, %v921
        %v923 = vpop.f32.mrf.mxu0
        %924 = vmatprep.mubr.bf16.mxu0 0
        %925 = vmatmul.mubr.bf16.gmra.mxu0 %v833
        %v926 = vpop.f32.mrf.mxu0
        %v927 = vadd.f32 0.0, %v926
        %v928 = vpop.f32.mrf.mxu0
        %v929 = vpop.f32.mrf.mxu0
        %v930 = vadd.f32 0.0, %v929
        %v931 = vpop.f32.mrf.mxu0
        %932 = vmatprep.mubr.bf16.mxu0 0
        %933 = vmatmul.mubr.bf16.gmra.mxu0 %v836
        %v934 = vpop.f32.mrf.mxu0
        %v935 = vadd.f32 0.0, %v934
        %v936 = vpop.f32.mrf.mxu0
        %v937 = vpop.f32.mrf.mxu0
        %v938 = vadd.f32 0.0, %v937
        %v939 = vpop.f32.mrf.mxu0
        %940 = vmatprep.mubr.bf16.mxu0 0
        %941 = vmatmul.mubr.bf16.gmra.mxu0 %v839
        %v942 = vpop.f32.mrf.mxu0
        %v943 = vadd.f32 0.0, %v942
        %v944 = vpop.f32.mrf.mxu0
        %v945 = vpop.f32.mrf.mxu0
        %v946 = vadd.f32 0.0, %v945
        %v947 = vpop.f32.mrf.mxu0
        %948 = vdwg.mxu0
        %v949 = vadd.f32 %v634, %v879
        %v950 = vadd.f32 %v635, %v882
        %v951 = vadd.f32 %v636, %v887
        %v952 = vadd.f32 %v637, %v890
        %v953 = vadd.f32 %v638, %v895
        %v954 = vadd.f32 %v639, %v898
        %v955 = vadd.f32 %v640, %v903
        %v956 = vadd.f32 %v641, %v906
        %v957 = vadd.f32 %v642, %v911
        %v958 = vadd.f32 %v643, %v914
        %v959 = vadd.f32 %v644, %v919
        %v960 = vadd.f32 %v645, %v922
        %v961 = vadd.f32 %v646, %v927
        %v962 = vadd.f32 %v647, %v930
        %v963 = vadd.f32 %v648, %v935
        %v964 = vadd.f32 %v649, %v938
        %v965 = vadd.f32 %v650, %v943
        %v966 = vadd.f32 %v651, %v946
        %967 = vst [vmem:[#allocation2] sm:$0xff] %v949
        %968 = vst [vmem:[#allocation2 + $0x8] sm:$0xff] %v950
        %969 = vst [vmem:[#allocation2 + $0x10] sm:$0xff] %v951
        %970 = vst [vmem:[#allocation2 + $0x18] sm:$0xff] %v952
        %971 = vst [vmem:[#allocation2 + $0x20] sm:$0xff] %v953
        %972 = vst [vmem:[#allocation2 + $0x28] sm:$0xff] %v954
        %973 = vst [vmem:[#allocation2 + $0x30] sm:$0xff] %v955
        %974 = vst [vmem:[#allocation2 + $0x38] sm:$0xff] %v956
        %975 = vst [vmem:[#allocation2 + $0x40] sm:$0xff] %v957
        %976 = vst [vmem:[#allocation2 + $0x48] sm:$0xff] %v958
        %977 = vst [vmem:[#allocation2 + $0x50] sm:$0xff] %v959
        %978 = vst [vmem:[#allocation2 + $0x58] sm:$0xff] %v960
        %979 = vst [vmem:[#allocation2 + $0x60] sm:$0xff] %v961
        %980 = vst [vmem:[#allocation2 + $0x68] sm:$0xff] %v962
        %981 = vst [vmem:[#allocation2 + $0x70] sm:$0xff] %v963
        %982 = vst [vmem:[#allocation2 + $0x78] sm:$0xff] %v964
        %983 = vst [vmem:[#allocation2 + $0x80] sm:$0xff] %v965
        %984 = vst [vmem:[#allocation2 + $0x88] sm:$0xff] %v966
        %v985 = vld [vmem:[%s286] sm:$0xe]
        %v986 = vld [vmem:[%s286 + $0x4] sm:$0xf]
        %v987 = vld [vmem:[%s286 + $0x8] sm:$0xf]
        %v988 = vld [vmem:[%s286 + $0xc] sm:$0xf]
        %v989 = vld [vmem:[%s286 + $0x10] sm:$0xf]
        %v990 = vld [vmem:[%s286 + $0x14] sm:$0xf]
        %v991 = vld [vmem:[%s286 + $0x18] sm:$0xf]
        %v992 = vld [vmem:[%s286 + $0x1c] sm:$0xf]
        %v993 = vld [vmem:[%s286 + $0x20] sm:$0xf]
        %v994 = vld [vmem:[%s286 + $0x24] sm:$0xf]
        %v995 = vld [vmem:[%s286 + $0x28] sm:$0xf]
        %v996 = vld [vmem:[%s286 + $0x2c] sm:$0xf]
        %v997 = vld [vmem:[%s286 + $0x30] sm:$0xf]
        %v998 = vld [vmem:[%s286 + $0x34] sm:$0xf]
        %v999 = vld [vmem:[%s286 + $0x38] sm:$0xf]
        %v1000 = vld [vmem:[%s286 + $0x3c] sm:$0xf]
        %v1001 = vld [vmem:[%s286 + $0x40] sm:$0xf]
        %v1002 = vld [vmem:[%s286 + $0x44] sm:$0xf]
        %v1003 = vld [vmem:[%s286 + $0x48] sm:$0x1]
        %v1004 = vld [vmem:[#allocation2] sm:$0xff]
        %v1005 = vld [vmem:[#allocation2 + $0x8] sm:$0xff]
        %v1006 = vld [vmem:[#allocation2 + $0x10] sm:$0xff]
        %v1007 = vld [vmem:[#allocation2 + $0x18] sm:$0xff]
        %v1008 = vld [vmem:[#allocation2 + $0x20] sm:$0xff]
        %v1009 = vld [vmem:[#allocation2 + $0x28] sm:$0xff]
        %v1010 = vld [vmem:[#allocation2 + $0x30] sm:$0xff]
        %v1011 = vld [vmem:[#allocation2 + $0x38] sm:$0xff]
        %v1012 = vld [vmem:[#allocation2 + $0x40] sm:$0xff]
        %v1013 = vld [vmem:[#allocation2 + $0x48] sm:$0xff]
        %v1014 = vld [vmem:[#allocation2 + $0x50] sm:$0xff]
        %v1015 = vld [vmem:[#allocation2 + $0x58] sm:$0xff]
        %v1016 = vld [vmem:[#allocation2 + $0x60] sm:$0xff]
        %v1017 = vld [vmem:[#allocation2 + $0x68] sm:$0xff]
        %v1018 = vld [vmem:[#allocation2 + $0x70] sm:$0xff]
        %v1019 = vld [vmem:[#allocation2 + $0x78] sm:$0xff]
        %v1020 = vld [vmem:[#allocation2 + $0x80] sm:$0xff]
        %v1021 = vld [vmem:[#allocation2 + $0x88] sm:$0xff]
        %s1022 = scalar_lea.vmem %s1, 72
        %v1023 = vld [vmem:[%s1022] sm:$0xf]
        %v1024 = vld [vmem:[%s1022 + $0x4] sm:$0xf]
        %v1025 = vld [vmem:[%s1022 + $0x8] sm:$0xf]
        %v1026 = vld [vmem:[%s1022 + $0xc] sm:$0xf]
        %v1027 = vld [vmem:[%s1022 + $0x10] sm:$0xf]
        %v1028 = vld [vmem:[%s1022 + $0x14] sm:$0xf]
        %v1029 = vld [vmem:[%s1022 + $0x18] sm:$0xf]
        %v1030 = vld [vmem:[%s1022 + $0x1c] sm:$0xf]
        %v1031 = vld [vmem:[%s1022 + $0x20] sm:$0xf]
        %v1051 = vunpack.c.l.b16 %v985
        %v1052 = vunpack.c.l.b16 %v986
        %v1053 = vunpack.c.l.b16 %v987
        %v1054 = vunpack.c.l.b16 %v988
        %v1055 = vunpack.c.l.b16 %v989
        %v1056 = vunpack.c.l.b16 %v990
        %v1057 = vunpack.c.l.b16 %v991
        %v1058 = vunpack.c.l.b16 %v992
        %v1059 = vunpack.c.l.b16 %v993
        %v1060 = vunpack.c.l.b16 %v994
        %v1061 = vunpack.c.l.b16 %v995
        %v1062 = vunpack.c.l.b16 %v996
        %v1063 = vunpack.c.l.b16 %v997
        %v1064 = vunpack.c.l.b16 %v998
        %v1065 = vunpack.c.l.b16 %v999
        %v1066 = vunpack.c.l.b16 %v1000
        %v1067 = vunpack.c.l.b16 %v1001
        %v1068 = vunpack.c.l.b16 %v1002
        %v1069 = vunpack.c.l.b16 %v1003
        %v1070 = vpack.c.b16 %v1052, %v1051
        %v1071 = vpack.c.b16 %v1054, %v1053
        %v1072 = vpack.c.b16 %v1056, %v1055
        %v1073 = vpack.c.b16 %v1058, %v1057
        %v1074 = vpack.c.b16 %v1060, %v1059
        %v1075 = vpack.c.b16 %v1062, %v1061
        %v1076 = vpack.c.b16 %v1064, %v1063
        %v1077 = vpack.c.b16 %v1066, %v1065
        %v1078 = vpack.c.b16 %v1068, %v1067
        %v1079 = vpack.c.b16 %v1069, %v1069
        %vm1080 = vcmask 1046528
        %v1081 = vrot.slane %v1070, 1
        %v1082 = vrot.slane %v1071, 1
        %v1083 = vsel %vm1080, %v1081, %v1082
        %v1084 = vrot.slane %v1072, 1
        %v1085 = vsel %vm1080, %v1082, %v1084
        %v1086 = vrot.slane %v1073, 1
        %v1087 = vsel %vm1080, %v1084, %v1086
        %v1088 = vrot.slane %v1074, 1
        %v1089 = vsel %vm1080, %v1086, %v1088
        %v1090 = vrot.slane %v1075, 1
        %v1091 = vsel %vm1080, %v1088, %v1090
        %v1092 = vrot.slane %v1076, 1
        %v1093 = vsel %vm1080, %v1090, %v1092
        %v1094 = vrot.slane %v1077, 1
        %v1095 = vsel %vm1080, %v1092, %v1094
        %v1096 = vrot.slane %v1078, 1
        %v1097 = vsel %vm1080, %v1094, %v1096
        %v1098 = vrot.slane %v1079, 1
        %v1099 = vsel %vm1080, %v1096, %v1098
        %v1109 = vunpack.c.l.b16 %v1023
        %v1110 = vunpack.c.l.b16 %v1024
        %v1111 = vunpack.c.l.b16 %v1025
        %v1112 = vunpack.c.l.b16 %v1026
        %v1113 = vunpack.c.l.b16 %v1027
        %v1114 = vunpack.c.l.b16 %v1028
        %v1115 = vunpack.c.l.b16 %v1029
        %v1116 = vunpack.c.l.b16 %v1030
        %v1117 = vunpack.c.l.b16 %v1031
        %v1118 = vpack.c.b16 %v1110, %v1109
        %v1119 = vpack.c.b16 %v1112, %v1111
        %v1120 = vpack.c.b16 %v1114, %v1113
        %v1121 = vpack.c.b16 %v1116, %v1115
        %v1122 = vpack.c.b16 %v1117, %v1117
        %v1128 = vsel %vm442, %v1083, 0
        %v1131 = vsel %vm442, %v1085, 0
        %v1134 = vsel %vm442, %v1087, 0
        %v1137 = vsel %vm442, %v1089, 0
        %v1140 = vsel %vm442, %v1091, 0
        %v1143 = vsel %vm442, %v1093, 0
        %v1146 = vsel %vm442, %v1095, 0
        %v1149 = vsel %vm442, %v1097, 0
        %v1152 = vsel %vm442, %v1099, 0
        %v1155 = vsel %vm470, %v1122, 0
        %1157 = vmatprep.subr.bf16.mxu0 0
        %1158 = vmatpush1.bf16.msra.mxu0 0
        %1159 = vmatprep.subr.bf16.mxu0 0
        %1160 = vmatpush1.bf16.msra.mxu0 0
        %1161 = vmatprep.subr.bf16.mxu0 0
        %1162 = vmatpush1.bf16.msra.mxu0 0
        %1163 = vmatprep.subr.bf16.mxu0 0
        %1164 = vmatpush1.bf16.msra.mxu0 %v1155
        %1165 = vmatprep.subr.bf16.mxu0 0
        %1166 = vmatpush1.bf16.msra.mxu0 %v1121
        %1167 = vmatprep.subr.bf16.mxu0 0
        %1168 = vmatpush1.bf16.msra.mxu0 %v1120
        %1169 = vmatprep.subr.bf16.mxu0 0
        %1170 = vmatpush1.bf16.msra.mxu0 %v1119
        %1171 = vmatprep.subr.bf16.mxu0 0
        %1172 = vmatpush1.bf16.msra.mxu0 %v1118
        %1173 = vmatprep.subr.bf16.mxu0 0
        %1174 = vmatpush2.bf16.msra.mxu0 0
        %1175 = vmatprep.subr.bf16.mxu0 0
        %1176 = vmatpush2.bf16.msra.mxu0 0
        %1177 = vmatprep.subr.bf16.mxu0 0
        %1178 = vmatpush2.bf16.msra.mxu0 0
        %1179 = vmatprep.subr.bf16.mxu0 0
        %1180 = vmatpush2.bf16.msra.mxu0 0
        %1181 = vmatprep.subr.bf16.mxu0 0
        %1182 = vmatpush2.bf16.msra.mxu0 0
        %1183 = vmatprep.subr.bf16.mxu0 0
        %1184 = vmatpush2.bf16.msra.mxu0 0
        %1185 = vmatprep.subr.bf16.mxu0 0
        %1186 = vmatpush2.bf16.msra.mxu0 0
        %1187 = vmatprep.subr.bf16.mxu0 0
        %1188 = vmatpush2.bf16.msra.mxu0 0
        %1189 = vmatprep.mubr.bf16.mxu0 0
        %1190 = vmatmul.mubr.bf16.gmra.mxu0 %v1128
        %v1191 = vpop.f32.mrf.mxu0
        %v1192 = vadd.f32 0.0, %v1191
        %v1193 = vpop.f32.mrf.mxu0
        %v1194 = vpop.f32.mrf.mxu0
        %v1195 = vadd.f32 0.0, %v1194
        %v1196 = vpop.f32.mrf.mxu0
        %1197 = vmatprep.mubr.bf16.mxu0 0
        %1198 = vmatmul.mubr.bf16.gmra.mxu0 %v1131
        %v1199 = vpop.f32.mrf.mxu0
        %v1200 = vadd.f32 0.0, %v1199
        %v1201 = vpop.f32.mrf.mxu0
        %v1202 = vpop.f32.mrf.mxu0
        %v1203 = vadd.f32 0.0, %v1202
        %v1204 = vpop.f32.mrf.mxu0
        %1205 = vmatprep.mubr.bf16.mxu0 0
        %1206 = vmatmul.mubr.bf16.gmra.mxu0 %v1134
        %v1207 = vpop.f32.mrf.mxu0
        %v1208 = vadd.f32 0.0, %v1207
        %v1209 = vpop.f32.mrf.mxu0
        %v1210 = vpop.f32.mrf.mxu0
        %v1211 = vadd.f32 0.0, %v1210
        %v1212 = vpop.f32.mrf.mxu0
        %1213 = vmatprep.mubr.bf16.mxu0 0
        %1214 = vmatmul.mubr.bf16.gmra.mxu0 %v1137
        %v1215 = vpop.f32.mrf.mxu0
        %v1216 = vadd.f32 0.0, %v1215
        %v1217 = vpop.f32.mrf.mxu0
        %v1218 = vpop.f32.mrf.mxu0
        %v1219 = vadd.f32 0.0, %v1218
        %v1220 = vpop.f32.mrf.mxu0
        %1221 = vmatprep.mubr.bf16.mxu0 0
        %1222 = vmatmul.mubr.bf16.gmra.mxu0 %v1140
        %v1223 = vpop.f32.mrf.mxu0
        %v1224 = vadd.f32 0.0, %v1223
        %v1225 = vpop.f32.mrf.mxu0
        %v1226 = vpop.f32.mrf.mxu0
        %v1227 = vadd.f32 0.0, %v1226
        %v1228 = vpop.f32.mrf.mxu0
        %1229 = vmatprep.mubr.bf16.mxu0 0
        %1230 = vmatmul.mubr.bf16.gmra.mxu0 %v1143
        %v1231 = vpop.f32.mrf.mxu0
        %v1232 = vadd.f32 0.0, %v1231
        %v1233 = vpop.f32.mrf.mxu0
        %v1234 = vpop.f32.mrf.mxu0
        %v1235 = vadd.f32 0.0, %v1234
        %v1236 = vpop.f32.mrf.mxu0
        %1237 = vmatprep.mubr.bf16.mxu0 0
        %1238 = vmatmul.mubr.bf16.gmra.mxu0 %v1146
        %v1239 = vpop.f32.mrf.mxu0
        %v1240 = vadd.f32 0.0, %v1239
        %v1241 = vpop.f32.mrf.mxu0
        %v1242 = vpop.f32.mrf.mxu0
        %v1243 = vadd.f32 0.0, %v1242
        %v1244 = vpop.f32.mrf.mxu0
        %1245 = vmatprep.mubr.bf16.mxu0 0
        %1246 = vmatmul.mubr.bf16.gmra.mxu0 %v1149
        %v1247 = vpop.f32.mrf.mxu0
        %v1248 = vadd.f32 0.0, %v1247
        %v1249 = vpop.f32.mrf.mxu0
        %v1250 = vpop.f32.mrf.mxu0
        %v1251 = vadd.f32 0.0, %v1250
        %v1252 = vpop.f32.mrf.mxu0
        %1253 = vmatprep.mubr.bf16.mxu0 0
        %1254 = vmatmul.mubr.bf16.gmra.mxu0 %v1152
        %v1255 = vpop.f32.mrf.mxu0
        %v1256 = vadd.f32 0.0, %v1255
        %v1257 = vpop.f32.mrf.mxu0
        %v1258 = vpop.f32.mrf.mxu0
        %v1259 = vadd.f32 0.0, %v1258
        %v1260 = vpop.f32.mrf.mxu0
        %1261 = vdwg.mxu0
        %v1262 = vadd.f32 %v1004, %v1192
        %v1263 = vadd.f32 %v1005, %v1195
        %v1264 = vadd.f32 %v1006, %v1200
        %v1265 = vadd.f32 %v1007, %v1203
        %v1266 = vadd.f32 %v1008, %v1208
        %v1267 = vadd.f32 %v1009, %v1211
        %v1268 = vadd.f32 %v1010, %v1216
        %v1269 = vadd.f32 %v1011, %v1219
        %v1270 = vadd.f32 %v1012, %v1224
        %v1271 = vadd.f32 %v1013, %v1227
        %v1272 = vadd.f32 %v1014, %v1232
        %v1273 = vadd.f32 %v1015, %v1235
        %v1274 = vadd.f32 %v1016, %v1240
        %v1275 = vadd.f32 %v1017, %v1243
        %v1276 = vadd.f32 %v1018, %v1248
        %v1277 = vadd.f32 %v1019, %v1251
        %v1278 = vadd.f32 %v1020, %v1256
        %v1279 = vadd.f32 %v1021, %v1259
        %1280 = vst [vmem:[#allocation2] sm:$0xff] %v1262
        %1281 = vst [vmem:[#allocation2 + $0x8] sm:$0xff] %v1263
        %1282 = vst [vmem:[#allocation2 + $0x10] sm:$0xff] %v1264
        %1283 = vst [vmem:[#allocation2 + $0x18] sm:$0xff] %v1265
        %1284 = vst [vmem:[#allocation2 + $0x20] sm:$0xff] %v1266
        %1285 = vst [vmem:[#allocation2 + $0x28] sm:$0xff] %v1267
        %1286 = vst [vmem:[#allocation2 + $0x30] sm:$0xff] %v1268
        %1287 = vst [vmem:[#allocation2 + $0x38] sm:$0xff] %v1269
        %1288 = vst [vmem:[#allocation2 + $0x40] sm:$0xff] %v1270
        %1289 = vst [vmem:[#allocation2 + $0x48] sm:$0xff] %v1271
        %1290 = vst [vmem:[#allocation2 + $0x50] sm:$0xff] %v1272
        %1291 = vst [vmem:[#allocation2 + $0x58] sm:$0xff] %v1273
        %1292 = vst [vmem:[#allocation2 + $0x60] sm:$0xff] %v1274
        %1293 = vst [vmem:[#allocation2 + $0x68] sm:$0xff] %v1275
        %1294 = vst [vmem:[#allocation2 + $0x70] sm:$0xff] %v1276
        %1295 = vst [vmem:[#allocation2 + $0x78] sm:$0xff] %v1277
        %1296 = vst [vmem:[#allocation2 + $0x80] sm:$0xff] %v1278
        %1297 = vst [vmem:[#allocation2 + $0x88] sm:$0xff] %v1279
        %v1298 = vld [vmem:[%s286 + $0x8] sm:$0xe]
        %v1299 = vld [vmem:[%s286 + $0xc] sm:$0xf]
        %v1300 = vld [vmem:[%s286 + $0x10] sm:$0xf]
        %v1301 = vld [vmem:[%s286 + $0x14] sm:$0xf]
        %v1302 = vld [vmem:[%s286 + $0x18] sm:$0xf]
        %v1303 = vld [vmem:[%s286 + $0x1c] sm:$0xf]
        %v1304 = vld [vmem:[%s286 + $0x20] sm:$0xf]
        %v1305 = vld [vmem:[%s286 + $0x24] sm:$0xf]
        %v1306 = vld [vmem:[%s286 + $0x28] sm:$0xf]
        %v1307 = vld [vmem:[%s286 + $0x2c] sm:$0xf]
        %v1308 = vld [vmem:[%s286 + $0x30] sm:$0xf]
        %v1309 = vld [vmem:[%s286 + $0x34] sm:$0xf]
        %v1310 = vld [vmem:[%s286 + $0x38] sm:$0xf]
        %v1311 = vld [vmem:[%s286 + $0x3c] sm:$0xf]
        %v1312 = vld [vmem:[%s286 + $0x40] sm:$0xf]
        %v1313 = vld [vmem:[%s286 + $0x44] sm:$0xf]
        %v1314 = vld [vmem:[%s286 + $0x48] sm:$0xf]
        %v1315 = vld [vmem:[%s286 + $0x4c] sm:$0xf]
        %v1316 = vld [vmem:[%s286 + $0x50] sm:$0x1]
        %v1317 = vld [vmem:[#allocation2] sm:$0xff]
        %v1318 = vld [vmem:[#allocation2 + $0x8] sm:$0xff]
        %v1319 = vld [vmem:[#allocation2 + $0x10] sm:$0xff]
        %v1320 = vld [vmem:[#allocation2 + $0x18] sm:$0xff]
        %v1321 = vld [vmem:[#allocation2 + $0x20] sm:$0xff]
        %v1322 = vld [vmem:[#allocation2 + $0x28] sm:$0xff]
        %v1323 = vld [vmem:[#allocation2 + $0x30] sm:$0xff]
        %v1324 = vld [vmem:[#allocation2 + $0x38] sm:$0xff]
        %v1325 = vld [vmem:[#allocation2 + $0x40] sm:$0xff]
        %v1326 = vld [vmem:[#allocation2 + $0x48] sm:$0xff]
        %v1327 = vld [vmem:[#allocation2 + $0x50] sm:$0xff]
        %v1328 = vld [vmem:[#allocation2 + $0x58] sm:$0xff]
        %v1329 = vld [vmem:[#allocation2 + $0x60] sm:$0xff]
        %v1330 = vld [vmem:[#allocation2 + $0x68] sm:$0xff]
        %v1331 = vld [vmem:[#allocation2 + $0x70] sm:$0xff]
        %v1332 = vld [vmem:[#allocation2 + $0x78] sm:$0xff]
        %v1333 = vld [vmem:[#allocation2 + $0x80] sm:$0xff]
        %v1334 = vld [vmem:[#allocation2 + $0x88] sm:$0xff]
        %s1335 = scalar_lea.vmem %s1, 108
        %v1336 = vld [vmem:[%s1335] sm:$0xf]
        %v1337 = vld [vmem:[%s1335 + $0x4] sm:$0xf]
        %v1338 = vld [vmem:[%s1335 + $0x8] sm:$0xf]
        %v1339 = vld [vmem:[%s1335 + $0xc] sm:$0xf]
        %v1340 = vld [vmem:[%s1335 + $0x10] sm:$0xf]
        %v1341 = vld [vmem:[%s1335 + $0x14] sm:$0xf]
        %v1342 = vld [vmem:[%s1335 + $0x18] sm:$0xf]
        %v1343 = vld [vmem:[%s1335 + $0x1c] sm:$0xf]
        %v1344 = vld [vmem:[%s1335 + $0x20] sm:$0xf]
        %v1364 = vunpack.c.l.b16 %v1298
        %v1365 = vunpack.c.l.b16 %v1299
        %v1366 = vunpack.c.l.b16 %v1300
        %v1367 = vunpack.c.l.b16 %v1301
        %v1368 = vunpack.c.l.b16 %v1302
        %v1369 = vunpack.c.l.b16 %v1303
        %v1370 = vunpack.c.l.b16 %v1304
        %v1371 = vunpack.c.l.b16 %v1305
        %v1372 = vunpack.c.l.b16 %v1306
        %v1373 = vunpack.c.l.b16 %v1307
        %v1374 = vunpack.c.l.b16 %v1308
        %v1375 = vunpack.c.l.b16 %v1309
        %v1376 = vunpack.c.l.b16 %v1310
        %v1377 = vunpack.c.l.b16 %v1311
        %v1378 = vunpack.c.l.b16 %v1312
        %v1379 = vunpack.c.l.b16 %v1313
        %v1380 = vunpack.c.l.b16 %v1314
        %v1381 = vunpack.c.l.b16 %v1315
        %v1382 = vunpack.c.l.b16 %v1316
        %v1383 = vpack.c.b16 %v1365, %v1364
        %v1384 = vpack.c.b16 %v1367, %v1366
        %v1385 = vpack.c.b16 %v1369, %v1368
        %v1386 = vpack.c.b16 %v1371, %v1370
        %v1387 = vpack.c.b16 %v1373, %v1372
        %v1388 = vpack.c.b16 %v1375, %v1374
        %v1389 = vpack.c.b16 %v1377, %v1376
        %v1390 = vpack.c.b16 %v1379, %v1378
        %v1391 = vpack.c.b16 %v1381, %v1380
        %v1392 = vpack.c.b16 %v1382, %v1382
        %v1393 = vrot.slane %v1383, 1
        %v1394 = vrot.slane %v1384, 1
        %v1395 = vsel %vm1080, %v1393, %v1394
        %v1396 = vrot.slane %v1385, 1
        %v1397 = vsel %vm1080, %v1394, %v1396
        %v1398 = vrot.slane %v1386, 1
        %v1399 = vsel %vm1080, %v1396, %v1398
        %v1400 = vrot.slane %v1387, 1
        %v1401 = vsel %vm1080, %v1398, %v1400
        %v1402 = vrot.slane %v1388, 1
        %v1403 = vsel %vm1080, %v1400, %v1402
        %v1404 = vrot.slane %v1389, 1
        %v1405 = vsel %vm1080, %v1402, %v1404
        %v1406 = vrot.slane %v1390, 1
        %v1407 = vsel %vm1080, %v1404, %v1406
        %v1408 = vrot.slane %v1391, 1
        %v1409 = vsel %vm1080, %v1406, %v1408
        %v1410 = vrot.slane %v1392, 1
        %v1411 = vsel %vm1080, %v1408, %v1410
        %v1421 = vunpack.c.l.b16 %v1336
        %v1422 = vunpack.c.l.b16 %v1337
        %v1423 = vunpack.c.l.b16 %v1338
        %v1424 = vunpack.c.l.b16 %v1339
        %v1425 = vunpack.c.l.b16 %v1340
        %v1426 = vunpack.c.l.b16 %v1341
        %v1427 = vunpack.c.l.b16 %v1342
        %v1428 = vunpack.c.l.b16 %v1343
        %v1429 = vunpack.c.l.b16 %v1344
        %v1430 = vpack.c.b16 %v1422, %v1421
        %v1431 = vpack.c.b16 %v1424, %v1423
        %v1432 = vpack.c.b16 %v1426, %v1425
        %v1433 = vpack.c.b16 %v1428, %v1427
        %v1434 = vpack.c.b16 %v1429, %v1429
        %v1440 = vsel %vm442, %v1395, 0
        %v1443 = vsel %vm442, %v1397, 0
        %v1446 = vsel %vm442, %v1399, 0
        %v1449 = vsel %vm442, %v1401, 0
        %v1452 = vsel %vm442, %v1403, 0
        %v1455 = vsel %vm442, %v1405, 0
        %v1458 = vsel %vm442, %v1407, 0
        %v1461 = vsel %vm442, %v1409, 0
        %v1464 = vsel %vm442, %v1411, 0
        %v1467 = vsel %vm470, %v1434, 0
        %1469 = vmatprep.subr.bf16.mxu0 0
        %1470 = vmatpush1.bf16.msra.mxu0 0
        %1471 = vmatprep.subr.bf16.mxu0 0
        %1472 = vmatpush1.bf16.msra.mxu0 0
        %1473 = vmatprep.subr.bf16.mxu0 0
        %1474 = vmatpush1.bf16.msra.mxu0 0
        %1475 = vmatprep.subr.bf16.mxu0 0
        %1476 = vmatpush1.bf16.msra.mxu0 %v1467
        %1477 = vmatprep.subr.bf16.mxu0 0
        %1478 = vmatpush1.bf16.msra.mxu0 %v1433
        %1479 = vmatprep.subr.bf16.mxu0 0
        %1480 = vmatpush1.bf16.msra.mxu0 %v1432
        %1481 = vmatprep.subr.bf16.mxu0 0
        %1482 = vmatpush1.bf16.msra.mxu0 %v1431
        %1483 = vmatprep.subr.bf16.mxu0 0
        %1484 = vmatpush1.bf16.msra.mxu0 %v1430
        %1485 = vmatprep.subr.bf16.mxu0 0
        %1486 = vmatpush2.bf16.msra.mxu0 0
        %1487 = vmatprep.subr.bf16.mxu0 0
        %1488 = vmatpush2.bf16.msra.mxu0 0
        %1489 = vmatprep.subr.bf16.mxu0 0
        %1490 = vmatpush2.bf16.msra.mxu0 0
        %1491 = vmatprep.subr.bf16.mxu0 0
        %1492 = vmatpush2.bf16.msra.mxu0 0
        %1493 = vmatprep.subr.bf16.mxu0 0
        %1494 = vmatpush2.bf16.msra.mxu0 0
        %1495 = vmatprep.subr.bf16.mxu0 0
        %1496 = vmatpush2.bf16.msra.mxu0 0
        %1497 = vmatprep.subr.bf16.mxu0 0
        %1498 = vmatpush2.bf16.msra.mxu0 0
        %1499 = vmatprep.subr.bf16.mxu0 0
        %1500 = vmatpush2.bf16.msra.mxu0 0
        %1501 = vmatprep.mubr.bf16.mxu0 0
        %1502 = vmatmul.mubr.bf16.gmra.mxu0 %v1440
        %v1503 = vpop.f32.mrf.mxu0
        %v1504 = vadd.f32 0.0, %v1503
        %v1505 = vpop.f32.mrf.mxu0
        %v1506 = vpop.f32.mrf.mxu0
        %v1507 = vadd.f32 0.0, %v1506
        %v1508 = vpop.f32.mrf.mxu0
        %1509 = vmatprep.mubr.bf16.mxu0 0
        %1510 = vmatmul.mubr.bf16.gmra.mxu0 %v1443
        %v1511 = vpop.f32.mrf.mxu0
        %v1512 = vadd.f32 0.0, %v1511
        %v1513 = vpop.f32.mrf.mxu0
        %v1514 = vpop.f32.mrf.mxu0
        %v1515 = vadd.f32 0.0, %v1514
        %v1516 = vpop.f32.mrf.mxu0
        %1517 = vmatprep.mubr.bf16.mxu0 0
        %1518 = vmatmul.mubr.bf16.gmra.mxu0 %v1446
        %v1519 = vpop.f32.mrf.mxu0
        %v1520 = vadd.f32 0.0, %v1519
        %v1521 = vpop.f32.mrf.mxu0
        %v1522 = vpop.f32.mrf.mxu0
        %v1523 = vadd.f32 0.0, %v1522
        %v1524 = vpop.f32.mrf.mxu0
        %1525 = vmatprep.mubr.bf16.mxu0 0
        %1526 = vmatmul.mubr.bf16.gmra.mxu0 %v1449
        %v1527 = vpop.f32.mrf.mxu0
        %v1528 = vadd.f32 0.0, %v1527
        %v1529 = vpop.f32.mrf.mxu0
        %v1530 = vpop.f32.mrf.mxu0
        %v1531 = vadd.f32 0.0, %v1530
        %v1532 = vpop.f32.mrf.mxu0
        %1533 = vmatprep.mubr.bf16.mxu0 0
        %1534 = vmatmul.mubr.bf16.gmra.mxu0 %v1452
        %v1535 = vpop.f32.mrf.mxu0
        %v1536 = vadd.f32 0.0, %v1535
        %v1537 = vpop.f32.mrf.mxu0
        %v1538 = vpop.f32.mrf.mxu0
        %v1539 = vadd.f32 0.0, %v1538
        %v1540 = vpop.f32.mrf.mxu0
        %1541 = vmatprep.mubr.bf16.mxu0 0
        %1542 = vmatmul.mubr.bf16.gmra.mxu0 %v1455
        %v1543 = vpop.f32.mrf.mxu0
        %v1544 = vadd.f32 0.0, %v1543
        %v1545 = vpop.f32.mrf.mxu0
        %v1546 = vpop.f32.mrf.mxu0
        %v1547 = vadd.f32 0.0, %v1546
        %v1548 = vpop.f32.mrf.mxu0
        %1549 = vmatprep.mubr.bf16.mxu0 0
        %1550 = vmatmul.mubr.bf16.gmra.mxu0 %v1458
        %v1551 = vpop.f32.mrf.mxu0
        %v1552 = vadd.f32 0.0, %v1551
        %v1553 = vpop.f32.mrf.mxu0
        %v1554 = vpop.f32.mrf.mxu0
        %v1555 = vadd.f32 0.0, %v1554
        %v1556 = vpop.f32.mrf.mxu0
        %1557 = vmatprep.mubr.bf16.mxu0 0
        %1558 = vmatmul.mubr.bf16.gmra.mxu0 %v1461
        %v1559 = vpop.f32.mrf.mxu0
        %v1560 = vadd.f32 0.0, %v1559
        %v1561 = vpop.f32.mrf.mxu0
        %v1562 = vpop.f32.mrf.mxu0
        %v1563 = vadd.f32 0.0, %v1562
        %v1564 = vpop.f32.mrf.mxu0
        %1565 = vmatprep.mubr.bf16.mxu0 0
        %1566 = vmatmul.mubr.bf16.gmra.mxu0 %v1464
        %v1567 = vpop.f32.mrf.mxu0
        %v1568 = vadd.f32 0.0, %v1567
        %v1569 = vpop.f32.mrf.mxu0
        %v1570 = vpop.f32.mrf.mxu0
        %v1571 = vadd.f32 0.0, %v1570
        %v1572 = vpop.f32.mrf.mxu0
        %1573 = vdwg.mxu0
        %v1574 = vadd.f32 %v1317, %v1504
        %v1575 = vadd.f32 %v1318, %v1507
        %v1576 = vadd.f32 %v1319, %v1512
        %v1577 = vadd.f32 %v1320, %v1515
        %v1578 = vadd.f32 %v1321, %v1520
        %v1579 = vadd.f32 %v1322, %v1523
        %v1580 = vadd.f32 %v1323, %v1528
        %v1581 = vadd.f32 %v1324, %v1531
        %v1582 = vadd.f32 %v1325, %v1536
        %v1583 = vadd.f32 %v1326, %v1539
        %v1584 = vadd.f32 %v1327, %v1544
        %v1585 = vadd.f32 %v1328, %v1547
        %v1586 = vadd.f32 %v1329, %v1552
        %v1587 = vadd.f32 %v1330, %v1555
        %v1588 = vadd.f32 %v1331, %v1560
        %v1589 = vadd.f32 %v1332, %v1563
        %v1590 = vadd.f32 %v1333, %v1568
        %v1591 = vadd.f32 %v1334, %v1571
        %1592 = vst [vmem:[#allocation2] sm:$0xff] %v1574
        %1593 = vst [vmem:[#allocation2 + $0x8] sm:$0xff] %v1575
        %1594 = vst [vmem:[#allocation2 + $0x10] sm:$0xff] %v1576
        %1595 = vst [vmem:[#allocation2 + $0x18] sm:$0xff] %v1577
        %1596 = vst [vmem:[#allocation2 + $0x20] sm:$0xff] %v1578
        %1597 = vst [vmem:[#allocation2 + $0x28] sm:$0xff] %v1579
        %1598 = vst [vmem:[#allocation2 + $0x30] sm:$0xff] %v1580
        %1599 = vst [vmem:[#allocation2 + $0x38] sm:$0xff] %v1581
        %1600 = vst [vmem:[#allocation2 + $0x40] sm:$0xff] %v1582
        %1601 = vst [vmem:[#allocation2 + $0x48] sm:$0xff] %v1583
        %1602 = vst [vmem:[#allocation2 + $0x50] sm:$0xff] %v1584
        %1603 = vst [vmem:[#allocation2 + $0x58] sm:$0xff] %v1585
        %1604 = vst [vmem:[#allocation2 + $0x60] sm:$0xff] %v1586
        %1605 = vst [vmem:[#allocation2 + $0x68] sm:$0xff] %v1587
        %1606 = vst [vmem:[#allocation2 + $0x70] sm:$0xff] %v1588
        %1607 = vst [vmem:[#allocation2 + $0x78] sm:$0xff] %v1589
        %1608 = vst [vmem:[#allocation2 + $0x80] sm:$0xff] %v1590
        %1609 = vst [vmem:[#allocation2 + $0x88] sm:$0xff] %v1591
        %v1610 = vld [vmem:[%s286 + $0x8] sm:$0xe]
        %v1611 = vld [vmem:[%s286 + $0xc] sm:$0xf]
        %v1612 = vld [vmem:[%s286 + $0x10] sm:$0xf]
        %v1613 = vld [vmem:[%s286 + $0x14] sm:$0xf]
        %v1614 = vld [vmem:[%s286 + $0x18] sm:$0xf]
        %v1615 = vld [vmem:[%s286 + $0x1c] sm:$0xf]
        %v1616 = vld [vmem:[%s286 + $0x20] sm:$0xf]
        %v1617 = vld [vmem:[%s286 + $0x24] sm:$0xf]
        %v1618 = vld [vmem:[%s286 + $0x28] sm:$0xf]
        %v1619 = vld [vmem:[%s286 + $0x2c] sm:$0xf]
        %v1620 = vld [vmem:[%s286 + $0x30] sm:$0xf]
        %v1621 = vld [vmem:[%s286 + $0x34] sm:$0xf]
        %v1622 = vld [vmem:[%s286 + $0x38] sm:$0xf]
        %v1623 = vld [vmem:[%s286 + $0x3c] sm:$0xf]
        %v1624 = vld [vmem:[%s286 + $0x40] sm:$0xf]
        %v1625 = vld [vmem:[%s286 + $0x44] sm:$0xf]
        %v1626 = vld [vmem:[%s286 + $0x48] sm:$0xf]
        %v1627 = vld [vmem:[%s286 + $0x4c] sm:$0xf]
        %v1628 = vld [vmem:[%s286 + $0x50] sm:$0x3]
        %v1629 = vld [vmem:[#allocation2] sm:$0xff]
        %v1630 = vld [vmem:[#allocation2 + $0x8] sm:$0xff]
        %v1631 = vld [vmem:[#allocation2 + $0x10] sm:$0xff]
        %v1632 = vld [vmem:[#allocation2 + $0x18] sm:$0xff]
        %v1633 = vld [vmem:[#allocation2 + $0x20] sm:$0xff]
        %v1634 = vld [vmem:[#allocation2 + $0x28] sm:$0xff]
        %v1635 = vld [vmem:[#allocation2 + $0x30] sm:$0xff]
        %v1636 = vld [vmem:[#allocation2 + $0x38] sm:$0xff]
        %v1637 = vld [vmem:[#allocation2 + $0x40] sm:$0xff]
        %v1638 = vld [vmem:[#allocation2 + $0x48] sm:$0xff]
        %v1639 = vld [vmem:[#allocation2 + $0x50] sm:$0xff]
        %v1640 = vld [vmem:[#allocation2 + $0x58] sm:$0xff]
        %v1641 = vld [vmem:[#allocation2 + $0x60] sm:$0xff]
        %v1642 = vld [vmem:[#allocation2 + $0x68] sm:$0xff]
        %v1643 = vld [vmem:[#allocation2 + $0x70] sm:$0xff]
        %v1644 = vld [vmem:[#allocation2 + $0x78] sm:$0xff]
        %v1645 = vld [vmem:[#allocation2 + $0x80] sm:$0xff]
        %v1646 = vld [vmem:[#allocation2 + $0x88] sm:$0xff]
        %s1647 = scalar_lea.vmem %s1, 144
        %v1648 = vld [vmem:[%s1647] sm:$0xf]
        %v1649 = vld [vmem:[%s1647 + $0x4] sm:$0xf]
        %v1650 = vld [vmem:[%s1647 + $0x8] sm:$0xf]
        %v1651 = vld [vmem:[%s1647 + $0xc] sm:$0xf]
        %v1652 = vld [vmem:[%s1647 + $0x10] sm:$0xf]
        %v1653 = vld [vmem:[%s1647 + $0x14] sm:$0xf]
        %v1654 = vld [vmem:[%s1647 + $0x18] sm:$0xf]
        %v1655 = vld [vmem:[%s1647 + $0x1c] sm:$0xf]
        %v1656 = vld [vmem:[%s1647 + $0x20] sm:$0xf]
        %v1676 = vunpack.c.l.b16 %v1610
        %v1677 = vunpack.c.l.b16 %v1611
        %v1678 = vunpack.c.l.b16 %v1612
        %v1679 = vunpack.c.l.b16 %v1613
        %v1680 = vunpack.c.l.b16 %v1614
        %v1681 = vunpack.c.l.b16 %v1615
        %v1682 = vunpack.c.l.b16 %v1616
        %v1683 = vunpack.c.l.b16 %v1617
        %v1684 = vunpack.c.l.b16 %v1618
        %v1685 = vunpack.c.l.b16 %v1619
        %v1686 = vunpack.c.l.b16 %v1620
        %v1687 = vunpack.c.l.b16 %v1621
        %v1688 = vunpack.c.l.b16 %v1622
        %v1689 = vunpack.c.l.b16 %v1623
        %v1690 = vunpack.c.l.b16 %v1624
        %v1691 = vunpack.c.l.b16 %v1625
        %v1692 = vunpack.c.l.b16 %v1626
        %v1693 = vunpack.c.l.b16 %v1627
        %v1694 = vunpack.c.l.b16 %v1628
        %v1695 = vpack.c.b16 %v1677, %v1676
        %v1696 = vpack.c.b16 %v1679, %v1678
        %v1697 = vpack.c.b16 %v1681, %v1680
        %v1698 = vpack.c.b16 %v1683, %v1682
        %v1699 = vpack.c.b16 %v1685, %v1684
        %v1700 = vpack.c.b16 %v1687, %v1686
        %v1701 = vpack.c.b16 %v1689, %v1688
        %v1702 = vpack.c.b16 %v1691, %v1690
        %v1703 = vpack.c.b16 %v1693, %v1692
        %v1704 = vpack.c.b16 %v1694, %v1694
        %vm1705 = vsmask.f32 6400
        %v1707 = vshrl.u32 %v1695, 16
        %v1709 = vrot.slane %v1707, 1
        %v1710 = vshll.u32 %v1695, 16
        %v1712 = vrot.slane %v1710, 2
        %v1713 = vor.u32 %v1709, %v1712
        %v1715 = vshrl.u32 %v1696, 16
        %v1717 = vrot.slane %v1715, 1
        %v1718 = vshll.u32 %v1696, 16
        %v1720 = vrot.slane %v1718, 2
        %v1721 = vor.u32 %v1717, %v1720
        %v1722 = vsel %vm1705, %v1713, %v1721
        %v1724 = vshrl.u32 %v1697, 16
        %v1726 = vrot.slane %v1724, 1
        %v1727 = vshll.u32 %v1697, 16
        %v1729 = vrot.slane %v1727, 2
        %v1730 = vor.u32 %v1726, %v1729
        %v1731 = vsel %vm1705, %v1721, %v1730
        %v1733 = vshrl.u32 %v1698, 16
        %v1735 = vrot.slane %v1733, 1
        %v1736 = vshll.u32 %v1698, 16
        %v1738 = vrot.slane %v1736, 2
        %v1739 = vor.u32 %v1735, %v1738
        %v1740 = vsel %vm1705, %v1730, %v1739
        %v1742 = vshrl.u32 %v1699, 16
        %v1744 = vrot.slane %v1742, 1
        %v1745 = vshll.u32 %v1699, 16
        %v1747 = vrot.slane %v1745, 2
        %v1748 = vor.u32 %v1744, %v1747
        %v1749 = vsel %vm1705, %v1739, %v1748
        %v1751 = vshrl.u32 %v1700, 16
        %v1753 = vrot.slane %v1751, 1
        %v1754 = vshll.u32 %v1700, 16
        %v1756 = vrot.slane %v1754, 2
        %v1757 = vor.u32 %v1753, %v1756
        %v1758 = vsel %vm1705, %v1748, %v1757
        %v1760 = vshrl.u32 %v1701, 16
        %v1762 = vrot.slane %v1760, 1
        %v1763 = vshll.u32 %v1701, 16
        %v1765 = vrot.slane %v1763, 2
        %v1766 = vor.u32 %v1762, %v1765
        %v1767 = vsel %vm1705, %v1757, %v1766
        %v1769 = vshrl.u32 %v1702, 16
        %v1771 = vrot.slane %v1769, 1
        %v1772 = vshll.u32 %v1702, 16
        %v1774 = vrot.slane %v1772, 2
        %v1775 = vor.u32 %v1771, %v1774
        %v1776 = vsel %vm1705, %v1766, %v1775
        %v1778 = vshrl.u32 %v1703, 16
        %v1780 = vrot.slane %v1778, 1
        %v1781 = vshll.u32 %v1703, 16
        %v1783 = vrot.slane %v1781, 2
        %v1784 = vor.u32 %v1780, %v1783
        %v1785 = vsel %vm1705, %v1775, %v1784
        %v1787 = vshrl.u32 %v1704, 16
        %v1789 = vrot.slane %v1787, 1
        %v1790 = vshll.u32 %v1704, 16
        %v1792 = vrot.slane %v1790, 2
        %v1793 = vor.u32 %v1789, %v1792
        %v1794 = vsel %vm1705, %v1784, %v1793
        %v1804 = vunpack.c.l.b16 %v1648
        %v1805 = vunpack.c.l.b16 %v1649
        %v1806 = vunpack.c.l.b16 %v1650
        %v1807 = vunpack.c.l.b16 %v1651
        %v1808 = vunpack.c.l.b16 %v1652
        %v1809 = vunpack.c.l.b16 %v1653
        %v1810 = vunpack.c.l.b16 %v1654
        %v1811 = vunpack.c.l.b16 %v1655
        %v1812 = vunpack.c.l.b16 %v1656
        %v1813 = vpack.c.b16 %v1805, %v1804
        %v1814 = vpack.c.b16 %v1807, %v1806
        %v1815 = vpack.c.b16 %v1809, %v1808
        %v1816 = vpack.c.b16 %v1811, %v1810
        %v1817 = vpack.c.b16 %v1812, %v1812
        %v1823 = vsel %vm442, %v1722, 0
        %v1826 = vsel %vm442, %v1731, 0
        %v1829 = vsel %vm442, %v1740, 0
        %v1832 = vsel %vm442, %v1749, 0
        %v1835 = vsel %vm442, %v1758, 0
        %v1838 = vsel %vm442, %v1767, 0
        %v1841 = vsel %vm442, %v1776, 0
        %v1844 = vsel %vm442, %v1785, 0
        %v1847 = vsel %vm442, %v1794, 0
        %v1850 = vsel %vm470, %v1817, 0
        %1852 = vmatprep.subr.bf16.mxu0 0
        %1853 = vmatpush1.bf16.msra.mxu0 0
        %1854 = vmatprep.subr.bf16.mxu0 0
        %1855 = vmatpush1.bf16.msra.mxu0 0
        %1856 = vmatprep.subr.bf16.mxu0 0
        %1857 = vmatpush1.bf16.msra.mxu0 0
        %1858 = vmatprep.subr.bf16.mxu0 0
        %1859 = vmatpush1.bf16.msra.mxu0 %v1850
        %1860 = vmatprep.subr.bf16.mxu0 0
        %1861 = vmatpush1.bf16.msra.mxu0 %v1816
        %1862 = vmatprep.subr.bf16.mxu0 0
        %1863 = vmatpush1.bf16.msra.mxu0 %v1815
        %1864 = vmatprep.subr.bf16.mxu0 0
        %1865 = vmatpush1.bf16.msra.mxu0 %v1814
        %1866 = vmatprep.subr.bf16.mxu0 0
        %1867 = vmatpush1.bf16.msra.mxu0 %v1813
        %1868 = vmatprep.subr.bf16.mxu0 0
        %1869 = vmatpush2.bf16.msra.mxu0 0
        %1870 = vmatprep.subr.bf16.mxu0 0
        %1871 = vmatpush2.bf16.msra.mxu0 0
        %1872 = vmatprep.subr.bf16.mxu0 0
        %1873 = vmatpush2.bf16.msra.mxu0 0
        %1874 = vmatprep.subr.bf16.mxu0 0
        %1875 = vmatpush2.bf16.msra.mxu0 0
        %1876 = vmatprep.subr.bf16.mxu0 0
        %1877 = vmatpush2.bf16.msra.mxu0 0
        %1878 = vmatprep.subr.bf16.mxu0 0
        %1879 = vmatpush2.bf16.msra.mxu0 0
        %1880 = vmatprep.subr.bf16.mxu0 0
        %1881 = vmatpush2.bf16.msra.mxu0 0
        %1882 = vmatprep.subr.bf16.mxu0 0
        %1883 = vmatpush2.bf16.msra.mxu0 0
        %1884 = vmatprep.mubr.bf16.mxu0 0
        %1885 = vmatmul.mubr.bf16.gmra.mxu0 %v1823
        %v1886 = vpop.f32.mrf.mxu0
        %v1887 = vadd.f32 0.0, %v1886
        %v1888 = vpop.f32.mrf.mxu0
        %v1889 = vpop.f32.mrf.mxu0
        %v1890 = vadd.f32 0.0, %v1889
        %v1891 = vpop.f32.mrf.mxu0
        %1892 = vmatprep.mubr.bf16.mxu0 0
        %1893 = vmatmul.mubr.bf16.gmra.mxu0 %v1826
        %v1894 = vpop.f32.mrf.mxu0
        %v1895 = vadd.f32 0.0, %v1894
        %v1896 = vpop.f32.mrf.mxu0
        %v1897 = vpop.f32.mrf.mxu0
        %v1898 = vadd.f32 0.0, %v1897
        %v1899 = vpop.f32.mrf.mxu0
        %1900 = vmatprep.mubr.bf16.mxu0 0
        %1901 = vmatmul.mubr.bf16.gmra.mxu0 %v1829
        %v1902 = vpop.f32.mrf.mxu0
        %v1903 = vadd.f32 0.0, %v1902
        %v1904 = vpop.f32.mrf.mxu0
        %v1905 = vpop.f32.mrf.mxu0
        %v1906 = vadd.f32 0.0, %v1905
        %v1907 = vpop.f32.mrf.mxu0
        %1908 = vmatprep.mubr.bf16.mxu0 0
        %1909 = vmatmul.mubr.bf16.gmra.mxu0 %v1832
        %v1910 = vpop.f32.mrf.mxu0
        %v1911 = vadd.f32 0.0, %v1910
        %v1912 = vpop.f32.mrf.mxu0
        %v1913 = vpop.f32.mrf.mxu0
        %v1914 = vadd.f32 0.0, %v1913
        %v1915 = vpop.f32.mrf.mxu0
        %1916 = vmatprep.mubr.bf16.mxu0 0
        %1917 = vmatmul.mubr.bf16.gmra.mxu0 %v1835
        %v1918 = vpop.f32.mrf.mxu0
        %v1919 = vadd.f32 0.0, %v1918
        %v1920 = vpop.f32.mrf.mxu0
        %v1921 = vpop.f32.mrf.mxu0
        %v1922 = vadd.f32 0.0, %v1921
        %v1923 = vpop.f32.mrf.mxu0
        %1924 = vmatprep.mubr.bf16.mxu0 0
        %1925 = vmatmul.mubr.bf16.gmra.mxu0 %v1838
        %v1926 = vpop.f32.mrf.mxu0
        %v1927 = vadd.f32 0.0, %v1926
        %v1928 = vpop.f32.mrf.mxu0
        %v1929 = vpop.f32.mrf.mxu0
        %v1930 = vadd.f32 0.0, %v1929
        %v1931 = vpop.f32.mrf.mxu0
        %1932 = vmatprep.mubr.bf16.mxu0 0
        %1933 = vmatmul.mubr.bf16.gmra.mxu0 %v1841
        %v1934 = vpop.f32.mrf.mxu0
        %v1935 = vadd.f32 0.0, %v1934
        %v1936 = vpop.f32.mrf.mxu0
        %v1937 = vpop.f32.mrf.mxu0
        %v1938 = vadd.f32 0.0, %v1937
        %v1939 = vpop.f32.mrf.mxu0
        %1940 = vmatprep.mubr.bf16.mxu0 0
        %1941 = vmatmul.mubr.bf16.gmra.mxu0 %v1844
        %v1942 = vpop.f32.mrf.mxu0
        %v1943 = vadd.f32 0.0, %v1942
        %v1944 = vpop.f32.mrf.mxu0
        %v1945 = vpop.f32.mrf.mxu0
        %v1946 = vadd.f32 0.0, %v1945
        %v1947 = vpop.f32.mrf.mxu0
        %1948 = vmatprep.mubr.bf16.mxu0 0
        %1949 = vmatmul.mubr.bf16.gmra.mxu0 %v1847
        %v1950 = vpop.f32.mrf.mxu0
        %v1951 = vadd.f32 0.0, %v1950
        %v1952 = vpop.f32.mrf.mxu0
        %v1953 = vpop.f32.mrf.mxu0
        %v1954 = vadd.f32 0.0, %v1953
        %v1955 = vpop.f32.mrf.mxu0
        %1956 = vdwg.mxu0
        %v1957 = vadd.f32 %v1629, %v1887
        %v1958 = vadd.f32 %v1630, %v1890
        %v1959 = vadd.f32 %v1631, %v1895
        %v1960 = vadd.f32 %v1632, %v1898
        %v1961 = vadd.f32 %v1633, %v1903
        %v1962 = vadd.f32 %v1634, %v1906
        %v1963 = vadd.f32 %v1635, %v1911
        %v1964 = vadd.f32 %v1636, %v1914
        %v1965 = vadd.f32 %v1637, %v1919
        %v1966 = vadd.f32 %v1638, %v1922
        %v1967 = vadd.f32 %v1639, %v1927
        %v1968 = vadd.f32 %v1640, %v1930
        %v1969 = vadd.f32 %v1641, %v1935
        %v1970 = vadd.f32 %v1642, %v1938
        %v1971 = vadd.f32 %v1643, %v1943
        %v1972 = vadd.f32 %v1644, %v1946
        %v1973 = vadd.f32 %v1645, %v1951
        %v1974 = vadd.f32 %v1646, %v1954
        %1975 = vst [vmem:[#allocation2] sm:$0xff] %v1957
        %1976 = vst [vmem:[#allocation2 + $0x8] sm:$0xff] %v1958
        %1977 = vst [vmem:[#allocation2 + $0x10] sm:$0xff] %v1959
        %1978 = vst [vmem:[#allocation2 + $0x18] sm:$0xff] %v1960
        %1979 = vst [vmem:[#allocation2 + $0x20] sm:$0xff] %v1961
        %1980 = vst [vmem:[#allocation2 + $0x28] sm:$0xff] %v1962
        %1981 = vst [vmem:[#allocation2 + $0x30] sm:$0xff] %v1963
        %1982 = vst [vmem:[#allocation2 + $0x38] sm:$0xff] %v1964
        %1983 = vst [vmem:[#allocation2 + $0x40] sm:$0xff] %v1965
        %1984 = vst [vmem:[#allocation2 + $0x48] sm:$0xff] %v1966
        %1985 = vst [vmem:[#allocation2 + $0x50] sm:$0xff] %v1967
        %1986 = vst [vmem:[#allocation2 + $0x58] sm:$0xff] %v1968
        %1987 = vst [vmem:[#allocation2 + $0x60] sm:$0xff] %v1969
        %1988 = vst [vmem:[#allocation2 + $0x68] sm:$0xff] %v1970
        %1989 = vst [vmem:[#allocation2 + $0x70] sm:$0xff] %v1971
        %1990 = vst [vmem:[#allocation2 + $0x78] sm:$0xff] %v1972
        %1991 = vst [vmem:[#allocation2 + $0x80] sm:$0xff] %v1973
        %1992 = vst [vmem:[#allocation2 + $0x88] sm:$0xff] %v1974
        %v1993 = vld [vmem:[%s286 + $0x8] sm:$0xc]
        %v1994 = vld [vmem:[%s286 + $0xc] sm:$0xf]
        %v1995 = vld [vmem:[%s286 + $0x10] sm:$0xf]
        %v1996 = vld [vmem:[%s286 + $0x14] sm:$0xf]
        %v1997 = vld [vmem:[%s286 + $0x18] sm:$0xf]
        %v1998 = vld [vmem:[%s286 + $0x1c] sm:$0xf]
        %v1999 = vld [vmem:[%s286 + $0x20] sm:$0xf]
        %v2000 = vld [vmem:[%s286 + $0x24] sm:$0xf]
        %v2001 = vld [vmem:[%s286 + $0x28] sm:$0xf]
        %v2002 = vld [vmem:[%s286 + $0x2c] sm:$0xf]
        %v2003 = vld [vmem:[%s286 + $0x30] sm:$0xf]
        %v2004 = vld [vmem:[%s286 + $0x34] sm:$0xf]
        %v2005 = vld [vmem:[%s286 + $0x38] sm:$0xf]
        %v2006 = vld [vmem:[%s286 + $0x3c] sm:$0xf]
        %v2007 = vld [vmem:[%s286 + $0x40] sm:$0xf]
        %v2008 = vld [vmem:[%s286 + $0x44] sm:$0xf]
        %v2009 = vld [vmem:[%s286 + $0x48] sm:$0xf]
        %v2010 = vld [vmem:[%s286 + $0x4c] sm:$0xf]
        %v2011 = vld [vmem:[%s286 + $0x50] sm:$0x3]
        %v2012 = vld [vmem:[#allocation2] sm:$0xff]
        %v2013 = vld [vmem:[#allocation2 + $0x8] sm:$0xff]
        %v2014 = vld [vmem:[#allocation2 + $0x10] sm:$0xff]
        %v2015 = vld [vmem:[#allocation2 + $0x18] sm:$0xff]
        %v2016 = vld [vmem:[#allocation2 + $0x20] sm:$0xff]
        %v2017 = vld [vmem:[#allocation2 + $0x28] sm:$0xff]
        %v2018 = vld [vmem:[#allocation2 + $0x30] sm:$0xff]
        %v2019 = vld [vmem:[#allocation2 + $0x38] sm:$0xff]
        %v2020 = vld [vmem:[#allocation2 + $0x40] sm:$0xff]
        %v2021 = vld [vmem:[#allocation2 + $0x48] sm:$0xff]
        %v2022 = vld [vmem:[#allocation2 + $0x50] sm:$0xff]
        %v2023 = vld [vmem:[#allocation2 + $0x58] sm:$0xff]
        %v2024 = vld [vmem:[#allocation2 + $0x60] sm:$0xff]
        %v2025 = vld [vmem:[#allocation2 + $0x68] sm:$0xff]
        %v2026 = vld [vmem:[#allocation2 + $0x70] sm:$0xff]
        %v2027 = vld [vmem:[#allocation2 + $0x78] sm:$0xff]
        %v2028 = vld [vmem:[#allocation2 + $0x80] sm:$0xff]
        %v2029 = vld [vmem:[#allocation2 + $0x88] sm:$0xff]
        %s2030 = scalar_lea.vmem %s1, 180
        %v2031 = vld [vmem:[%s2030] sm:$0xf]
        %v2032 = vld [vmem:[%s2030 + $0x4] sm:$0xf]
        %v2033 = vld [vmem:[%s2030 + $0x8] sm:$0xf]
        %v2034 = vld [vmem:[%s2030 + $0xc] sm:$0xf]
        %v2035 = vld [vmem:[%s2030 + $0x10] sm:$0xf]
        %v2036 = vld [vmem:[%s2030 + $0x14] sm:$0xf]
        %v2037 = vld [vmem:[%s2030 + $0x18] sm:$0xf]
        %v2038 = vld [vmem:[%s2030 + $0x1c] sm:$0xf]
        %v2039 = vld [vmem:[%s2030 + $0x20] sm:$0xf]
        %v2059 = vunpack.c.l.b16 %v1993
        %v2060 = vunpack.c.l.b16 %v1994
        %v2061 = vunpack.c.l.b16 %v1995
        %v2062 = vunpack.c.l.b16 %v1996
        %v2063 = vunpack.c.l.b16 %v1997
        %v2064 = vunpack.c.l.b16 %v1998
        %v2065 = vunpack.c.l.b16 %v1999
        %v2066 = vunpack.c.l.b16 %v2000
        %v2067 = vunpack.c.l.b16 %v2001
        %v2068 = vunpack.c.l.b16 %v2002
        %v2069 = vunpack.c.l.b16 %v2003
        %v2070 = vunpack.c.l.b16 %v2004
        %v2071 = vunpack.c.l.b16 %v2005
        %v2072 = vunpack.c.l.b16 %v2006
        %v2073 = vunpack.c.l.b16 %v2007
        %v2074 = vunpack.c.l.b16 %v2008
        %v2075 = vunpack.c.l.b16 %v2009
        %v2076 = vunpack.c.l.b16 %v2010
        %v2077 = vunpack.c.l.b16 %v2011
        %v2078 = vpack.c.b16 %v2060, %v2059
        %v2079 = vpack.c.b16 %v2062, %v2061
        %v2080 = vpack.c.b16 %v2064, %v2063
        %v2081 = vpack.c.b16 %v2066, %v2065
        %v2082 = vpack.c.b16 %v2068, %v2067
        %v2083 = vpack.c.b16 %v2070, %v2069
        %v2084 = vpack.c.b16 %v2072, %v2071
        %v2085 = vpack.c.b16 %v2074, %v2073
        %v2086 = vpack.c.b16 %v2076, %v2075
        %v2087 = vpack.c.b16 %v2077, %v2077
        %vm2088 = vcmask 1045504
        %v2089 = vrot.slane %v2078, 2
        %v2090 = vrot.slane %v2079, 2
        %v2091 = vsel %vm2088, %v2089, %v2090
        %v2092 = vrot.slane %v2080, 2
        %v2093 = vsel %vm2088, %v2090, %v2092
        %v2094 = vrot.slane %v2081, 2
        %v2095 = vsel %vm2088, %v2092, %v2094
        %v2096 = vrot.slane %v2082, 2
        %v2097 = vsel %vm2088, %v2094, %v2096
        %v2098 = vrot.slane %v2083, 2
        %v2099 = vsel %vm2088, %v2096, %v2098
        %v2100 = vrot.slane %v2084, 2
        %v2101 = vsel %vm2088, %v2098, %v2100
        %v2102 = vrot.slane %v2085, 2
        %v2103 = vsel %vm2088, %v2100, %v2102
        %v2104 = vrot.slane %v2086, 2
        %v2105 = vsel %vm2088, %v2102, %v2104
        %v2106 = vrot.slane %v2087, 2
        %v2107 = vsel %vm2088, %v2104, %v2106
        %v2117 = vunpack.c.l.b16 %v2031
        %v2118 = vunpack.c.l.b16 %v2032
        %v2119 = vunpack.c.l.b16 %v2033
        %v2120 = vunpack.c.l.b16 %v2034
        %v2121 = vunpack.c.l.b16 %v2035
        %v2122 = vunpack.c.l.b16 %v2036
        %v2123 = vunpack.c.l.b16 %v2037
        %v2124 = vunpack.c.l.b16 %v2038
        %v2125 = vunpack.c.l.b16 %v2039
        %v2126 = vpack.c.b16 %v2118, %v2117
        %v2127 = vpack.c.b16 %v2120, %v2119
        %v2128 = vpack.c.b16 %v2122, %v2121
        %v2129 = vpack.c.b16 %v2124, %v2123
        %v2130 = vpack.c.b16 %v2125, %v2125
        %v2136 = vsel %vm442, %v2091, 0
        %v2139 = vsel %vm442, %v2093, 0
        %v2142 = vsel %vm442, %v2095, 0
        %v2145 = vsel %vm442, %v2097, 0
        %v2148 = vsel %vm442, %v2099, 0
        %v2151 = vsel %vm442, %v2101, 0
        %v2154 = vsel %vm442, %v2103, 0
        %v2157 = vsel %vm442, %v2105, 0
        %v2160 = vsel %vm442, %v2107, 0
        %v2163 = vsel %vm470, %v2130, 0
        %2165 = vmatprep.subr.bf16.mxu0 0
        %2166 = vmatpush1.bf16.msra.mxu0 0
        %2167 = vmatprep.subr.bf16.mxu0 0
        %2168 = vmatpush1.bf16.msra.mxu0 0
        %2169 = vmatprep.subr.bf16.mxu0 0
        %2170 = vmatpush1.bf16.msra.mxu0 0
        %2171 = vmatprep.subr.bf16.mxu0 0
        %2172 = vmatpush1.bf16.msra.mxu0 %v2163
        %2173 = vmatprep.subr.bf16.mxu0 0
        %2174 = vmatpush1.bf16.msra.mxu0 %v2129
        %2175 = vmatprep.subr.bf16.mxu0 0
        %2176 = vmatpush1.bf16.msra.mxu0 %v2128
        %2177 = vmatprep.subr.bf16.mxu0 0
        %2178 = vmatpush1.bf16.msra.mxu0 %v2127
        %2179 = vmatprep.subr.bf16.mxu0 0
        %2180 = vmatpush1.bf16.msra.mxu0 %v2126
        %2181 = vmatprep.subr.bf16.mxu0 0
        %2182 = vmatpush2.bf16.msra.mxu0 0
        %2183 = vmatprep.subr.bf16.mxu0 0
        %2184 = vmatpush2.bf16.msra.mxu0 0
        %2185 = vmatprep.subr.bf16.mxu0 0
        %2186 = vmatpush2.bf16.msra.mxu0 0
        %2187 = vmatprep.subr.bf16.mxu0 0
        %2188 = vmatpush2.bf16.msra.mxu0 0
        %2189 = vmatprep.subr.bf16.mxu0 0
        %2190 = vmatpush2.bf16.msra.mxu0 0
        %2191 = vmatprep.subr.bf16.mxu0 0
        %2192 = vmatpush2.bf16.msra.mxu0 0
        %2193 = vmatprep.subr.bf16.mxu0 0
        %2194 = vmatpush2.bf16.msra.mxu0 0
        %2195 = vmatprep.subr.bf16.mxu0 0
        %2196 = vmatpush2.bf16.msra.mxu0 0
        %2197 = vmatprep.mubr.bf16.mxu0 0
        %2198 = vmatmul.mubr.bf16.gmra.mxu0 %v2136
        %v2199 = vpop.f32.mrf.mxu0
        %v2200 = vadd.f32 0.0, %v2199
        %v2201 = vpop.f32.mrf.mxu0
        %v2202 = vpop.f32.mrf.mxu0
        %v2203 = vadd.f32 0.0, %v2202
        %v2204 = vpop.f32.mrf.mxu0
        %2205 = vmatprep.mubr.bf16.mxu0 0
        %2206 = vmatmul.mubr.bf16.gmra.mxu0 %v2139
        %v2207 = vpop.f32.mrf.mxu0
        %v2208 = vadd.f32 0.0, %v2207
        %v2209 = vpop.f32.mrf.mxu0
        %v2210 = vpop.f32.mrf.mxu0
        %v2211 = vadd.f32 0.0, %v2210
        %v2212 = vpop.f32.mrf.mxu0
        %2213 = vmatprep.mubr.bf16.mxu0 0
        %2214 = vmatmul.mubr.bf16.gmra.mxu0 %v2142
        %v2215 = vpop.f32.mrf.mxu0
        %v2216 = vadd.f32 0.0, %v2215
        %v2217 = vpop.f32.mrf.mxu0
        %v2218 = vpop.f32.mrf.mxu0
        %v2219 = vadd.f32 0.0, %v2218
        %v2220 = vpop.f32.mrf.mxu0
        %2221 = vmatprep.mubr.bf16.mxu0 0
        %2222 = vmatmul.mubr.bf16.gmra.mxu0 %v2145
        %v2223 = vpop.f32.mrf.mxu0
        %v2224 = vadd.f32 0.0, %v2223
        %v2225 = vpop.f32.mrf.mxu0
        %v2226 = vpop.f32.mrf.mxu0
        %v2227 = vadd.f32 0.0, %v2226
        %v2228 = vpop.f32.mrf.mxu0
        %2229 = vmatprep.mubr.bf16.mxu0 0
        %2230 = vmatmul.mubr.bf16.gmra.mxu0 %v2148
        %v2231 = vpop.f32.mrf.mxu0
        %v2232 = vadd.f32 0.0, %v2231
        %v2233 = vpop.f32.mrf.mxu0
        %v2234 = vpop.f32.mrf.mxu0
        %v2235 = vadd.f32 0.0, %v2234
        %v2236 = vpop.f32.mrf.mxu0
        %2237 = vmatprep.mubr.bf16.mxu0 0
        %2238 = vmatmul.mubr.bf16.gmra.mxu0 %v2151
        %v2239 = vpop.f32.mrf.mxu0
        %v2240 = vadd.f32 0.0, %v2239
        %v2241 = vpop.f32.mrf.mxu0
        %v2242 = vpop.f32.mrf.mxu0
        %v2243 = vadd.f32 0.0, %v2242
        %v2244 = vpop.f32.mrf.mxu0
        %2245 = vmatprep.mubr.bf16.mxu0 0
        %2246 = vmatmul.mubr.bf16.gmra.mxu0 %v2154
        %v2247 = vpop.f32.mrf.mxu0
        %v2248 = vadd.f32 0.0, %v2247
        %v2249 = vpop.f32.mrf.mxu0
        %v2250 = vpop.f32.mrf.mxu0
        %v2251 = vadd.f32 0.0, %v2250
        %v2252 = vpop.f32.mrf.mxu0
        %2253 = vmatprep.mubr.bf16.mxu0 0
        %2254 = vmatmul.mubr.bf16.gmra.mxu0 %v2157
        %v2255 = vpop.f32.mrf.mxu0
        %v2256 = vadd.f32 0.0, %v2255
        %v2257 = vpop.f32.mrf.mxu0
        %v2258 = vpop.f32.mrf.mxu0
        %v2259 = vadd.f32 0.0, %v2258
        %v2260 = vpop.f32.mrf.mxu0
        %2261 = vmatprep.mubr.bf16.mxu0 0
        %2262 = vmatmul.mubr.bf16.gmra.mxu0 %v2160
        %v2263 = vpop.f32.mrf.mxu0
        %v2264 = vadd.f32 0.0, %v2263
        %v2265 = vpop.f32.mrf.mxu0
        %v2266 = vpop.f32.mrf.mxu0
        %v2267 = vadd.f32 0.0, %v2266
        %v2268 = vpop.f32.mrf.mxu0
        %2269 = vdwg.mxu0
        %v2270 = vadd.f32 %v2012, %v2200
        %v2271 = vadd.f32 %v2013, %v2203
        %v2272 = vadd.f32 %v2014, %v2208
        %v2273 = vadd.f32 %v2015, %v2211
        %v2274 = vadd.f32 %v2016, %v2216
        %v2275 = vadd.f32 %v2017, %v2219
        %v2276 = vadd.f32 %v2018, %v2224
        %v2277 = vadd.f32 %v2019, %v2227
        %v2278 = vadd.f32 %v2020, %v2232
        %v2279 = vadd.f32 %v2021, %v2235
        %v2280 = vadd.f32 %v2022, %v2240
        %v2281 = vadd.f32 %v2023, %v2243
        %v2282 = vadd.f32 %v2024, %v2248
        %v2283 = vadd.f32 %v2025, %v2251
        %v2284 = vadd.f32 %v2026, %v2256
        %v2285 = vadd.f32 %v2027, %v2259
        %v2286 = vadd.f32 %v2028, %v2264
        %v2287 = vadd.f32 %v2029, %v2267
        %2288 = vst [vmem:[#allocation2] sm:$0xff] %v2270
        %2289 = vst [vmem:[#allocation2 + $0x8] sm:$0xff] %v2271
        %2290 = vst [vmem:[#allocation2 + $0x10] sm:$0xff] %v2272
        %2291 = vst [vmem:[#allocation2 + $0x18] sm:$0xff] %v2273
        %2292 = vst [vmem:[#allocation2 + $0x20] sm:$0xff] %v2274
        %2293 = vst [vmem:[#allocation2 + $0x28] sm:$0xff] %v2275
        %2294 = vst [vmem:[#allocation2 + $0x30] sm:$0xff] %v2276
        %2295 = vst [vmem:[#allocation2 + $0x38] sm:$0xff] %v2277
        %2296 = vst [vmem:[#allocation2 + $0x40] sm:$0xff] %v2278
        %2297 = vst [vmem:[#allocation2 + $0x48] sm:$0xff] %v2279
        %2298 = vst [vmem:[#allocation2 + $0x50] sm:$0xff] %v2280
        %2299 = vst [vmem:[#allocation2 + $0x58] sm:$0xff] %v2281
        %2300 = vst [vmem:[#allocation2 + $0x60] sm:$0xff] %v2282
        %2301 = vst [vmem:[#allocation2 + $0x68] sm:$0xff] %v2283
        %2302 = vst [vmem:[#allocation2 + $0x70] sm:$0xff] %v2284
        %2303 = vst [vmem:[#allocation2 + $0x78] sm:$0xff] %v2285
        %2304 = vst [vmem:[#allocation2 + $0x80] sm:$0xff] %v2286
        %2305 = vst [vmem:[#allocation2 + $0x88] sm:$0xff] %v2287
        %v2306 = vld [vmem:[%s286 + $0x10] sm:$0xc]
        %v2307 = vld [vmem:[%s286 + $0x14] sm:$0xf]
        %v2308 = vld [vmem:[%s286 + $0x18] sm:$0xf]
        %v2309 = vld [vmem:[%s286 + $0x1c] sm:$0xf]
        %v2310 = vld [vmem:[%s286 + $0x20] sm:$0xf]
        %v2311 = vld [vmem:[%s286 + $0x24] sm:$0xf]
        %v2312 = vld [vmem:[%s286 + $0x28] sm:$0xf]
        %v2313 = vld [vmem:[%s286 + $0x2c] sm:$0xf]
        %v2314 = vld [vmem:[%s286 + $0x30] sm:$0xf]
        %v2315 = vld [vmem:[%s286 + $0x34] sm:$0xf]
        %v2316 = vld [vmem:[%s286 + $0x38] sm:$0xf]
        %v2317 = vld [vmem:[%s286 + $0x3c] sm:$0xf]
        %v2318 = vld [vmem:[%s286 + $0x40] sm:$0xf]
        %v2319 = vld [vmem:[%s286 + $0x44] sm:$0xf]
        %v2320 = vld [vmem:[%s286 + $0x48] sm:$0xf]
        %v2321 = vld [vmem:[%s286 + $0x4c] sm:$0xf]
        %v2322 = vld [vmem:[%s286 + $0x50] sm:$0xf]
        %v2323 = vld [vmem:[%s286 + $0x54] sm:$0xf]
        %v2324 = vld [vmem:[%s286 + $0x58] sm:$0x3]
        %v2325 = vld [vmem:[#allocation2] sm:$0xff]
        %v2326 = vld [vmem:[#allocation2 + $0x8] sm:$0xff]
        %v2327 = vld [vmem:[#allocation2 + $0x10] sm:$0xff]
        %v2328 = vld [vmem:[#allocation2 + $0x18] sm:$0xff]
        %v2329 = vld [vmem:[#allocation2 + $0x20] sm:$0xff]
        %v2330 = vld [vmem:[#allocation2 + $0x28] sm:$0xff]
        %v2331 = vld [vmem:[#allocation2 + $0x30] sm:$0xff]
        %v2332 = vld [vmem:[#allocation2 + $0x38] sm:$0xff]
        %v2333 = vld [vmem:[#allocation2 + $0x40] sm:$0xff]
        %v2334 = vld [vmem:[#allocation2 + $0x48] sm:$0xff]
        %v2335 = vld [vmem:[#allocation2 + $0x50] sm:$0xff]
        %v2336 = vld [vmem:[#allocation2 + $0x58] sm:$0xff]
        %v2337 = vld [vmem:[#allocation2 + $0x60] sm:$0xff]
        %v2338 = vld [vmem:[#allocation2 + $0x68] sm:$0xff]
        %v2339 = vld [vmem:[#allocation2 + $0x70] sm:$0xff]
        %v2340 = vld [vmem:[#allocation2 + $0x78] sm:$0xff]
        %v2341 = vld [vmem:[#allocation2 + $0x80] sm:$0xff]
        %v2342 = vld [vmem:[#allocation2 + $0x88] sm:$0xff]
        %s2343 = scalar_lea.vmem %s1, 216
        %v2344 = vld [vmem:[%s2343] sm:$0xf]
        %v2345 = vld [vmem:[%s2343 + $0x4] sm:$0xf]
        %v2346 = vld [vmem:[%s2343 + $0x8] sm:$0xf]
        %v2347 = vld [vmem:[%s2343 + $0xc] sm:$0xf]
        %v2348 = vld [vmem:[%s2343 + $0x10] sm:$0xf]
        %v2349 = vld [vmem:[%s2343 + $0x14] sm:$0xf]
        %v2350 = vld [vmem:[%s2343 + $0x18] sm:$0xf]
        %v2351 = vld [vmem:[%s2343 + $0x1c] sm:$0xf]
        %v2352 = vld [vmem:[%s2343 + $0x20] sm:$0xf]
        %v2372 = vunpack.c.l.b16 %v2306
        %v2373 = vunpack.c.l.b16 %v2307
        %v2374 = vunpack.c.l.b16 %v2308
        %v2375 = vunpack.c.l.b16 %v2309
        %v2376 = vunpack.c.l.b16 %v2310
        %v2377 = vunpack.c.l.b16 %v2311
        %v2378 = vunpack.c.l.b16 %v2312
        %v2379 = vunpack.c.l.b16 %v2313
        %v2380 = vunpack.c.l.b16 %v2314
        %v2381 = vunpack.c.l.b16 %v2315
        %v2382 = vunpack.c.l.b16 %v2316
        %v2383 = vunpack.c.l.b16 %v2317
        %v2384 = vunpack.c.l.b16 %v2318
        %v2385 = vunpack.c.l.b16 %v2319
        %v2386 = vunpack.c.l.b16 %v2320
        %v2387 = vunpack.c.l.b16 %v2321
        %v2388 = vunpack.c.l.b16 %v2322
        %v2389 = vunpack.c.l.b16 %v2323
        %v2390 = vunpack.c.l.b16 %v2324
        %v2391 = vpack.c.b16 %v2373, %v2372
        %v2392 = vpack.c.b16 %v2375, %v2374
        %v2393 = vpack.c.b16 %v2377, %v2376
        %v2394 = vpack.c.b16 %v2379, %v2378
        %v2395 = vpack.c.b16 %v2381, %v2380
        %v2396 = vpack.c.b16 %v2383, %v2382
        %v2397 = vpack.c.b16 %v2385, %v2384
        %v2398 = vpack.c.b16 %v2387, %v2386
        %v2399 = vpack.c.b16 %v2389, %v2388
        %v2400 = vpack.c.b16 %v2390, %v2390
        %v2401 = vrot.slane %v2391, 2
        %v2402 = vrot.slane %v2392, 2
        %v2403 = vsel %vm2088, %v2401, %v2402
        %v2404 = vrot.slane %v2393, 2
        %v2405 = vsel %vm2088, %v2402, %v2404
        %v2406 = vrot.slane %v2394, 2
        %v2407 = vsel %vm2088, %v2404, %v2406
        %v2408 = vrot.slane %v2395, 2
        %v2409 = vsel %vm2088, %v2406, %v2408
        %v2410 = vrot.slane %v2396, 2
        %v2411 = vsel %vm2088, %v2408, %v2410
        %v2412 = vrot.slane %v2397, 2
        %v2413 = vsel %vm2088, %v2410, %v2412
        %v2414 = vrot.slane %v2398, 2
        %v2415 = vsel %vm2088, %v2412, %v2414
        %v2416 = vrot.slane %v2399, 2
        %v2417 = vsel %vm2088, %v2414, %v2416
        %v2418 = vrot.slane %v2400, 2
        %v2419 = vsel %vm2088, %v2416, %v2418
        %v2429 = vunpack.c.l.b16 %v2344
        %v2430 = vunpack.c.l.b16 %v2345
        %v2431 = vunpack.c.l.b16 %v2346
        %v2432 = vunpack.c.l.b16 %v2347
        %v2433 = vunpack.c.l.b16 %v2348
        %v2434 = vunpack.c.l.b16 %v2349
        %v2435 = vunpack.c.l.b16 %v2350
        %v2436 = vunpack.c.l.b16 %v2351
        %v2437 = vunpack.c.l.b16 %v2352
        %v2438 = vpack.c.b16 %v2430, %v2429
        %v2439 = vpack.c.b16 %v2432, %v2431
        %v2440 = vpack.c.b16 %v2434, %v2433
        %v2441 = vpack.c.b16 %v2436, %v2435
        %v2442 = vpack.c.b16 %v2437, %v2437
        %v2448 = vsel %vm442, %v2403, 0
        %v2451 = vsel %vm442, %v2405, 0
        %v2454 = vsel %vm442, %v2407, 0
        %v2457 = vsel %vm442, %v2409, 0
        %v2460 = vsel %vm442, %v2411, 0
        %v2463 = vsel %vm442, %v2413, 0
        %v2466 = vsel %vm442, %v2415, 0
        %v2469 = vsel %vm442, %v2417, 0
        %v2472 = vsel %vm442, %v2419, 0
        %v2475 = vsel %vm470, %v2442, 0
        %2477 = vmatprep.subr.bf16.mxu0 0
        %2478 = vmatpush1.bf16.msra.mxu0 0
        %2479 = vmatprep.subr.bf16.mxu0 0
        %2480 = vmatpush1.bf16.msra.mxu0 0
        %2481 = vmatprep.subr.bf16.mxu0 0
        %2482 = vmatpush1.bf16.msra.mxu0 0
        %2483 = vmatprep.subr.bf16.mxu0 0
        %2484 = vmatpush1.bf16.msra.mxu0 %v2475
        %2485 = vmatprep.subr.bf16.mxu0 0
        %2486 = vmatpush1.bf16.msra.mxu0 %v2441
        %2487 = vmatprep.subr.bf16.mxu0 0
        %2488 = vmatpush1.bf16.msra.mxu0 %v2440
        %2489 = vmatprep.subr.bf16.mxu0 0
        %2490 = vmatpush1.bf16.msra.mxu0 %v2439
        %2491 = vmatprep.subr.bf16.mxu0 0
        %2492 = vmatpush1.bf16.msra.mxu0 %v2438
        %2493 = vmatprep.subr.bf16.mxu0 0
        %2494 = vmatpush2.bf16.msra.mxu0 0
        %2495 = vmatprep.subr.bf16.mxu0 0
        %2496 = vmatpush2.bf16.msra.mxu0 0
        %2497 = vmatprep.subr.bf16.mxu0 0
        %2498 = vmatpush2.bf16.msra.mxu0 0
        %2499 = vmatprep.subr.bf16.mxu0 0
        %2500 = vmatpush2.bf16.msra.mxu0 0
        %2501 = vmatprep.subr.bf16.mxu0 0
        %2502 = vmatpush2.bf16.msra.mxu0 0
        %2503 = vmatprep.subr.bf16.mxu0 0
        %2504 = vmatpush2.bf16.msra.mxu0 0
        %2505 = vmatprep.subr.bf16.mxu0 0
        %2506 = vmatpush2.bf16.msra.mxu0 0
        %2507 = vmatprep.subr.bf16.mxu0 0
        %2508 = vmatpush2.bf16.msra.mxu0 0
        %2509 = vmatprep.mubr.bf16.mxu0 0
        %2510 = vmatmul.mubr.bf16.gmra.mxu0 %v2448
        %v2511 = vpop.f32.mrf.mxu0
        %v2512 = vadd.f32 0.0, %v2511
        %v2513 = vpop.f32.mrf.mxu0
        %v2514 = vpop.f32.mrf.mxu0
        %v2515 = vadd.f32 0.0, %v2514
        %v2516 = vpop.f32.mrf.mxu0
        %2517 = vmatprep.mubr.bf16.mxu0 0
        %2518 = vmatmul.mubr.bf16.gmra.mxu0 %v2451
        %v2519 = vpop.f32.mrf.mxu0
        %v2520 = vadd.f32 0.0, %v2519
        %v2521 = vpop.f32.mrf.mxu0
        %v2522 = vpop.f32.mrf.mxu0
        %v2523 = vadd.f32 0.0, %v2522
        %v2524 = vpop.f32.mrf.mxu0
        %2525 = vmatprep.mubr.bf16.mxu0 0
        %2526 = vmatmul.mubr.bf16.gmra.mxu0 %v2454
        %v2527 = vpop.f32.mrf.mxu0
        %v2528 = vadd.f32 0.0, %v2527
        %v2529 = vpop.f32.mrf.mxu0
        %v2530 = vpop.f32.mrf.mxu0
        %v2531 = vadd.f32 0.0, %v2530
        %v2532 = vpop.f32.mrf.mxu0
        %2533 = vmatprep.mubr.bf16.mxu0 0
        %2534 = vmatmul.mubr.bf16.gmra.mxu0 %v2457
        %v2535 = vpop.f32.mrf.mxu0
        %v2536 = vadd.f32 0.0, %v2535
        %v2537 = vpop.f32.mrf.mxu0
        %v2538 = vpop.f32.mrf.mxu0
        %v2539 = vadd.f32 0.0, %v2538
        %v2540 = vpop.f32.mrf.mxu0
        %2541 = vmatprep.mubr.bf16.mxu0 0
        %2542 = vmatmul.mubr.bf16.gmra.mxu0 %v2460
        %v2543 = vpop.f32.mrf.mxu0
        %v2544 = vadd.f32 0.0, %v2543
        %v2545 = vpop.f32.mrf.mxu0
        %v2546 = vpop.f32.mrf.mxu0
        %v2547 = vadd.f32 0.0, %v2546
        %v2548 = vpop.f32.mrf.mxu0
        %2549 = vmatprep.mubr.bf16.mxu0 0
        %2550 = vmatmul.mubr.bf16.gmra.mxu0 %v2463
        %v2551 = vpop.f32.mrf.mxu0
        %v2552 = vadd.f32 0.0, %v2551
        %v2553 = vpop.f32.mrf.mxu0
        %v2554 = vpop.f32.mrf.mxu0
        %v2555 = vadd.f32 0.0, %v2554
        %v2556 = vpop.f32.mrf.mxu0
        %2557 = vmatprep.mubr.bf16.mxu0 0
        %2558 = vmatmul.mubr.bf16.gmra.mxu0 %v2466
        %v2559 = vpop.f32.mrf.mxu0
        %v2560 = vadd.f32 0.0, %v2559
        %v2561 = vpop.f32.mrf.mxu0
        %v2562 = vpop.f32.mrf.mxu0
        %v2563 = vadd.f32 0.0, %v2562
        %v2564 = vpop.f32.mrf.mxu0
        %2565 = vmatprep.mubr.bf16.mxu0 0
        %2566 = vmatmul.mubr.bf16.gmra.mxu0 %v2469
        %v2567 = vpop.f32.mrf.mxu0
        %v2568 = vadd.f32 0.0, %v2567
        %v2569 = vpop.f32.mrf.mxu0
        %v2570 = vpop.f32.mrf.mxu0
        %v2571 = vadd.f32 0.0, %v2570
        %v2572 = vpop.f32.mrf.mxu0
        %2573 = vmatprep.mubr.bf16.mxu0 0
        %2574 = vmatmul.mubr.bf16.gmra.mxu0 %v2472
        %v2575 = vpop.f32.mrf.mxu0
        %v2576 = vadd.f32 0.0, %v2575
        %v2577 = vpop.f32.mrf.mxu0
        %v2578 = vpop.f32.mrf.mxu0
        %v2579 = vadd.f32 0.0, %v2578
        %v2580 = vpop.f32.mrf.mxu0
        %2581 = vdwg.mxu0
        %v2582 = vadd.f32 %v2325, %v2512
        %v2583 = vadd.f32 %v2326, %v2515
        %v2584 = vadd.f32 %v2327, %v2520
        %v2585 = vadd.f32 %v2328, %v2523
        %v2586 = vadd.f32 %v2329, %v2528
        %v2587 = vadd.f32 %v2330, %v2531
        %v2588 = vadd.f32 %v2331, %v2536
        %v2589 = vadd.f32 %v2332, %v2539
        %v2590 = vadd.f32 %v2333, %v2544
        %v2591 = vadd.f32 %v2334, %v2547
        %v2592 = vadd.f32 %v2335, %v2552
        %v2593 = vadd.f32 %v2336, %v2555
        %v2594 = vadd.f32 %v2337, %v2560
        %v2595 = vadd.f32 %v2338, %v2563
        %v2596 = vadd.f32 %v2339, %v2568
        %v2597 = vadd.f32 %v2340, %v2571
        %v2598 = vadd.f32 %v2341, %v2576
        %v2599 = vadd.f32 %v2342, %v2579
        %2600 = vst [vmem:[#allocation2] sm:$0xff] %v2582
        %2601 = vst [vmem:[#allocation2 + $0x8] sm:$0xff] %v2583
        %2602 = vst [vmem:[#allocation2 + $0x10] sm:$0xff] %v2584
        %2603 = vst [vmem:[#allocation2 + $0x18] sm:$0xff] %v2585
        %2604 = vst [vmem:[#allocation2 + $0x20] sm:$0xff] %v2586
        %2605 = vst [vmem:[#allocation2 + $0x28] sm:$0xff] %v2587
        %2606 = vst [vmem:[#allocation2 + $0x30] sm:$0xff] %v2588
        %2607 = vst [vmem:[#allocation2 + $0x38] sm:$0xff] %v2589
        %2608 = vst [vmem:[#allocation2 + $0x40] sm:$0xff] %v2590
        %2609 = vst [vmem:[#allocation2 + $0x48] sm:$0xff] %v2591
        %2610 = vst [vmem:[#allocation2 + $0x50] sm:$0xff] %v2592
        %2611 = vst [vmem:[#allocation2 + $0x58] sm:$0xff] %v2593
        %2612 = vst [vmem:[#allocation2 + $0x60] sm:$0xff] %v2594
        %2613 = vst [vmem:[#allocation2 + $0x68] sm:$0xff] %v2595
        %2614 = vst [vmem:[#allocation2 + $0x70] sm:$0xff] %v2596
        %2615 = vst [vmem:[#allocation2 + $0x78] sm:$0xff] %v2597
        %2616 = vst [vmem:[#allocation2 + $0x80] sm:$0xff] %v2598
        %2617 = vst [vmem:[#allocation2 + $0x88] sm:$0xff] %v2599
        %v2618 = vld [vmem:[%s286 + $0x10] sm:$0xc]
        %v2619 = vld [vmem:[%s286 + $0x14] sm:$0xf]
        %v2620 = vld [vmem:[%s286 + $0x18] sm:$0xf]
        %v2621 = vld [vmem:[%s286 + $0x1c] sm:$0xf]
        %v2622 = vld [vmem:[%s286 + $0x20] sm:$0xf]
        %v2623 = vld [vmem:[%s286 + $0x24] sm:$0xf]
        %v2624 = vld [vmem:[%s286 + $0x28] sm:$0xf]
        %v2625 = vld [vmem:[%s286 + $0x2c] sm:$0xf]
        %v2626 = vld [vmem:[%s286 + $0x30] sm:$0xf]
        %v2627 = vld [vmem:[%s286 + $0x34] sm:$0xf]
        %v2628 = vld [vmem:[%s286 + $0x38] sm:$0xf]
        %v2629 = vld [vmem:[%s286 + $0x3c] sm:$0xf]
        %v2630 = vld [vmem:[%s286 + $0x40] sm:$0xf]
        %v2631 = vld [vmem:[%s286 + $0x44] sm:$0xf]
        %v2632 = vld [vmem:[%s286 + $0x48] sm:$0xf]
        %v2633 = vld [vmem:[%s286 + $0x4c] sm:$0xf]
        %v2634 = vld [vmem:[%s286 + $0x50] sm:$0xf]
        %v2635 = vld [vmem:[%s286 + $0x54] sm:$0xf]
        %v2636 = vld [vmem:[%s286 + $0x58] sm:$0x7]
        %v2637 = vld [vmem:[#allocation2] sm:$0xff]
        %v2638 = vld [vmem:[#allocation2 + $0x8] sm:$0xff]
        %v2639 = vld [vmem:[#allocation2 + $0x10] sm:$0xff]
        %v2640 = vld [vmem:[#allocation2 + $0x18] sm:$0xff]
        %v2641 = vld [vmem:[#allocation2 + $0x20] sm:$0xff]
        %v2642 = vld [vmem:[#allocation2 + $0x28] sm:$0xff]
        %v2643 = vld [vmem:[#allocation2 + $0x30] sm:$0xff]
        %v2644 = vld [vmem:[#allocation2 + $0x38] sm:$0xff]
        %v2645 = vld [vmem:[#allocation2 + $0x40] sm:$0xff]
        %v2646 = vld [vmem:[#allocation2 + $0x48] sm:$0xff]
        %v2647 = vld [vmem:[#allocation2 + $0x50] sm:$0xff]
        %v2648 = vld [vmem:[#allocation2 + $0x58] sm:$0xff]
        %v2649 = vld [vmem:[#allocation2 + $0x60] sm:$0xff]
        %v2650 = vld [vmem:[#allocation2 + $0x68] sm:$0xff]
        %v2651 = vld [vmem:[#allocation2 + $0x70] sm:$0xff]
        %v2652 = vld [vmem:[#allocation2 + $0x78] sm:$0xff]
        %v2653 = vld [vmem:[#allocation2 + $0x80] sm:$0xff]
        %v2654 = vld [vmem:[#allocation2 + $0x88] sm:$0xff]
        %s2655 = scalar_lea.vmem %s1, 252
        %v2656 = vld [vmem:[%s2655] sm:$0xf]
        %v2657 = vld [vmem:[%s2655 + $0x4] sm:$0xf]
        %v2658 = vld [vmem:[%s2655 + $0x8] sm:$0xf]
        %v2659 = vld [vmem:[%s2655 + $0xc] sm:$0xf]
        %v2660 = vld [vmem:[%s2655 + $0x10] sm:$0xf]
        %v2661 = vld [vmem:[%s2655 + $0x14] sm:$0xf]
        %v2662 = vld [vmem:[%s2655 + $0x18] sm:$0xf]
        %v2663 = vld [vmem:[%s2655 + $0x1c] sm:$0xf]
        %v2664 = vld [vmem:[%s2655 + $0x20] sm:$0xf]
        %v2684 = vunpack.c.l.b16 %v2618
        %v2685 = vunpack.c.l.b16 %v2619
        %v2686 = vunpack.c.l.b16 %v2620
        %v2687 = vunpack.c.l.b16 %v2621
        %v2688 = vunpack.c.l.b16 %v2622
        %v2689 = vunpack.c.l.b16 %v2623
        %v2690 = vunpack.c.l.b16 %v2624
        %v2691 = vunpack.c.l.b16 %v2625
        %v2692 = vunpack.c.l.b16 %v2626
        %v2693 = vunpack.c.l.b16 %v2627
        %v2694 = vunpack.c.l.b16 %v2628
        %v2695 = vunpack.c.l.b16 %v2629
        %v2696 = vunpack.c.l.b16 %v2630
        %v2697 = vunpack.c.l.b16 %v2631
        %v2698 = vunpack.c.l.b16 %v2632
        %v2699 = vunpack.c.l.b16 %v2633
        %v2700 = vunpack.c.l.b16 %v2634
        %v2701 = vunpack.c.l.b16 %v2635
        %v2702 = vunpack.c.l.b16 %v2636
        %v2703 = vpack.c.b16 %v2685, %v2684
        %v2704 = vpack.c.b16 %v2687, %v2686
        %v2705 = vpack.c.b16 %v2689, %v2688
        %v2706 = vpack.c.b16 %v2691, %v2690
        %v2707 = vpack.c.b16 %v2693, %v2692
        %v2708 = vpack.c.b16 %v2695, %v2694
        %v2709 = vpack.c.b16 %v2697, %v2696
        %v2710 = vpack.c.b16 %v2699, %v2698
        %v2711 = vpack.c.b16 %v2701, %v2700
        %v2712 = vpack.c.b16 %v2702, %v2702
        %vm2713 = vsmask.f32 5376
        %v2715 = vshrl.u32 %v2703, 16
        %v2717 = vrot.slane %v2715, 2
        %v2718 = vshll.u32 %v2703, 16
        %v2720 = vrot.slane %v2718, 3
        %v2721 = vor.u32 %v2717, %v2720
        %v2723 = vshrl.u32 %v2704, 16
        %v2725 = vrot.slane %v2723, 2
        %v2726 = vshll.u32 %v2704, 16
        %v2728 = vrot.slane %v2726, 3
        %v2729 = vor.u32 %v2725, %v2728
        %v2730 = vsel %vm2713, %v2721, %v2729
        %v2732 = vshrl.u32 %v2705, 16
        %v2734 = vrot.slane %v2732, 2
        %v2735 = vshll.u32 %v2705, 16
        %v2737 = vrot.slane %v2735, 3
        %v2738 = vor.u32 %v2734, %v2737
        %v2739 = vsel %vm2713, %v2729, %v2738
        %v2741 = vshrl.u32 %v2706, 16
        %v2743 = vrot.slane %v2741, 2
        %v2744 = vshll.u32 %v2706, 16
        %v2746 = vrot.slane %v2744, 3
        %v2747 = vor.u32 %v2743, %v2746
        %v2748 = vsel %vm2713, %v2738, %v2747
        %v2750 = vshrl.u32 %v2707, 16
        %v2752 = vrot.slane %v2750, 2
        %v2753 = vshll.u32 %v2707, 16
        %v2755 = vrot.slane %v2753, 3
        %v2756 = vor.u32 %v2752, %v2755
        %v2757 = vsel %vm2713, %v2747, %v2756
        %v2759 = vshrl.u32 %v2708, 16
        %v2761 = vrot.slane %v2759, 2
        %v2762 = vshll.u32 %v2708, 16
        %v2764 = vrot.slane %v2762, 3
        %v2765 = vor.u32 %v2761, %v2764
        %v2766 = vsel %vm2713, %v2756, %v2765
        %v2768 = vshrl.u32 %v2709, 16
        %v2770 = vrot.slane %v2768, 2
        %v2771 = vshll.u32 %v2709, 16
        %v2773 = vrot.slane %v2771, 3
        %v2774 = vor.u32 %v2770, %v2773
        %v2775 = vsel %vm2713, %v2765, %v2774
        %v2777 = vshrl.u32 %v2710, 16
        %v2779 = vrot.slane %v2777, 2
        %v2780 = vshll.u32 %v2710, 16
        %v2782 = vrot.slane %v2780, 3
        %v2783 = vor.u32 %v2779, %v2782
        %v2784 = vsel %vm2713, %v2774, %v2783
        %v2786 = vshrl.u32 %v2711, 16
        %v2788 = vrot.slane %v2786, 2
        %v2789 = vshll.u32 %v2711, 16
        %v2791 = vrot.slane %v2789, 3
        %v2792 = vor.u32 %v2788, %v2791
        %v2793 = vsel %vm2713, %v2783, %v2792
        %v2795 = vshrl.u32 %v2712, 16
        %v2797 = vrot.slane %v2795, 2
        %v2798 = vshll.u32 %v2712, 16
        %v2800 = vrot.slane %v2798, 3
        %v2801 = vor.u32 %v2797, %v2800
        %v2802 = vsel %vm2713, %v2792, %v2801
        %v2812 = vunpack.c.l.b16 %v2656
        %v2813 = vunpack.c.l.b16 %v2657
        %v2814 = vunpack.c.l.b16 %v2658
        %v2815 = vunpack.c.l.b16 %v2659
        %v2816 = vunpack.c.l.b16 %v2660
        %v2817 = vunpack.c.l.b16 %v2661
        %v2818 = vunpack.c.l.b16 %v2662
        %v2819 = vunpack.c.l.b16 %v2663
        %v2820 = vunpack.c.l.b16 %v2664
        %v2821 = vpack.c.b16 %v2813, %v2812
        %v2822 = vpack.c.b16 %v2815, %v2814
        %v2823 = vpack.c.b16 %v2817, %v2816
        %v2824 = vpack.c.b16 %v2819, %v2818
        %v2825 = vpack.c.b16 %v2820, %v2820
        %v2831 = vsel %vm442, %v2730, 0
        %v2834 = vsel %vm442, %v2739, 0
        %v2837 = vsel %vm442, %v2748, 0
        %v2840 = vsel %vm442, %v2757, 0
        %v2843 = vsel %vm442, %v2766, 0
        %v2846 = vsel %vm442, %v2775, 0
        %v2849 = vsel %vm442, %v2784, 0
        %v2852 = vsel %vm442, %v2793, 0
        %v2855 = vsel %vm442, %v2802, 0
        %v2858 = vsel %vm470, %v2825, 0
        %2860 = vmatprep.subr.bf16.mxu0 0
        %2861 = vmatpush1.bf16.msra.mxu0 0
        %2862 = vmatprep.subr.bf16.mxu0 0
        %2863 = vmatpush1.bf16.msra.mxu0 0
        %2864 = vmatprep.subr.bf16.mxu0 0
        %2865 = vmatpush1.bf16.msra.mxu0 0
        %2866 = vmatprep.subr.bf16.mxu0 0
        %2867 = vmatpush1.bf16.msra.mxu0 %v2858
        %2868 = vmatprep.subr.bf16.mxu0 0
        %2869 = vmatpush1.bf16.msra.mxu0 %v2824
        %2870 = vmatprep.subr.bf16.mxu0 0
        %2871 = vmatpush1.bf16.msra.mxu0 %v2823
        %2872 = vmatprep.subr.bf16.mxu0 0
        %2873 = vmatpush1.bf16.msra.mxu0 %v2822
        %2874 = vmatprep.subr.bf16.mxu0 0
        %2875 = vmatpush1.bf16.msra.mxu0 %v2821
        %2876 = vmatprep.subr.bf16.mxu0 0
        %2877 = vmatpush2.bf16.msra.mxu0 0
        %2878 = vmatprep.subr.bf16.mxu0 0
        %2879 = vmatpush2.bf16.msra.mxu0 0
        %2880 = vmatprep.subr.bf16.mxu0 0
        %2881 = vmatpush2.bf16.msra.mxu0 0
        %2882 = vmatprep.subr.bf16.mxu0 0
        %2883 = vmatpush2.bf16.msra.mxu0 0
        %2884 = vmatprep.subr.bf16.mxu0 0
        %2885 = vmatpush2.bf16.msra.mxu0 0
        %2886 = vmatprep.subr.bf16.mxu0 0
        %2887 = vmatpush2.bf16.msra.mxu0 0
        %2888 = vmatprep.subr.bf16.mxu0 0
        %2889 = vmatpush2.bf16.msra.mxu0 0
        %2890 = vmatprep.subr.bf16.mxu0 0
        %2891 = vmatpush2.bf16.msra.mxu0 0
        %2892 = vmatprep.mubr.bf16.mxu0 0
        %2893 = vmatmul.mubr.bf16.gmra.mxu0 %v2831
        %v2894 = vpop.f32.mrf.mxu0
        %v2895 = vadd.f32 0.0, %v2894
        %v2896 = vpop.f32.mrf.mxu0
        %v2897 = vpop.f32.mrf.mxu0
        %v2898 = vadd.f32 0.0, %v2897
        %v2899 = vpop.f32.mrf.mxu0
        %2900 = vmatprep.mubr.bf16.mxu0 0
        %2901 = vmatmul.mubr.bf16.gmra.mxu0 %v2834
        %v2902 = vpop.f32.mrf.mxu0
        %v2903 = vadd.f32 0.0, %v2902
        %v2904 = vpop.f32.mrf.mxu0
        %v2905 = vpop.f32.mrf.mxu0
        %v2906 = vadd.f32 0.0, %v2905
        %v2907 = vpop.f32.mrf.mxu0
        %2908 = vmatprep.mubr.bf16.mxu0 0
        %2909 = vmatmul.mubr.bf16.gmra.mxu0 %v2837
        %v2910 = vpop.f32.mrf.mxu0
        %v2911 = vadd.f32 0.0, %v2910
        %v2912 = vpop.f32.mrf.mxu0
        %v2913 = vpop.f32.mrf.mxu0
        %v2914 = vadd.f32 0.0, %v2913
        %v2915 = vpop.f32.mrf.mxu0
        %2916 = vmatprep.mubr.bf16.mxu0 0
        %2917 = vmatmul.mubr.bf16.gmra.mxu0 %v2840
        %v2918 = vpop.f32.mrf.mxu0
        %v2919 = vadd.f32 0.0, %v2918
        %v2920 = vpop.f32.mrf.mxu0
        %v2921 = vpop.f32.mrf.mxu0
        %v2922 = vadd.f32 0.0, %v2921
        %v2923 = vpop.f32.mrf.mxu0
        %2924 = vmatprep.mubr.bf16.mxu0 0
        %2925 = vmatmul.mubr.bf16.gmra.mxu0 %v2843
        %v2926 = vpop.f32.mrf.mxu0
        %v2927 = vadd.f32 0.0, %v2926
        %v2928 = vpop.f32.mrf.mxu0
        %v2929 = vpop.f32.mrf.mxu0
        %v2930 = vadd.f32 0.0, %v2929
        %v2931 = vpop.f32.mrf.mxu0
        %2932 = vmatprep.mubr.bf16.mxu0 0
        %2933 = vmatmul.mubr.bf16.gmra.mxu0 %v2846
        %v2934 = vpop.f32.mrf.mxu0
        %v2935 = vadd.f32 0.0, %v2934
        %v2936 = vpop.f32.mrf.mxu0
        %v2937 = vpop.f32.mrf.mxu0
        %v2938 = vadd.f32 0.0, %v2937
        %v2939 = vpop.f32.mrf.mxu0
        %2940 = vmatprep.mubr.bf16.mxu0 0
        %2941 = vmatmul.mubr.bf16.gmra.mxu0 %v2849
        %v2942 = vpop.f32.mrf.mxu0
        %v2943 = vadd.f32 0.0, %v2942
        %v2944 = vpop.f32.mrf.mxu0
        %v2945 = vpop.f32.mrf.mxu0
        %v2946 = vadd.f32 0.0, %v2945
        %v2947 = vpop.f32.mrf.mxu0
        %2948 = vmatprep.mubr.bf16.mxu0 0
        %2949 = vmatmul.mubr.bf16.gmra.mxu0 %v2852
        %v2950 = vpop.f32.mrf.mxu0
        %v2951 = vadd.f32 0.0, %v2950
        %v2952 = vpop.f32.mrf.mxu0
        %v2953 = vpop.f32.mrf.mxu0
        %v2954 = vadd.f32 0.0, %v2953
        %v2955 = vpop.f32.mrf.mxu0
        %2956 = vmatprep.mubr.bf16.mxu0 0
        %2957 = vmatmul.mubr.bf16.gmra.mxu0 %v2855
        %v2958 = vpop.f32.mrf.mxu0
        %v2959 = vadd.f32 0.0, %v2958
        %v2960 = vpop.f32.mrf.mxu0
        %v2961 = vpop.f32.mrf.mxu0
        %v2962 = vadd.f32 0.0, %v2961
        %v2963 = vpop.f32.mrf.mxu0
        %2964 = vdwg.mxu0
        %v2965 = vadd.f32 %v2637, %v2895
        %v2966 = vadd.f32 %v2638, %v2898
        %v2967 = vadd.f32 %v2639, %v2903
        %v2968 = vadd.f32 %v2640, %v2906
        %v2969 = vadd.f32 %v2641, %v2911
        %v2970 = vadd.f32 %v2642, %v2914
        %v2971 = vadd.f32 %v2643, %v2919
        %v2972 = vadd.f32 %v2644, %v2922
        %v2973 = vadd.f32 %v2645, %v2927
        %v2974 = vadd.f32 %v2646, %v2930
        %v2975 = vadd.f32 %v2647, %v2935
        %v2976 = vadd.f32 %v2648, %v2938
        %v2977 = vadd.f32 %v2649, %v2943
        %v2978 = vadd.f32 %v2650, %v2946
        %v2979 = vadd.f32 %v2651, %v2951
        %v2980 = vadd.f32 %v2652, %v2954
        %v2981 = vadd.f32 %v2653, %v2959
        %v2982 = vadd.f32 %v2654, %v2962
        %2983 = vst [vmem:[#allocation2] sm:$0xff] %v2965
        %2984 = vst [vmem:[#allocation2 + $0x8] sm:$0xff] %v2966
        %2985 = vst [vmem:[#allocation2 + $0x10] sm:$0xff] %v2967
        %2986 = vst [vmem:[#allocation2 + $0x18] sm:$0xff] %v2968
        %2987 = vst [vmem:[#allocation2 + $0x20] sm:$0xff] %v2969
        %2988 = vst [vmem:[#allocation2 + $0x28] sm:$0xff] %v2970
        %2989 = vst [vmem:[#allocation2 + $0x30] sm:$0xff] %v2971
        %2990 = vst [vmem:[#allocation2 + $0x38] sm:$0xff] %v2972
        %2991 = vst [vmem:[#allocation2 + $0x40] sm:$0xff] %v2973
        %2992 = vst [vmem:[#allocation2 + $0x48] sm:$0xff] %v2974
        %2993 = vst [vmem:[#allocation2 + $0x50] sm:$0xff] %v2975
        %2994 = vst [vmem:[#allocation2 + $0x58] sm:$0xff] %v2976
        %2995 = vst [vmem:[#allocation2 + $0x60] sm:$0xff] %v2977
        %2996 = vst [vmem:[#allocation2 + $0x68] sm:$0xff] %v2978
        %2997 = vst [vmem:[#allocation2 + $0x70] sm:$0xff] %v2979
        %2998 = vst [vmem:[#allocation2 + $0x78] sm:$0xff] %v2980
        %2999 = vst [vmem:[#allocation2 + $0x80] sm:$0xff] %v2981
        %3000 = vst [vmem:[#allocation2 + $0x88] sm:$0xff] %v2982
        %v3001 = vld [vmem:[%s286 + $0x10] sm:$0x8]
        %v3002 = vld [vmem:[%s286 + $0x14] sm:$0xf]
        %v3003 = vld [vmem:[%s286 + $0x18] sm:$0xf]
        %v3004 = vld [vmem:[%s286 + $0x1c] sm:$0xf]
        %v3005 = vld [vmem:[%s286 + $0x20] sm:$0xf]
        %v3006 = vld [vmem:[%s286 + $0x24] sm:$0xf]
        %v3007 = vld [vmem:[%s286 + $0x28] sm:$0xf]
        %v3008 = vld [vmem:[%s286 + $0x2c] sm:$0xf]
        %v3009 = vld [vmem:[%s286 + $0x30] sm:$0xf]
        %v3010 = vld [vmem:[%s286 + $0x34] sm:$0xf]
        %v3011 = vld [vmem:[%s286 + $0x38] sm:$0xf]
        %v3012 = vld [vmem:[%s286 + $0x3c] sm:$0xf]
        %v3013 = vld [vmem:[%s286 + $0x40] sm:$0xf]
        %v3014 = vld [vmem:[%s286 + $0x44] sm:$0xf]
        %v3015 = vld [vmem:[%s286 + $0x48] sm:$0xf]
        %v3016 = vld [vmem:[%s286 + $0x4c] sm:$0xf]
        %v3017 = vld [vmem:[%s286 + $0x50] sm:$0xf]
        %v3018 = vld [vmem:[%s286 + $0x54] sm:$0xf]
        %v3019 = vld [vmem:[%s286 + $0x58] sm:$0x7]
        %v3020 = vld [vmem:[#allocation2] sm:$0xff]
        %v3021 = vld [vmem:[#allocation2 + $0x8] sm:$0xff]
        %v3022 = vld [vmem:[#allocation2 + $0x10] sm:$0xff]
        %v3023 = vld [vmem:[#allocation2 + $0x18] sm:$0xff]
        %v3024 = vld [vmem:[#allocation2 + $0x20] sm:$0xff]
        %v3025 = vld [vmem:[#allocation2 + $0x28] sm:$0xff]
        %v3026 = vld [vmem:[#allocation2 + $0x30] sm:$0xff]
        %v3027 = vld [vmem:[#allocation2 + $0x38] sm:$0xff]
        %v3028 = vld [vmem:[#allocation2 + $0x40] sm:$0xff]
        %v3029 = vld [vmem:[#allocation2 + $0x48] sm:$0xff]
        %v3030 = vld [vmem:[#allocation2 + $0x50] sm:$0xff]
        %v3031 = vld [vmem:[#allocation2 + $0x58] sm:$0xff]
        %v3032 = vld [vmem:[#allocation2 + $0x60] sm:$0xff]
        %v3033 = vld [vmem:[#allocation2 + $0x68] sm:$0xff]
        %v3034 = vld [vmem:[#allocation2 + $0x70] sm:$0xff]
        %v3035 = vld [vmem:[#allocation2 + $0x78] sm:$0xff]
        %v3036 = vld [vmem:[#allocation2 + $0x80] sm:$0xff]
        %v3037 = vld [vmem:[#allocation2 + $0x88] sm:$0xff]
        %s3038 = scalar_lea.vmem %s1, 288
        %v3039 = vld [vmem:[%s3038] sm:$0xf]
        %v3040 = vld [vmem:[%s3038 + $0x4] sm:$0xf]
        %v3041 = vld [vmem:[%s3038 + $0x8] sm:$0xf]
        %v3042 = vld [vmem:[%s3038 + $0xc] sm:$0xf]
        %v3043 = vld [vmem:[%s3038 + $0x10] sm:$0xf]
        %v3044 = vld [vmem:[%s3038 + $0x14] sm:$0xf]
        %v3045 = vld [vmem:[%s3038 + $0x18] sm:$0xf]
        %v3046 = vld [vmem:[%s3038 + $0x1c] sm:$0xf]
        %v3047 = vld [vmem:[%s3038 + $0x20] sm:$0xf]
        %v3067 = vunpack.c.l.b16 %v3001
        %v3068 = vunpack.c.l.b16 %v3002
        %v3069 = vunpack.c.l.b16 %v3003
        %v3070 = vunpack.c.l.b16 %v3004
        %v3071 = vunpack.c.l.b16 %v3005
        %v3072 = vunpack.c.l.b16 %v3006
        %v3073 = vunpack.c.l.b16 %v3007
        %v3074 = vunpack.c.l.b16 %v3008
        %v3075 = vunpack.c.l.b16 %v3009
        %v3076 = vunpack.c.l.b16 %v3010
        %v3077 = vunpack.c.l.b16 %v3011
        %v3078 = vunpack.c.l.b16 %v3012
        %v3079 = vunpack.c.l.b16 %v3013
        %v3080 = vunpack.c.l.b16 %v3014
        %v3081 = vunpack.c.l.b16 %v3015
        %v3082 = vunpack.c.l.b16 %v3016
        %v3083 = vunpack.c.l.b16 %v3017
        %v3084 = vunpack.c.l.b16 %v3018
        %v3085 = vunpack.c.l.b16 %v3019
        %v3086 = vpack.c.b16 %v3068, %v3067
        %v3087 = vpack.c.b16 %v3070, %v3069
        %v3088 = vpack.c.b16 %v3072, %v3071
        %v3089 = vpack.c.b16 %v3074, %v3073
        %v3090 = vpack.c.b16 %v3076, %v3075
        %v3091 = vpack.c.b16 %v3078, %v3077
        %v3092 = vpack.c.b16 %v3080, %v3079
        %v3093 = vpack.c.b16 %v3082, %v3081
        %v3094 = vpack.c.b16 %v3084, %v3083
        %v3095 = vpack.c.b16 %v3085, %v3085
        %vm3096 = vcmask 1044480
        %v3097 = vrot.slane %v3086, 3
        %v3098 = vrot.slane %v3087, 3
        %v3099 = vsel %vm3096, %v3097, %v3098
        %v3100 = vrot.slane %v3088, 3
        %v3101 = vsel %vm3096, %v3098, %v3100
        %v3102 = vrot.slane %v3089, 3
        %v3103 = vsel %vm3096, %v3100, %v3102
        %v3104 = vrot.slane %v3090, 3
        %v3105 = vsel %vm3096, %v3102, %v3104
        %v3106 = vrot.slane %v3091, 3
        %v3107 = vsel %vm3096, %v3104, %v3106
        %v3108 = vrot.slane %v3092, 3
        %v3109 = vsel %vm3096, %v3106, %v3108
        %v3110 = vrot.slane %v3093, 3
        %v3111 = vsel %vm3096, %v3108, %v3110
        %v3112 = vrot.slane %v3094, 3
        %v3113 = vsel %vm3096, %v3110, %v3112
        %v3114 = vrot.slane %v3095, 3
        %v3115 = vsel %vm3096, %v3112, %v3114
        %v3125 = vunpack.c.l.b16 %v3039
        %v3126 = vunpack.c.l.b16 %v3040
        %v3127 = vunpack.c.l.b16 %v3041
        %v3128 = vunpack.c.l.b16 %v3042
        %v3129 = vunpack.c.l.b16 %v3043
        %v3130 = vunpack.c.l.b16 %v3044
        %v3131 = vunpack.c.l.b16 %v3045
        %v3132 = vunpack.c.l.b16 %v3046
        %v3133 = vunpack.c.l.b16 %v3047
        %v3134 = vpack.c.b16 %v3126, %v3125
        %v3135 = vpack.c.b16 %v3128, %v3127
        %v3136 = vpack.c.b16 %v3130, %v3129
        %v3137 = vpack.c.b16 %v3132, %v3131
        %v3138 = vpack.c.b16 %v3133, %v3133
        %v3144 = vsel %vm442, %v3099, 0
        %v3147 = vsel %vm442, %v3101, 0
        %v3150 = vsel %vm442, %v3103, 0
        %v3153 = vsel %vm442, %v3105, 0
        %v3156 = vsel %vm442, %v3107, 0
        %v3159 = vsel %vm442, %v3109, 0
        %v3162 = vsel %vm442, %v3111, 0
        %v3165 = vsel %vm442, %v3113, 0
        %v3168 = vsel %vm442, %v3115, 0
        %v3171 = vsel %vm470, %v3138, 0
        %3173 = vmatprep.subr.bf16.mxu0 0
        %3174 = vmatpush1.bf16.msra.mxu0 0
        %3175 = vmatprep.subr.bf16.mxu0 0
        %3176 = vmatpush1.bf16.msra.mxu0 0
        %3177 = vmatprep.subr.bf16.mxu0 0
        %3178 = vmatpush1.bf16.msra.mxu0 0
        %3179 = vmatprep.subr.bf16.mxu0 0
        %3180 = vmatpush1.bf16.msra.mxu0 %v3171
        %3181 = vmatprep.subr.bf16.mxu0 0
        %3182 = vmatpush1.bf16.msra.mxu0 %v3137
        %3183 = vmatprep.subr.bf16.mxu0 0
        %3184 = vmatpush1.bf16.msra.mxu0 %v3136
        %3185 = vmatprep.subr.bf16.mxu0 0
        %3186 = vmatpush1.bf16.msra.mxu0 %v3135
        %3187 = vmatprep.subr.bf16.mxu0 0
        %3188 = vmatpush1.bf16.msra.mxu0 %v3134
        %3189 = vmatprep.subr.bf16.mxu0 0
        %3190 = vmatpush2.bf16.msra.mxu0 0
        %3191 = vmatprep.subr.bf16.mxu0 0
        %3192 = vmatpush2.bf16.msra.mxu0 0
        %3193 = vmatprep.subr.bf16.mxu0 0
        %3194 = vmatpush2.bf16.msra.mxu0 0
        %3195 = vmatprep.subr.bf16.mxu0 0
        %3196 = vmatpush2.bf16.msra.mxu0 0
        %3197 = vmatprep.subr.bf16.mxu0 0
        %3198 = vmatpush2.bf16.msra.mxu0 0
        %3199 = vmatprep.subr.bf16.mxu0 0
        %3200 = vmatpush2.bf16.msra.mxu0 0
        %3201 = vmatprep.subr.bf16.mxu0 0
        %3202 = vmatpush2.bf16.msra.mxu0 0
        %3203 = vmatprep.subr.bf16.mxu0 0
        %3204 = vmatpush2.bf16.msra.mxu0 0
        %3205 = vmatprep.mubr.bf16.mxu0 0
        %3206 = vmatmul.mubr.bf16.gmra.mxu0 %v3144
        %v3207 = vpop.f32.mrf.mxu0
        %v3208 = vadd.f32 0.0, %v3207
        %v3209 = vpop.f32.mrf.mxu0
        %v3210 = vpop.f32.mrf.mxu0
        %v3211 = vadd.f32 0.0, %v3210
        %v3212 = vpop.f32.mrf.mxu0
        %3213 = vmatprep.mubr.bf16.mxu0 0
        %3214 = vmatmul.mubr.bf16.gmra.mxu0 %v3147
        %v3215 = vpop.f32.mrf.mxu0
        %v3216 = vadd.f32 0.0, %v3215
        %v3217 = vpop.f32.mrf.mxu0
        %v3218 = vpop.f32.mrf.mxu0
        %v3219 = vadd.f32 0.0, %v3218
        %v3220 = vpop.f32.mrf.mxu0
        %3221 = vmatprep.mubr.bf16.mxu0 0
        %3222 = vmatmul.mubr.bf16.gmra.mxu0 %v3150
        %v3223 = vpop.f32.mrf.mxu0
        %v3224 = vadd.f32 0.0, %v3223
        %v3225 = vpop.f32.mrf.mxu0
        %v3226 = vpop.f32.mrf.mxu0
        %v3227 = vadd.f32 0.0, %v3226
        %v3228 = vpop.f32.mrf.mxu0
        %3229 = vmatprep.mubr.bf16.mxu0 0
        %3230 = vmatmul.mubr.bf16.gmra.mxu0 %v3153
        %v3231 = vpop.f32.mrf.mxu0
        %v3232 = vadd.f32 0.0, %v3231
        %v3233 = vpop.f32.mrf.mxu0
        %v3234 = vpop.f32.mrf.mxu0
        %v3235 = vadd.f32 0.0, %v3234
        %v3236 = vpop.f32.mrf.mxu0
        %3237 = vmatprep.mubr.bf16.mxu0 0
        %3238 = vmatmul.mubr.bf16.gmra.mxu0 %v3156
        %v3239 = vpop.f32.mrf.mxu0
        %v3240 = vadd.f32 0.0, %v3239
        %v3241 = vpop.f32.mrf.mxu0
        %v3242 = vpop.f32.mrf.mxu0
        %v3243 = vadd.f32 0.0, %v3242
        %v3244 = vpop.f32.mrf.mxu0
        %3245 = vmatprep.mubr.bf16.mxu0 0
        %3246 = vmatmul.mubr.bf16.gmra.mxu0 %v3159
        %v3247 = vpop.f32.mrf.mxu0
        %v3248 = vadd.f32 0.0, %v3247
        %v3249 = vpop.f32.mrf.mxu0
        %v3250 = vpop.f32.mrf.mxu0
        %v3251 = vadd.f32 0.0, %v3250
        %v3252 = vpop.f32.mrf.mxu0
        %3253 = vmatprep.mubr.bf16.mxu0 0
        %3254 = vmatmul.mubr.bf16.gmra.mxu0 %v3162
        %v3255 = vpop.f32.mrf.mxu0
        %v3256 = vadd.f32 0.0, %v3255
        %v3257 = vpop.f32.mrf.mxu0
        %v3258 = vpop.f32.mrf.mxu0
        %v3259 = vadd.f32 0.0, %v3258
        %v3260 = vpop.f32.mrf.mxu0
        %3261 = vmatprep.mubr.bf16.mxu0 0
        %3262 = vmatmul.mubr.bf16.gmra.mxu0 %v3165
        %v3263 = vpop.f32.mrf.mxu0
        %v3264 = vadd.f32 0.0, %v3263
        %v3265 = vpop.f32.mrf.mxu0
        %v3266 = vpop.f32.mrf.mxu0
        %v3267 = vadd.f32 0.0, %v3266
        %v3268 = vpop.f32.mrf.mxu0
        %3269 = vmatprep.mubr.bf16.mxu0 0
        %3270 = vmatmul.mubr.bf16.gmra.mxu0 %v3168
        %v3271 = vpop.f32.mrf.mxu0
        %v3272 = vadd.f32 0.0, %v3271
        %v3273 = vpop.f32.mrf.mxu0
        %v3274 = vpop.f32.mrf.mxu0
        %v3275 = vadd.f32 0.0, %v3274
        %v3276 = vpop.f32.mrf.mxu0
        %3277 = vdwg.mxu0
        %v3278 = vadd.f32 %v3020, %v3208
        %v3279 = vadd.f32 %v3021, %v3211
        %v3280 = vadd.f32 %v3022, %v3216
        %v3281 = vadd.f32 %v3023, %v3219
        %v3282 = vadd.f32 %v3024, %v3224
        %v3283 = vadd.f32 %v3025, %v3227
        %v3284 = vadd.f32 %v3026, %v3232
        %v3285 = vadd.f32 %v3027, %v3235
        %v3286 = vadd.f32 %v3028, %v3240
        %v3287 = vadd.f32 %v3029, %v3243
        %v3288 = vadd.f32 %v3030, %v3248
        %v3289 = vadd.f32 %v3031, %v3251
        %v3290 = vadd.f32 %v3032, %v3256
        %v3291 = vadd.f32 %v3033, %v3259
        %v3292 = vadd.f32 %v3034, %v3264
        %v3293 = vadd.f32 %v3035, %v3267
        %v3294 = vadd.f32 %v3036, %v3272
        %v3295 = vadd.f32 %v3037, %v3275
        %3296 = vst [vmem:[#allocation2] sm:$0xff] %v3278
        %3297 = vst [vmem:[#allocation2 + $0x8] sm:$0xff] %v3279
        %3298 = vst [vmem:[#allocation2 + $0x10] sm:$0xff] %v3280
        %3299 = vst [vmem:[#allocation2 + $0x18] sm:$0xff] %v3281
        %3300 = vst [vmem:[#allocation2 + $0x20] sm:$0xff] %v3282
        %3301 = vst [vmem:[#allocation2 + $0x28] sm:$0xff] %v3283
        %3302 = vst [vmem:[#allocation2 + $0x30] sm:$0xff] %v3284
        %3303 = vst [vmem:[#allocation2 + $0x38] sm:$0xff] %v3285
        %3304 = vst [vmem:[#allocation2 + $0x40] sm:$0xff] %v3286
        %3305 = vst [vmem:[#allocation2 + $0x48] sm:$0xff] %v3287
        %3306 = vst [vmem:[#allocation2 + $0x50] sm:$0xff] %v3288
        %3307 = vst [vmem:[#allocation2 + $0x58] sm:$0xff] %v3289
        %3308 = vst [vmem:[#allocation2 + $0x60] sm:$0xff] %v3290
        %3309 = vst [vmem:[#allocation2 + $0x68] sm:$0xff] %v3291
        %3310 = vst [vmem:[#allocation2 + $0x70] sm:$0xff] %v3292
        %3311 = vst [vmem:[#allocation2 + $0x78] sm:$0xff] %v3293
        %3312 = vst [vmem:[#allocation2 + $0x80] sm:$0xff] %v3294
        %3313 = vst [vmem:[#allocation2 + $0x88] sm:$0xff] %v3295
        %v3314 = vld [vmem:[#allocation2] sm:$0xff]
        %v3315 = vld [vmem:[#allocation2 + $0x8] sm:$0xff]
        %v3316 = vld [vmem:[#allocation2 + $0x10] sm:$0xff]
        %v3317 = vld [vmem:[#allocation2 + $0x18] sm:$0xff]
        %v3318 = vld [vmem:[#allocation2 + $0x20] sm:$0xff]
        %v3319 = vld [vmem:[#allocation2 + $0x28] sm:$0xff]
        %v3320 = vld [vmem:[#allocation2 + $0x30] sm:$0xff]
        %v3321 = vld [vmem:[#allocation2 + $0x38] sm:$0xff]
        %v3322 = vld [vmem:[#allocation2 + $0x40] sm:$0xff]
        %v3323 = vld [vmem:[#allocation2 + $0x48] sm:$0xff]
        %v3324 = vld [vmem:[#allocation2 + $0x50] sm:$0xff]
        %v3325 = vld [vmem:[#allocation2 + $0x58] sm:$0xff]
        %v3326 = vld [vmem:[#allocation2 + $0x60] sm:$0xff]
        %v3327 = vld [vmem:[#allocation2 + $0x68] sm:$0xff]
        %v3328 = vld [vmem:[#allocation2 + $0x70] sm:$0xff]
        %v3329 = vld [vmem:[#allocation2 + $0x78] sm:$0xff]
        %v3330 = vld [vmem:[#allocation2 + $0x80] sm:$0xff]
        %v3331 = vld [vmem:[#allocation2 + $0x88] sm:$0xff]
        %v3332 = vmax.f32 %v3314, 0.0
        %v3333 = vmax.f32 %v3315, 0.0
        %v3334 = vmax.f32 %v3316, 0.0
        %v3335 = vmax.f32 %v3317, 0.0
        %v3336 = vmax.f32 %v3318, 0.0
        %v3337 = vmax.f32 %v3319, 0.0
        %v3338 = vmax.f32 %v3320, 0.0
        %v3339 = vmax.f32 %v3321, 0.0
        %v3340 = vmax.f32 %v3322, 0.0
        %v3341 = vmax.f32 %v3323, 0.0
        %v3342 = vmax.f32 %v3324, 0.0
        %v3343 = vmax.f32 %v3325, 0.0
        %v3344 = vmax.f32 %v3326, 0.0
        %v3345 = vmax.f32 %v3327, 0.0
        %v3346 = vmax.f32 %v3328, 0.0
        %v3347 = vmax.f32 %v3329, 0.0
        %v3348 = vmax.f32 %v3330, 0.0
        %v3349 = vmax.f32 %v3331, 0.0
        %v3350 = vld [vmem:[%s289] sm:$0x1]
        %v3352 = vlaneseq
        %v3353 = vshrl.u32 %v3352, 7
        %v3354 = vsub.s32 0, %v3353
        %v3355 = vrot.slane %v3350, %v3354
        %v3357 = vmul.f32 %v3332, %v3355
        %v3358 = vmul.f32 %v3333, %v3355
        %v3359 = vmul.f32 %v3334, %v3355
        %v3360 = vmul.f32 %v3335, %v3355
        %v3361 = vmul.f32 %v3336, %v3355
        %v3362 = vmul.f32 %v3337, %v3355
        %v3363 = vmul.f32 %v3338, %v3355
        %v3364 = vmul.f32 %v3339, %v3355
        %v3365 = vmul.f32 %v3340, %v3355
        %v3366 = vmul.f32 %v3341, %v3355
        %v3367 = vmul.f32 %v3342, %v3355
        %v3368 = vmul.f32 %v3343, %v3355
        %v3369 = vmul.f32 %v3344, %v3355
        %v3370 = vmul.f32 %v3345, %v3355
        %v3371 = vmul.f32 %v3346, %v3355
        %v3372 = vmul.f32 %v3347, %v3355
        %v3373 = vmul.f32 %v3348, %v3355
        %v3374 = vmul.f32 %v3349, %v3355
        %v3375 = vld [vmem:[%s298] sm:$0xf]
        %v3376 = vld [vmem:[%s298 + $0x4] sm:$0xf]
        %v3377 = vld [vmem:[%s298 + $0x8] sm:$0xf]
        %v3378 = vld [vmem:[%s298 + $0xc] sm:$0xf]
        %v3379 = vld [vmem:[%s298 + $0x10] sm:$0xf]
        %v3380 = vld [vmem:[%s298 + $0x14] sm:$0xf]
        %v3381 = vld [vmem:[%s298 + $0x18] sm:$0xf]
        %v3382 = vld [vmem:[%s298 + $0x1c] sm:$0xf]
        %v3383 = vld [vmem:[%s298 + $0x20] sm:$0xf]
        %v3384 = vld [vmem:[%s298 + $0x24] sm:$0xf]
        %v3385 = vld [vmem:[%s298 + $0x28] sm:$0xf]
        %v3386 = vld [vmem:[%s298 + $0x2c] sm:$0xf]
        %v3387 = vld [vmem:[%s298 + $0x30] sm:$0xf]
        %v3388 = vld [vmem:[%s298 + $0x34] sm:$0xf]
        %v3389 = vld [vmem:[%s298 + $0x38] sm:$0xf]
        %v3390 = vld [vmem:[%s298 + $0x3c] sm:$0xf]
        %v3391 = vld [vmem:[%s298 + $0x40] sm:$0xf]
        %v3392 = vld [vmem:[%s298 + $0x44] sm:$0xf]
        %v3393 = vunpack.c.l.bf16 %v3375
        %v3394 = vunpack.c.l.bf16 %v3376
        %v3395 = vunpack.c.l.bf16 %v3377
        %v3396 = vunpack.c.l.bf16 %v3378
        %v3397 = vunpack.c.l.bf16 %v3379
        %v3398 = vunpack.c.l.bf16 %v3380
        %v3399 = vunpack.c.l.bf16 %v3381
        %v3400 = vunpack.c.l.bf16 %v3382
        %v3401 = vunpack.c.l.bf16 %v3383
        %v3402 = vunpack.c.l.bf16 %v3384
        %v3403 = vunpack.c.l.bf16 %v3385
        %v3404 = vunpack.c.l.bf16 %v3386
        %v3405 = vunpack.c.l.bf16 %v3387
        %v3406 = vunpack.c.l.bf16 %v3388
        %v3407 = vunpack.c.l.bf16 %v3389
        %v3408 = vunpack.c.l.bf16 %v3390
        %v3409 = vunpack.c.l.bf16 %v3391
        %v3410 = vunpack.c.l.bf16 %v3392
        %v3411 = vadd.f32 %v3393, %v3357
        %v3412 = vadd.f32 %v3394, %v3358
        %v3413 = vadd.f32 %v3395, %v3359
        %v3414 = vadd.f32 %v3396, %v3360
        %v3415 = vadd.f32 %v3397, %v3361
        %v3416 = vadd.f32 %v3398, %v3362
        %v3417 = vadd.f32 %v3399, %v3363
        %v3418 = vadd.f32 %v3400, %v3364
        %v3419 = vadd.f32 %v3401, %v3365
        %v3420 = vadd.f32 %v3402, %v3366
        %v3421 = vadd.f32 %v3403, %v3367
        %v3422 = vadd.f32 %v3404, %v3368
        %v3423 = vadd.f32 %v3405, %v3369
        %v3424 = vadd.f32 %v3406, %v3370
        %v3425 = vadd.f32 %v3407, %v3371
        %v3426 = vadd.f32 %v3408, %v3372
        %v3427 = vadd.f32 %v3409, %v3373
        %v3428 = vadd.f32 %v3410, %v3374
        %3429 = vst [vmem:[%s277] sm:$0xff] %v3411
        %3430 = vst [vmem:[%s277 + $0x8] sm:$0xff] %v3412
        %3431 = vst [vmem:[%s277 + $0x10] sm:$0xff] %v3413
        %3432 = vst [vmem:[%s277 + $0x18] sm:$0xff] %v3414
        %3433 = vst [vmem:[%s277 + $0x20] sm:$0xff] %v3415
        %3434 = vst [vmem:[%s277 + $0x28] sm:$0xff] %v3416
        %3435 = vst [vmem:[%s277 + $0x30] sm:$0xff] %v3417
        %3436 = vst [vmem:[%s277 + $0x38] sm:$0xff] %v3418
        %3437 = vst [vmem:[%s277 + $0x40] sm:$0xff] %v3419
        %3438 = vst [vmem:[%s277 + $0x48] sm:$0xff] %v3420
        %3439 = vst [vmem:[%s277 + $0x50] sm:$0xff] %v3421
        %3440 = vst [vmem:[%s277 + $0x58] sm:$0xff] %v3422
        %3441 = vst [vmem:[%s277 + $0x60] sm:$0xff] %v3423
        %3442 = vst [vmem:[%s277 + $0x68] sm:$0xff] %v3424
        %3443 = vst [vmem:[%s277 + $0x70] sm:$0xff] %v3425
        %3444 = vst [vmem:[%s277 + $0x78] sm:$0xff] %v3426
        %3445 = vst [vmem:[%s277 + $0x80] sm:$0xff] %v3427
        %3446 = vst [vmem:[%s277 + $0x88] sm:$0xff] %v3428
        %s3447 = sand.u32 %s165, 1
        %s3448 = scalar_lea.sflag [#allocation4], %s3447
        %s3449 = sand.u32 %s165, 1
        %s3450 = smul.addr %s3449, 144
        %s3451 = scalar_lea.vmem [#allocation3], %s3450
        // Predicated region
        $region41: #{tpu_custom_call.1} parent=39 // pred_check
          %p3452 = pneg %p175
        $region42: #{tpu_custom_call.1} parent=39 // pred_check_branch
          %3454 = sbr.rel (%p3452) target = $region44
        $region43: #{tpu_custom_call.1} parent=39 // pred_region
          %s3456 = ssub.s32 2304, 2304
          %3457 = vsyncadd %s3448, %s3456
          %s3458 = smul.addr %s24, 18
          %s3459 = smul.addr %s23, 36
          %s3460 = sadd.s32 %s3458, %s3459
          %s3461 = smul.addr %s3460, 128
          %s3462 = scalar_lea.hbm %s5, %s3461
          %s3463 = sshll.u32 %s3451, 4
          %s3464 = int_to_ptr.vmem [resolvable:$true] %s3463
          %3469 = dma.vmem_to_hbm [thread:$0]  %s3464, 2304, %s3462, %s3448, 128, 128, 8
        $region44: #{tpu_custom_call.1} parent=39 // pred_fallthru
          _
      $region40: #{tpu_custom_call.1} parent=5 // pred_fallthru
        _
      %p3470 = scmp.le.s32.totalorder 2, %s14
      // Predicated region
      $region45: #{tpu_custom_call.1} parent=5 // pred_check
        %p3471 = pneg %p3470
      $region46: #{tpu_custom_call.1} parent=5 // pred_check_branch
        %3473 = sbr.rel (%p3471) target = $region48
      $region47: #{tpu_custom_call.1} parent=5 // pred_region
        %s3474 = ssub.s32 %s14, 2
        // Predicated region
        $region49: #{tpu_custom_call.1} parent=47 // pred_check
          %p3475 = pneg %p181
        $region50: #{tpu_custom_call.1} parent=47 // pred_check_branch
          %3477 = sbr.rel (%p3475) target = $region52
        $region51: #{tpu_custom_call.1} parent=47 // pred_region
          %s3478 = sand.u32 %s166, 1
          %s3479 = scalar_lea.sflag [#allocation4], %s3478
          %s3480 = sand.u32 %s166, 1
          %s3481 = smul.addr %s3480, 144
          %s3482 = scalar_lea.vmem [#allocation3], %s3481
          %3483 = dma.done %s3479, 2304
        $region52: #{tpu_custom_call.1} parent=47 // pred_fallthru
          _
      $region48: #{tpu_custom_call.1} parent=5 // pred_fallthru
        _
    $region6: #{tpu_custom_call.1} parent=1 // loop_footer
      %s18 = sadd.s32 1, %s14
    $region7: #{tpu_custom_call.1} parent=1 // loop_footer_branch
      %13 = sbr.rel target = $region3
    $region8: #{tpu_custom_call.1} parent=1 // loop_exit
      _
    %3484 = vsyncpa [#allocation4], 1
    %s3485 = scalar_lea.sflag [#allocation4], 1
    %3486 = vsyncpa %s3485, 1

</llo_original>
